<compile_context>
chip_gen: v6e
topology: v6e:2x2x1
jax: 0.10.0
libtpu: 0.0.40
codegen_flags: <defaults>
</compile_context>

<pallas_src>
import functools
import math

import jax
import jax.numpy as jnp
import numpy as np
from jax import lax
from jax.experimental import pallas as pl
from jax.experimental.pallas import tpu as pltpu

# ----------------------------- config (small) -----------------------------
B = 2        # batch
T = 8        # target sequence length
S = 16       # source (encoder) sequence length
E = 32       # embed_dim
H = 4        # num_heads
DH = E // H  # head dim
F = 64       # ff_dim
LN_EPS = 1e-5
NEG_INF = -1e30


def _layernorm(x, gamma, beta):
    mu = jnp.mean(x, axis=-1, keepdims=True)
    var = jnp.mean((x - mu) ** 2, axis=-1, keepdims=True)
    return (x - mu) * lax.rsqrt(var + LN_EPS) * gamma + beta


def _split_heads(z2d, nb, L, width):
    """(nb*L, H*width) -> (nb*H, L, width).

    Per-head static lane slices + a stack along a leading axis; all leading-dim
    reshapes are layout no-ops (L is a multiple of the 8-row sublane tile).
    """
    z = z2d.reshape(nb, L, H * width)
    heads = [z[:, :, h * width:(h + 1) * width] for h in range(H)]
    return jnp.stack(heads, axis=1).reshape(nb * H, L, width)


def _attention_core(q, k, v, wo, bo, bias, nb, mm):
    """q: (G, Tq, DH), k/v: (G, Tk, DH), wo: (E, E). Returns (nb*Tq, E).

    Scores are canonical batched matmuls (batch dim leading on both operands).
    The head-sum is folded into the (E, E) output projection: heads are
    re-concatenated along lanes and hit one 2-D matmul with K = H*DH = E.
    """
    G, Tq, _ = q.shape
    s = jnp.einsum("gqd,gkd->gqk", mm(q), mm(k),
                   preferred_element_type=jnp.float32)          # (G, Tq, Tk)
    if bias is not None:
        s = s + bias[None]                                      # additive mask
    m = jnp.max(s, axis=-1, keepdims=True)
    p = jnp.exp(s - m)
    p = p * pl.reciprocal(jnp.sum(p, axis=-1, keepdims=True), approx=True)
    o = jnp.einsum("gqk,gkd->gqd", mm(p), mm(v),
                   preferred_element_type=jnp.float32)          # (G, Tq, DH)
    o = o.reshape(nb, H, Tq, DH)
    o_cat = jnp.concatenate([o[:, h] for h in range(H)], axis=-1)   # (nb, Tq, E)
    o2d = o_cat.reshape(nb * Tq, E)
    return jnp.dot(mm(o2d), mm(wo), preferred_element_type=jnp.float32) + bo


def decoder_block_kernel(
    x_ref, enc_ref,
    wqkv1_ref, wo1_ref, bo1_ref, g1_ref, b1n_ref,
    wq2_ref, wkv2_ref, wo2_ref, bo2_ref, g2_ref, b2n_ref,
    wf1_ref, bf1_ref, wf2_ref, bf2_ref,
    out_ref,
    *, matmul_dtype,
):
    nb = x_ref.shape[0]                      # batch elements handled this step
    mm = lambda a: a.astype(matmul_dtype)

    # Leading-dim merges (T, S are multiples of the 8-row sublane tile -> free).
    x = x_ref[...].astype(jnp.float32).reshape(nb * T, E)
    enc = enc_ref[...].astype(jnp.float32).reshape(nb * S, E)

    g1, b1n = g1_ref[...], b1n_ref[...]
    g2, b2n = g2_ref[...], b2n_ref[...]
    bo1, bo2 = bo1_ref[...], bo2_ref[...]

    # causal (no-peeking) mask as an additive f32 constant, built once.
    row = lax.broadcasted_iota(jnp.int32, (T, T), 0)
    col = lax.broadcasted_iota(jnp.int32, (T, T), 1)
    causal_bias = jnp.where(col > row, NEG_INF, 0.0).astype(jnp.float32)

    # ---- self attention (causal) + residual + norm1 ----
    # One fused projection: (nb*T, E) @ (E, 3E); 1/sqrt(DH) is pre-folded into
    # the q columns wrapper-side.
    qkv = jnp.dot(mm(x), mm(wqkv1_ref[...]),
                  preferred_element_type=jnp.float32)            # (nb*T, 3E)
    qkv_h = _split_heads(qkv, nb, T, 3 * DH)                     # (nb*H, T, 3DH)
    q1 = qkv_h[..., :DH]
    k1 = qkv_h[..., DH:2 * DH]
    v1 = qkv_h[..., 2 * DH:]
    smha = _attention_core(q1, k1, v1, wo1_ref[...], bo1, causal_bias, nb, mm)
    x1 = _layernorm(smha + x, g1, b1n)                           # (nb*T, E)

    # ---- cross attention with encoder states + residual + norm2 ----
    q2 = jnp.dot(mm(x1), mm(wq2_ref[...]),
                 preferred_element_type=jnp.float32)             # (nb*T, E)
    q2_h = _split_heads(q2, nb, T, DH)                           # (nb*H, T, DH)
    kv2 = jnp.dot(mm(enc), mm(wkv2_ref[...]),
                  preferred_element_type=jnp.float32)            # (nb*S, 2E)
    kv2_h = _split_heads(kv2, nb, S, 2 * DH)                     # (nb*H, S, 2DH)
    k2 = kv2_h[..., :DH]
    v2 = kv2_h[..., DH:]
    cmha = _attention_core(q2_h, k2, v2, wo2_ref[...], bo2, None, nb, mm)
    x2 = _layernorm(cmha + x1, g2, b2n)                          # (nb*T, E)

    # ---- feed forward (relu) + residual + norm2 (module reuses norm2) ----
    # Plain 2-D matmuls on the (nb*T, E) slab; no in-kernel weight broadcasts.
    hidden = jnp.dot(mm(x2), mm(wf1_ref[...]),
                     preferred_element_type=jnp.float32) + bf1_ref[...]
    hidden = jnp.maximum(hidden, 0.0)
    ff = jnp.dot(mm(hidden), mm(wf2_ref[...]),
                 preferred_element_type=jnp.float32) + bf2_ref[...]
    out = _layernorm(ff + x2, g2, b2n)

    out_ref[...] = out.reshape(nb, T, E).astype(out_ref.dtype)


# ------------------------------ wrapper -----------------------------------
def _full_spec(shape):
    rank = len(shape)

    def index_map(b):
        return (0,) * rank

    return pl.BlockSpec(shape, index_map)


def _grid_config():
    """(batch elements per grid step, dimension_semantics).

    v7x has two TensorCores per chip: keep a 2-way batch grid marked
    CORE_PARALLEL so each core takes one batch element.  v5e/v6e have one TC:
    collapse the batch grid into a single invocation (no per-step overhead).
    """
    try:
        kind = jax.devices()[0].device_kind.lower()
    except Exception:
        kind = ""
    if "v7" in kind or "7x" in kind:
        return 1, (pltpu.CORE_PARALLEL,)
    return B, ("arbitrary",)


def decoder_block(x, enc, params, matmul_dtype=jnp.float32):
    """x: (B, T, E), enc: (B, S, E) -> (B, T, E).

    matmul_dtype: MXU operand dtype (accumulation stays f32).  f32 keeps this
    toy-size kernel numerically faithful to the PyTorch module; use bf16 on
    v6e/v7x at production dims.
    """
    (wq1, wk1, wv1, wo1, bo1, g1, b1n,
     wq2, wk2, wv2, wo2, bo2, g2, b2n,
     wf1, bf1, wf2, bf2) = params

    scale = 1.0 / math.sqrt(DH)

    # Fused, head-major weight layouts (done wrapper-side):
    #   wqkv1 columns = per-head contiguous [q | k | v] blocks, q pre-scaled.
    #   wkv2  columns = per-head contiguous [k | v] blocks.
    wqkv1 = jnp.concatenate(
        [(wq1 * scale).reshape(E, H, DH),
         wk1.reshape(E, H, DH),
         wv1.reshape(E, H, DH)], axis=-1).reshape(E, 3 * E)
    wkv2 = jnp.concatenate(
        [wk2.reshape(E, H, DH), wv2.reshape(E, H, DH)], axis=-1).reshape(E, 2 * E)
    wq2s = wq2 * scale

    kernel_params = (wqkv1, wo1, bo1, g1, b1n,
                     wq2s, wkv2, wo2, bo2, g2, b2n,
                     wf1, bf1, wf2, bf2)

    nb, dim_sem = _grid_config()
    grid = (B // nb,)

    flops = (2 * B * T * E * 3 * E           # self fused q/k/v projection
             + 4 * B * H * T * T * DH        # self scores + p@v
             + 2 * B * T * E * E             # self out projection (head-sum folded)
             + 2 * B * T * E * E             # cross q projection
             + 4 * B * S * E * E             # cross fused k/v projection
             + 4 * B * H * T * S * DH        # cross scores + p@v
             + 2 * B * T * E * E             # cross out projection
             + 4 * B * T * E * F)            # feed forward
    transcendentals = B * H * T * (T + S) + 3 * B * T + 2 * B * H * T
    bytes_accessed = (int(x.size) + int(enc.size) + B * T * E
                      + sum(int(p.size) for p in kernel_params)) * 4

    kernel = functools.partial(decoder_block_kernel, matmul_dtype=matmul_dtype)

    return pl.pallas_call(
        kernel,
        out_shape=jax.ShapeDtypeStruct((B, T, E), x.dtype),
        grid_spec=pltpu.PrefetchScalarGridSpec(
            num_scalar_prefetch=0,
            grid=grid,
            in_specs=[
                pl.BlockSpec((nb, T, E), lambda b: (b, 0, 0)),   # x
                pl.BlockSpec((nb, S, E), lambda b: (b, 0, 0)),   # encoder states
            ] + [_full_spec(p.shape) for p in kernel_params],
            out_specs=pl.BlockSpec((nb, T, E), lambda b: (b, 0, 0)),
        ),
        compiler_params=pltpu.CompilerParams(dimension_semantics=dim_sem),
        cost_estimate=pl.CostEstimate(
            flops=flops,
            transcendentals=transcendentals,
            bytes_accessed=bytes_accessed),
    )(x, enc, *kernel_params)


# ------------------------- pure-JAX reference -------------------------
def _ref_mha(q_in, kv_in, wq, wk, wv, wo, bo, causal):
    q = q_in @ wq
    k = kv_in @ wk
    v = kv_in @ wv
    Tq, Tk = q.shape[0], k.shape[0]
    qh = q.reshape(Tq, H, DH).transpose(1, 0, 2)
    kh = k.reshape(Tk, H, DH).transpose(1, 0, 2)
    vh = v.reshape(Tk, H, DH).transpose(1, 0, 2)
    s = jnp.einsum("hqd,hkd->hqk", qh, kh) / math.sqrt(DH)
    if causal:
        mask = jnp.triu(jnp.ones((Tq, Tk), bool), k=1)
        s = jnp.where(mask[None], NEG_INF, s)
    p = jax.nn.softmax(s, axis=-1)
    o = jnp.einsum("hqk,hkd->hqd", p, vh).transpose(1, 0, 2).reshape(Tq, E)
    return o @ wo + bo


def decoder_block_ref(x, enc, params):
    (wq1, wk1, wv1, wo1, bo1, g1, b1n,
     wq2, wk2, wv2, wo2, bo2, g2, b2n,
     wf1, bf1, wf2, bf2) = params

    def one(xb, eb):
        smha = _ref_mha(xb, xb, wq1, wk1, wv1, wo1, bo1, True)
        x1 = _layernorm(smha + xb, g1, b1n)
        cmha = _ref_mha(x1, eb, wq2, wk2, wv2, wo2, bo2, False)
        x2 = _layernorm(cmha + x1, g2, b2n)
        h = jnp.maximum(x2 @ wf1 + bf1, 0.0)
        ff = h @ wf2 + bf2
        return _layernorm(ff + x2, g2, b2n)

    return jax.vmap(one)(x, enc)


if __name__ == "__main__":
    key = jax.random.PRNGKey(0)
    keys = jax.random.split(key, 16)

    scale = 1.0 / math.sqrt(E)
    wq1 = jax.random.normal(keys[0], (E, E), jnp.float32) * scale
    wk1 = jax.random.normal(keys[1], (E, E), jnp.float32) * scale
    wv1 = jax.random.normal(keys[2], (E, E), jnp.float32) * scale
    wo1 = jax.random.normal(keys[3], (E, E), jnp.float32) * scale
    bo1 = jax.random.normal(keys[4], (1, E), jnp.float32) * 0.02
    g1 = jnp.ones((1, E), jnp.float32)
    b1n = jnp.zeros((1, E), jnp.float32)

    wq2 = jax.random.normal(keys[5], (E, E), jnp.float32) * scale
    wk2 = jax.random.normal(keys[6], (E, E), jnp.float32) * scale
    wv2 = jax.random.normal(keys[7], (E, E), jnp.float32) * scale
    wo2 = jax.random.normal(keys[8], (E, E), jnp.float32) * scale
    bo2 = jax.random.normal(keys[9], (1, E), jnp.float32) * 0.02
    g2 = jnp.ones((1, E), jnp.float32)
    b2n = jnp.zeros((1, E), jnp.float32)

    wf1 = jax.random.normal(keys[10], (E, F), jnp.float32) * scale
    bf1 = jax.random.normal(keys[11], (1, F), jnp.float32) * 0.02
    wf2 = jax.random.normal(keys[12], (F, E), jnp.float32) * (1.0 / math.sqrt(F))
    bf2 = jax.random.normal(keys[13], (1, E), jnp.float32) * 0.02

    params = (wq1, wk1, wv1, wo1, bo1, g1, b1n,
              wq2, wk2, wv2, wo2, bo2, g2, b2n,
              wf1, bf1, wf2, bf2)

    x = jax.random.normal(keys[14], (B, T, E), jnp.float32)
    enc = jax.random.normal(keys[15], (B, S, E), jnp.float32)

    out = decoder_block(x, enc, params)
    out = jax.block_until_ready(out)

    ref = jax.block_until_ready(decoder_block_ref(x, enc, params))
    # Tolerance covers the approximate EUP reciprocal used for the softmax
    # denominators (everything else is exact f32 math).
    np.testing.assert_allclose(np.asarray(out), np.asarray(ref),
                               rtol=3e-2, atol=3e-2)

    print("KERNEL_OK")
</pallas_src>

<mosaic_0001>
module attributes {stable_mosaic.version = 11 : i64} {
  func.func @decoder_block_kernel(%arg0: i32, %arg1: memref<2x8x32xf32, #tpu.memory_space<vmem>>, %arg2: memref<2x16x32xf32, #tpu.memory_space<vmem>>, %arg3: memref<32x96xf32, #tpu.memory_space<vmem>>, %arg4: memref<32x32xf32, #tpu.memory_space<vmem>>, %arg5: memref<1x32xf32, #tpu.memory_space<vmem>>, %arg6: memref<1x32xf32, #tpu.memory_space<vmem>>, %arg7: memref<1x32xf32, #tpu.memory_space<vmem>>, %arg8: memref<32x32xf32, #tpu.memory_space<vmem>>, %arg9: memref<32x64xf32, #tpu.memory_space<vmem>>, %arg10: memref<32x32xf32, #tpu.memory_space<vmem>>, %arg11: memref<1x32xf32, #tpu.memory_space<vmem>>, %arg12: memref<1x32xf32, #tpu.memory_space<vmem>>, %arg13: memref<1x32xf32, #tpu.memory_space<vmem>>, %arg14: memref<32x64xf32, #tpu.memory_space<vmem>>, %arg15: memref<1x64xf32, #tpu.memory_space<vmem>>, %arg16: memref<64x32xf32, #tpu.memory_space<vmem>>, %arg17: memref<1x32xf32, #tpu.memory_space<vmem>>, %arg18: memref<2x8x32xf32, #tpu.memory_space<vmem>>) attributes {dimension_semantics = [#tpu.dimension_semantics<arbitrary>], iteration_bounds = array<i64: 1>, scalar_prefetch = 0 : i64, scratch_operands = 0 : i64, tpu.core_type = #tpu.core_type<tc>, window_params = [{transform_indices = @transform_0, window_bounds = array<i64: 2, 8, 32>}, {transform_indices = @transform_1, window_bounds = array<i64: 2, 16, 32>}, {pipeline_mode = #tpu.pipeline_mode<synchronous>, transform_indices = @transform_2, window_bounds = array<i64: 32, 96>}, {pipeline_mode = #tpu.pipeline_mode<synchronous>, transform_indices = @transform_3, window_bounds = array<i64: 32, 32>}, {pipeline_mode = #tpu.pipeline_mode<synchronous>, transform_indices = @transform_4, window_bounds = array<i64: 1, 32>}, {pipeline_mode = #tpu.pipeline_mode<synchronous>, transform_indices = @transform_5, window_bounds = array<i64: 1, 32>}, {pipeline_mode = #tpu.pipeline_mode<synchronous>, transform_indices = @transform_6, window_bounds = array<i64: 1, 32>}, {pipeline_mode = #tpu.pipeline_mode<synchronous>, transform_indices = @transform_7, window_bounds = array<i64: 32, 32>}, {pipeline_mode = #tpu.pipeline_mode<synchronous>, transform_indices = @transform_8, window_bounds = array<i64: 32, 64>}, {pipeline_mode = #tpu.pipeline_mode<synchronous>, transform_indices = @transform_9, window_bounds = array<i64: 32, 32>}, {pipeline_mode = #tpu.pipeline_mode<synchronous>, transform_indices = @transform_10, window_bounds = array<i64: 1, 32>}, {pipeline_mode = #tpu.pipeline_mode<synchronous>, transform_indices = @transform_11, window_bounds = array<i64: 1, 32>}, {pipeline_mode = #tpu.pipeline_mode<synchronous>, transform_indices = @transform_12, window_bounds = array<i64: 1, 32>}, {pipeline_mode = #tpu.pipeline_mode<synchronous>, transform_indices = @transform_13, window_bounds = array<i64: 32, 64>}, {pipeline_mode = #tpu.pipeline_mode<synchronous>, transform_indices = @transform_14, window_bounds = array<i64: 1, 64>}, {pipeline_mode = #tpu.pipeline_mode<synchronous>, transform_indices = @transform_15, window_bounds = array<i64: 64, 32>}, {pipeline_mode = #tpu.pipeline_mode<synchronous>, transform_indices = @transform_16, window_bounds = array<i64: 1, 32>}, {transform_indices = @transform_17, window_bounds = array<i64: 2, 8, 32>}]} {
    %c0 = arith.constant 0 : index
    %c0_0 = arith.constant 0 : index
    %c0_1 = arith.constant 0 : index
    %0 = vector.load %arg1[%c0, %c0_0, %c0_1] : memref<2x8x32xf32, #tpu.memory_space<vmem>>, vector<2x8x32xf32>
    %1 = vector.shape_cast %0 : vector<2x8x32xf32> to vector<16x32xf32>
    %c0_2 = arith.constant 0 : index
    %c0_3 = arith.constant 0 : index
    %c0_4 = arith.constant 0 : index
    %2 = vector.load %arg2[%c0_2, %c0_3, %c0_4] : memref<2x16x32xf32, #tpu.memory_space<vmem>>, vector<2x16x32xf32>
    %3 = vector.shape_cast %2 : vector<2x16x32xf32> to vector<32x32xf32>
    %c0_5 = arith.constant 0 : index
    %c0_6 = arith.constant 0 : index
    %4 = vector.load %arg6[%c0_5, %c0_6] : memref<1x32xf32, #tpu.memory_space<vmem>>, vector<1x32xf32>
    %c0_7 = arith.constant 0 : index
    %c0_8 = arith.constant 0 : index
    %5 = vector.load %arg7[%c0_7, %c0_8] : memref<1x32xf32, #tpu.memory_space<vmem>>, vector<1x32xf32>
    %c0_9 = arith.constant 0 : index
    %c0_10 = arith.constant 0 : index
    %6 = vector.load %arg12[%c0_9, %c0_10] : memref<1x32xf32, #tpu.memory_space<vmem>>, vector<1x32xf32>
    %c0_11 = arith.constant 0 : index
    %c0_12 = arith.constant 0 : index
    %7 = vector.load %arg13[%c0_11, %c0_12] : memref<1x32xf32, #tpu.memory_space<vmem>>, vector<1x32xf32>
    %c0_13 = arith.constant 0 : index
    %c0_14 = arith.constant 0 : index
    %8 = vector.load %arg5[%c0_13, %c0_14] : memref<1x32xf32, #tpu.memory_space<vmem>>, vector<1x32xf32>
    %c0_15 = arith.constant 0 : index
    %c0_16 = arith.constant 0 : index
    %9 = vector.load %arg11[%c0_15, %c0_16] : memref<1x32xf32, #tpu.memory_space<vmem>>, vector<1x32xf32>
    %10 = tpu.iota {dimensions = array<i32: 0>} : vector<8x8xi32>
    %11 = tpu.iota {dimensions = array<i32: 1>} : vector<8x8xi32>
    %12 = arith.cmpi sgt, %11, %10 : vector<8x8xi32>
    %cst = arith.constant -1.000000e+30 : f32
    %cst_17 = arith.constant 0.000000e+00 : f32
    %13 = vector.broadcast %cst : f32 to vector<8x8xf32>
    %14 = vector.broadcast %cst_17 : f32 to vector<8x8xf32>
    %15 = arith.select %12, %13, %14 : vector<8x8xi1>, vector<8x8xf32>
    %c0_18 = arith.constant 0 : index
    %c0_19 = arith.constant 0 : index
    %16 = vector.load %arg3[%c0_18, %c0_19] : memref<32x96xf32, #tpu.memory_space<vmem>>, vector<32x96xf32>
    %cst_20 = arith.constant dense<0.000000e+00> : vector<16x96xf32>
    %17 = tpu.matmul %1, %16, %cst_20 {dimension_numbers = #tpu.dot_dimension_numbers<[1], [0], [0], [1], [0, 0, 1, 1], [], []>} : vector<16x32xf32>, vector<32x96xf32>, vector<16x96xf32> -> vector<16x96xf32>
    %18 = vector.shape_cast %17 : vector<16x96xf32> to vector<2x8x96xf32>
    %19 = vector.extract_strided_slice %18 {offsets = [0, 0, 0], sizes = [2, 8, 24], strides = [1, 1, 1]} : vector<2x8x96xf32> to vector<2x8x24xf32>
    %20 = vector.extract_strided_slice %18 {offsets = [0, 0, 24], sizes = [2, 8, 24], strides = [1, 1, 1]} : vector<2x8x96xf32> to vector<2x8x24xf32>
    %21 = vector.extract_strided_slice %18 {offsets = [0, 0, 48], sizes = [2, 8, 24], strides = [1, 1, 1]} : vector<2x8x96xf32> to vector<2x8x24xf32>
    %22 = vector.extract_strided_slice %18 {offsets = [0, 0, 72], sizes = [2, 8, 24], strides = [1, 1, 1]} : vector<2x8x96xf32> to vector<2x8x24xf32>
    %23 = vector.shape_cast %19 : vector<2x8x24xf32> to vector<2x1x8x24xf32>
    %24 = vector.shape_cast %20 : vector<2x8x24xf32> to vector<2x1x8x24xf32>
    %25 = vector.shape_cast %21 : vector<2x8x24xf32> to vector<2x1x8x24xf32>
    %26 = vector.shape_cast %22 : vector<2x8x24xf32> to vector<2x1x8x24xf32>
    %27 = tpu.concatenate %23, %24, %25, %26 in 1 : vector<2x1x8x24xf32>, vector<2x1x8x24xf32>, vector<2x1x8x24xf32>, vector<2x1x8x24xf32> -> vector<2x4x8x24xf32>
    %28 = vector.shape_cast %27 : vector<2x4x8x24xf32> to vector<8x8x24xf32>
    %29 = vector.extract_strided_slice %28 {offsets = [0, 0, 0], sizes = [8, 8, 8], strides = [1, 1, 1]} : vector<8x8x24xf32> to vector<8x8x8xf32>
    %30 = vector.extract_strided_slice %28 {offsets = [0, 0, 8], sizes = [8, 8, 8], strides = [1, 1, 1]} : vector<8x8x24xf32> to vector<8x8x8xf32>
    %31 = vector.extract_strided_slice %28 {offsets = [0, 0, 16], sizes = [8, 8, 8], strides = [1, 1, 1]} : vector<8x8x24xf32> to vector<8x8x8xf32>
    %c0_21 = arith.constant 0 : index
    %c0_22 = arith.constant 0 : index
    %32 = vector.load %arg4[%c0_21, %c0_22] : memref<32x32xf32, #tpu.memory_space<vmem>>, vector<32x32xf32>
    "tpu.trace_start"() <{level = 10 : i32, message = "gqd,gkd->gqk"}> : () -> ()
    %cst_23 = arith.constant dense<0.000000e+00> : vector<8x8x8xf32>
    %33 = tpu.matmul %29, %30, %cst_23 {dimension_numbers = #tpu.dot_dimension_numbers<[2], [2], [1], [1], [0, 0, 0, 1, 1, 1], [0], [0]>} : vector<8x8x8xf32>, vector<8x8x8xf32>, vector<8x8x8xf32> -> vector<8x8x8xf32>
    "tpu.trace_stop"() : () -> ()
    %34 = vector.shape_cast %15 : vector<8x8xf32> to vector<1x8x8xf32>
    %35 = vector.broadcast %34 : vector<1x8x8xf32> to vector<8x8x8xf32>
    %36 = arith.addf %33, %35 : vector<8x8x8xf32>
    %cst_24 = arith.constant dense<0xFF800000> : vector<8x8xf32>
    %37 = vector.multi_reduction <maximumf>, %36, %cst_24 [2] : vector<8x8x8xf32> to vector<8x8xf32>
    %38 = vector.shape_cast %37 : vector<8x8xf32> to vector<8x8x1xf32>
    %39 = vector.broadcast %38 : vector<8x8x1xf32> to vector<8x8x8xf32>
    %40 = arith.subf %36, %39 : vector<8x8x8xf32>
    %41 = math.exp %40 : vector<8x8x8xf32>
    %cst_25 = arith.constant dense<0.000000e+00> : vector<8x8xf32>
    %42 = vector.multi_reduction <add>, %41, %cst_25 [2] : vector<8x8x8xf32> to vector<8x8xf32>
    %43 = vector.shape_cast %42 : vector<8x8xf32> to vector<8x8x1xf32>
    %44 = tpu.reciprocal %43 {approx = true} : vector<8x8x1xf32> -> vector<8x8x1xf32>
    %45 = vector.broadcast %44 : vector<8x8x1xf32> to vector<8x8x8xf32>
    %46 = arith.mulf %41, %45 : vector<8x8x8xf32>
    "tpu.trace_start"() <{level = 10 : i32, message = "gqk,gkd->gqd"}> : () -> ()
    %cst_26 = arith.constant dense<0.000000e+00> : vector<8x8x8xf32>
    %47 = tpu.matmul %46, %31, %cst_26 {dimension_numbers = #tpu.dot_dimension_numbers<[2], [1], [1], [2], [0, 0, 0, 1, 1, 2], [0], [0]>} : vector<8x8x8xf32>, vector<8x8x8xf32>, vector<8x8x8xf32> -> vector<8x8x8xf32>
    "tpu.trace_stop"() : () -> ()
    %48 = vector.shape_cast %47 : vector<8x8x8xf32> to vector<2x4x8x8xf32>
    %49 = vector.extract_strided_slice %48 {offsets = [0, 0, 0, 0], sizes = [2, 1, 8, 8], strides = [1, 1, 1, 1]} : vector<2x4x8x8xf32> to vector<2x1x8x8xf32>
    %50 = vector.shape_cast %49 : vector<2x1x8x8xf32> to vector<2x8x8xf32>
    %51 = vector.extract_strided_slice %48 {offsets = [0, 1, 0, 0], sizes = [2, 1, 8, 8], strides = [1, 1, 1, 1]} : vector<2x4x8x8xf32> to vector<2x1x8x8xf32>
    %52 = vector.shape_cast %51 : vector<2x1x8x8xf32> to vector<2x8x8xf32>
    %53 = vector.extract_strided_slice %48 {offsets = [0, 2, 0, 0], sizes = [2, 1, 8, 8], strides = [1, 1, 1, 1]} : vector<2x4x8x8xf32> to vector<2x1x8x8xf32>
    %54 = vector.shape_cast %53 : vector<2x1x8x8xf32> to vector<2x8x8xf32>
    %55 = vector.extract_strided_slice %48 {offsets = [0, 3, 0, 0], sizes = [2, 1, 8, 8], strides = [1, 1, 1, 1]} : vector<2x4x8x8xf32> to vector<2x1x8x8xf32>
    %56 = vector.shape_cast %55 : vector<2x1x8x8xf32> to vector<2x8x8xf32>
    %57 = tpu.concatenate %50, %52, %54, %56 in 2 : vector<2x8x8xf32>, vector<2x8x8xf32>, vector<2x8x8xf32>, vector<2x8x8xf32> -> vector<2x8x32xf32>
    %58 = vector.shape_cast %57 : vector<2x8x32xf32> to vector<16x32xf32>
    %cst_27 = arith.constant dense<0.000000e+00> : vector<16x32xf32>
    %59 = tpu.matmul %58, %32, %cst_27 {dimension_numbers = #tpu.dot_dimension_numbers<[1], [0], [0], [1], [0, 0, 1, 1], [], []>} : vector<16x32xf32>, vector<32x32xf32>, vector<16x32xf32> -> vector<16x32xf32>
    %60 = vector.broadcast %8 : vector<1x32xf32> to vector<16x32xf32>
    %61 = arith.addf %59, %60 : vector<16x32xf32>
    %62 = arith.addf %61, %1 : vector<16x32xf32>
    %cst_28 = arith.constant dense<0.000000e+00> : vector<16xf32>
    %63 = vector.multi_reduction <add>, %62, %cst_28 [1] : vector<16x32xf32> to vector<16xf32>
    %64 = vector.shape_cast %63 : vector<16xf32> to vector<16x1xf32>
    %cst_29 = arith.constant 3.200000e+01 : f32
    %65 = vector.broadcast %cst_29 : f32 to vector<16x1xf32>
    %66 = arith.divf %64, %65 : vector<16x1xf32>
    %67 = vector.broadcast %66 : vector<16x1xf32> to vector<16x32xf32>
    %68 = arith.subf %62, %67 : vector<16x32xf32>
    %69 = arith.mulf %68, %68 : vector<16x32xf32>
    %cst_30 = arith.constant dense<0.000000e+00> : vector<16xf32>
    %70 = vector.multi_reduction <add>, %69, %cst_30 [1] : vector<16x32xf32> to vector<16xf32>
    %71 = vector.shape_cast %70 : vector<16xf32> to vector<16x1xf32>
    %cst_31 = arith.constant 3.200000e+01 : f32
    %72 = vector.broadcast %cst_31 : f32 to vector<16x1xf32>
    %73 = arith.divf %71, %72 : vector<16x1xf32>
    %74 = vector.broadcast %66 : vector<16x1xf32> to vector<16x32xf32>
    %75 = arith.subf %62, %74 : vector<16x32xf32>
    %cst_32 = arith.constant 9.99999974E-6 : f32
    %76 = vector.broadcast %cst_32 : f32 to vector<16x1xf32>
    %77 = arith.addf %73, %76 : vector<16x1xf32>
    %78 = math.rsqrt %77 : vector<16x1xf32>
    %79 = vector.broadcast %78 : vector<16x1xf32> to vector<16x32xf32>
    %80 = arith.mulf %75, %79 : vector<16x32xf32>
    %81 = vector.broadcast %4 : vector<1x32xf32> to vector<16x32xf32>
    %82 = arith.mulf %80, %81 : vector<16x32xf32>
    %83 = vector.broadcast %5 : vector<1x32xf32> to vector<16x32xf32>
    %84 = arith.addf %82, %83 : vector<16x32xf32>
    %c0_33 = arith.constant 0 : index
    %c0_34 = arith.constant 0 : index
    %85 = vector.load %arg8[%c0_33, %c0_34] : memref<32x32xf32, #tpu.memory_space<vmem>>, vector<32x32xf32>
    %cst_35 = arith.constant dense<0.000000e+00> : vector<16x32xf32>
    %86 = tpu.matmul %84, %85, %cst_35 {dimension_numbers = #tpu.dot_dimension_numbers<[1], [0], [0], [1], [0, 0, 1, 1], [], []>} : vector<16x32xf32>, vector<32x32xf32>, vector<16x32xf32> -> vector<16x32xf32>
    %87 = vector.shape_cast %86 : vector<16x32xf32> to vector<2x8x32xf32>
    %88 = vector.extract_strided_slice %87 {offsets = [0, 0, 0], sizes = [2, 8, 8], strides = [1, 1, 1]} : vector<2x8x32xf32> to vector<2x8x8xf32>
    %89 = vector.extract_strided_slice %87 {offsets = [0, 0, 8], sizes = [2, 8, 8], strides = [1, 1, 1]} : vector<2x8x32xf32> to vector<2x8x8xf32>
    %90 = vector.extract_strided_slice %87 {offsets = [0, 0, 16], sizes = [2, 8, 8], strides = [1, 1, 1]} : vector<2x8x32xf32> to vector<2x8x8xf32>
    %91 = vector.extract_strided_slice %87 {offsets = [0, 0, 24], sizes = [2, 8, 8], strides = [1, 1, 1]} : vector<2x8x32xf32> to vector<2x8x8xf32>
    %92 = vector.shape_cast %88 : vector<2x8x8xf32> to vector<2x1x8x8xf32>
    %93 = vector.shape_cast %89 : vector<2x8x8xf32> to vector<2x1x8x8xf32>
    %94 = vector.shape_cast %90 : vector<2x8x8xf32> to vector<2x1x8x8xf32>
    %95 = vector.shape_cast %91 : vector<2x8x8xf32> to vector<2x1x8x8xf32>
    %96 = tpu.concatenate %92, %93, %94, %95 in 1 : vector<2x1x8x8xf32>, vector<2x1x8x8xf32>, vector<2x1x8x8xf32>, vector<2x1x8x8xf32> -> vector<2x4x8x8xf32>
    %97 = vector.shape_cast %96 : vector<2x4x8x8xf32> to vector<8x8x8xf32>
    %c0_36 = arith.constant 0 : index
    %c0_37 = arith.constant 0 : index
    %98 = vector.load %arg9[%c0_36, %c0_37] : memref<32x64xf32, #tpu.memory_space<vmem>>, vector<32x64xf32>
    %cst_38 = arith.constant dense<0.000000e+00> : vector<32x64xf32>
    %99 = tpu.matmul %3, %98, %cst_38 {dimension_numbers = #tpu.dot_dimension_numbers<[1], [0], [0], [1], [0, 0, 1, 1], [], []>} : vector<32x32xf32>, vector<32x64xf32>, vector<32x64xf32> -> vector<32x64xf32>
    %100 = vector.shape_cast %99 : vector<32x64xf32> to vector<2x16x64xf32>
    %101 = vector.extract_strided_slice %100 {offsets = [0, 0, 0], sizes = [2, 16, 16], strides = [1, 1, 1]} : vector<2x16x64xf32> to vector<2x16x16xf32>
    %102 = vector.extract_strided_slice %100 {offsets = [0, 0, 16], sizes = [2, 16, 16], strides = [1, 1, 1]} : vector<2x16x64xf32> to vector<2x16x16xf32>
    %103 = vector.extract_strided_slice %100 {offsets = [0, 0, 32], sizes = [2, 16, 16], strides = [1, 1, 1]} : vector<2x16x64xf32> to vector<2x16x16xf32>
    %104 = vector.extract_strided_slice %100 {offsets = [0, 0, 48], sizes = [2, 16, 16], strides = [1, 1, 1]} : vector<2x16x64xf32> to vector<2x16x16xf32>
    %105 = vector.shape_cast %101 : vector<2x16x16xf32> to vector<2x1x16x16xf32>
    %106 = vector.shape_cast %102 : vector<2x16x16xf32> to vector<2x1x16x16xf32>
    %107 = vector.shape_cast %103 : vector<2x16x16xf32> to vector<2x1x16x16xf32>
    %108 = vector.shape_cast %104 : vector<2x16x16xf32> to vector<2x1x16x16xf32>
    %109 = tpu.concatenate %105, %106, %107, %108 in 1 : vector<2x1x16x16xf32>, vector<2x1x16x16xf32>, vector<2x1x16x16xf32>, vector<2x1x16x16xf32> -> vector<2x4x16x16xf32>
    %110 = vector.shape_cast %109 : vector<2x4x16x16xf32> to vector<8x16x16xf32>
    %111 = vector.extract_strided_slice %110 {offsets = [0, 0, 0], sizes = [8, 16, 8], strides = [1, 1, 1]} : vector<8x16x16xf32> to vector<8x16x8xf32>
    %112 = vector.extract_strided_slice %110 {offsets = [0, 0, 8], sizes = [8, 16, 8], strides = [1, 1, 1]} : vector<8x16x16xf32> to vector<8x16x8xf32>
    %c0_39 = arith.constant 0 : index
    %c0_40 = arith.constant 0 : index
    %113 = vector.load %arg10[%c0_39, %c0_40] : memref<32x32xf32, #tpu.memory_space<vmem>>, vector<32x32xf32>
    "tpu.trace_start"() <{level = 10 : i32, message = "gqd,gkd->gqk"}> : () -> ()
    %cst_41 = arith.constant dense<0.000000e+00> : vector<8x8x16xf32>
    %114 = tpu.matmul %97, %111, %cst_41 {dimension_numbers = #tpu.dot_dimension_numbers<[2], [2], [1], [1], [0, 0, 0, 1, 1, 1], [0], [0]>} : vector<8x8x8xf32>, vector<8x16x8xf32>, vector<8x8x16xf32> -> vector<8x8x16xf32>
    "tpu.trace_stop"() : () -> ()
    %cst_42 = arith.constant dense<0xFF800000> : vector<8x8xf32>
    %115 = vector.multi_reduction <maximumf>, %114, %cst_42 [2] : vector<8x8x16xf32> to vector<8x8xf32>
    %116 = vector.shape_cast %115 : vector<8x8xf32> to vector<8x8x1xf32>
    %117 = vector.broadcast %116 : vector<8x8x1xf32> to vector<8x8x16xf32>
    %118 = arith.subf %114, %117 : vector<8x8x16xf32>
    %119 = math.exp %118 : vector<8x8x16xf32>
    %cst_43 = arith.constant dense<0.000000e+00> : vector<8x8xf32>
    %120 = vector.multi_reduction <add>, %119, %cst_43 [2] : vector<8x8x16xf32> to vector<8x8xf32>
    %121 = vector.shape_cast %120 : vector<8x8xf32> to vector<8x8x1xf32>
    %122 = tpu.reciprocal %121 {approx = true} : vector<8x8x1xf32> -> vector<8x8x1xf32>
    %123 = vector.broadcast %122 : vector<8x8x1xf32> to vector<8x8x16xf32>
    %124 = arith.mulf %119, %123 : vector<8x8x16xf32>
    "tpu.trace_start"() <{level = 10 : i32, message = "gqk,gkd->gqd"}> : () -> ()
    %cst_44 = arith.constant dense<0.000000e+00> : vector<8x8x8xf32>
    %125 = tpu.matmul %124, %112, %cst_44 {dimension_numbers = #tpu.dot_dimension_numbers<[2], [1], [1], [2], [0, 0, 0, 1, 1, 2], [0], [0]>} : vector<8x8x16xf32>, vector<8x16x8xf32>, vector<8x8x8xf32> -> vector<8x8x8xf32>
    "tpu.trace_stop"() : () -> ()
    %126 = vector.shape_cast %125 : vector<8x8x8xf32> to vector<2x4x8x8xf32>
    %127 = vector.extract_strided_slice %126 {offsets = [0, 0, 0, 0], sizes = [2, 1, 8, 8], strides = [1, 1, 1, 1]} : vector<2x4x8x8xf32> to vector<2x1x8x8xf32>
    %128 = vector.shape_cast %127 : vector<2x1x8x8xf32> to vector<2x8x8xf32>
    %129 = vector.extract_strided_slice %126 {offsets = [0, 1, 0, 0], sizes = [2, 1, 8, 8], strides = [1, 1, 1, 1]} : vector<2x4x8x8xf32> to vector<2x1x8x8xf32>
    %130 = vector.shape_cast %129 : vector<2x1x8x8xf32> to vector<2x8x8xf32>
    %131 = vector.extract_strided_slice %126 {offsets = [0, 2, 0, 0], sizes = [2, 1, 8, 8], strides = [1, 1, 1, 1]} : vector<2x4x8x8xf32> to vector<2x1x8x8xf32>
    %132 = vector.shape_cast %131 : vector<2x1x8x8xf32> to vector<2x8x8xf32>
    %133 = vector.extract_strided_slice %126 {offsets = [0, 3, 0, 0], sizes = [2, 1, 8, 8], strides = [1, 1, 1, 1]} : vector<2x4x8x8xf32> to vector<2x1x8x8xf32>
    %134 = vector.shape_cast %133 : vector<2x1x8x8xf32> to vector<2x8x8xf32>
    %135 = tpu.concatenate %128, %130, %132, %134 in 2 : vector<2x8x8xf32>, vector<2x8x8xf32>, vector<2x8x8xf32>, vector<2x8x8xf32> -> vector<2x8x32xf32>
    %136 = vector.shape_cast %135 : vector<2x8x32xf32> to vector<16x32xf32>
    %cst_45 = arith.constant dense<0.000000e+00> : vector<16x32xf32>
    %137 = tpu.matmul %136, %113, %cst_45 {dimension_numbers = #tpu.dot_dimension_numbers<[1], [0], [0], [1], [0, 0, 1, 1], [], []>} : vector<16x32xf32>, vector<32x32xf32>, vector<16x32xf32> -> vector<16x32xf32>
    %138 = vector.broadcast %9 : vector<1x32xf32> to vector<16x32xf32>
    %139 = arith.addf %137, %138 : vector<16x32xf32>
    %140 = arith.addf %139, %84 : vector<16x32xf32>
    %cst_46 = arith.constant dense<0.000000e+00> : vector<16xf32>
    %141 = vector.multi_reduction <add>, %140, %cst_46 [1] : vector<16x32xf32> to vector<16xf32>
    %142 = vector.shape_cast %141 : vector<16xf32> to vector<16x1xf32>
    %cst_47 = arith.constant 3.200000e+01 : f32
    %143 = vector.broadcast %cst_47 : f32 to vector<16x1xf32>
    %144 = arith.divf %142, %143 : vector<16x1xf32>
    %145 = vector.broadcast %144 : vector<16x1xf32> to vector<16x32xf32>
    %146 = arith.subf %140, %145 : vector<16x32xf32>
    %147 = arith.mulf %146, %146 : vector<16x32xf32>
    %cst_48 = arith.constant dense<0.000000e+00> : vector<16xf32>
    %148 = vector.multi_reduction <add>, %147, %cst_48 [1] : vector<16x32xf32> to vector<16xf32>
    %149 = vector.shape_cast %148 : vector<16xf32> to vector<16x1xf32>
    %cst_49 = arith.constant 3.200000e+01 : f32
    %150 = vector.broadcast %cst_49 : f32 to vector<16x1xf32>
    %151 = arith.divf %149, %150 : vector<16x1xf32>
    %152 = vector.broadcast %144 : vector<16x1xf32> to vector<16x32xf32>
    %153 = arith.subf %140, %152 : vector<16x32xf32>
    %cst_50 = arith.constant 9.99999974E-6 : f32
    %154 = vector.broadcast %cst_50 : f32 to vector<16x1xf32>
    %155 = arith.addf %151, %154 : vector<16x1xf32>
    %156 = math.rsqrt %155 : vector<16x1xf32>
    %157 = vector.broadcast %156 : vector<16x1xf32> to vector<16x32xf32>
    %158 = arith.mulf %153, %157 : vector<16x32xf32>
    %159 = vector.broadcast %6 : vector<1x32xf32> to vector<16x32xf32>
    %160 = arith.mulf %158, %159 : vector<16x32xf32>
    %161 = vector.broadcast %7 : vector<1x32xf32> to vector<16x32xf32>
    %162 = arith.addf %160, %161 : vector<16x32xf32>
    %c0_51 = arith.constant 0 : index
    %c0_52 = arith.constant 0 : index
    %163 = vector.load %arg14[%c0_51, %c0_52] : memref<32x64xf32, #tpu.memory_space<vmem>>, vector<32x64xf32>
    %cst_53 = arith.constant dense<0.000000e+00> : vector<16x64xf32>
    %164 = tpu.matmul %162, %163, %cst_53 {dimension_numbers = #tpu.dot_dimension_numbers<[1], [0], [0], [1], [0, 0, 1, 1], [], []>} : vector<16x32xf32>, vector<32x64xf32>, vector<16x64xf32> -> vector<16x64xf32>
    %c0_54 = arith.constant 0 : index
    %c0_55 = arith.constant 0 : index
    %165 = vector.load %arg15[%c0_54, %c0_55] : memref<1x64xf32, #tpu.memory_space<vmem>>, vector<1x64xf32>
    %166 = vector.broadcast %165 : vector<1x64xf32> to vector<16x64xf32>
    %167 = arith.addf %164, %166 : vector<16x64xf32>
    %cst_56 = arith.constant 0.000000e+00 : f32
    %168 = vector.broadcast %cst_56 : f32 to vector<16x64xf32>
    %169 = arith.maximumf %167, %168 : vector<16x64xf32>
    %c0_57 = arith.constant 0 : index
    %c0_58 = arith.constant 0 : index
    %170 = vector.load %arg16[%c0_57, %c0_58] : memref<64x32xf32, #tpu.memory_space<vmem>>, vector<64x32xf32>
    %cst_59 = arith.constant dense<0.000000e+00> : vector<16x32xf32>
    %171 = tpu.matmul %169, %170, %cst_59 {dimension_numbers = #tpu.dot_dimension_numbers<[1], [0], [0], [1], [0, 0, 1, 1], [], []>} : vector<16x64xf32>, vector<64x32xf32>, vector<16x32xf32> -> vector<16x32xf32>
    %c0_60 = arith.constant 0 : index
    %c0_61 = arith.constant 0 : index
    %172 = vector.load %arg17[%c0_60, %c0_61] : memref<1x32xf32, #tpu.memory_space<vmem>>, vector<1x32xf32>
    %173 = vector.broadcast %172 : vector<1x32xf32> to vector<16x32xf32>
    %174 = arith.addf %171, %173 : vector<16x32xf32>
    %175 = arith.addf %174, %162 : vector<16x32xf32>
    %cst_62 = arith.constant dense<0.000000e+00> : vector<16xf32>
    %176 = vector.multi_reduction <add>, %175, %cst_62 [1] : vector<16x32xf32> to vector<16xf32>
    %177 = vector.shape_cast %176 : vector<16xf32> to vector<16x1xf32>
    %cst_63 = arith.constant 3.200000e+01 : f32
    %178 = vector.broadcast %cst_63 : f32 to vector<16x1xf32>
    %179 = arith.divf %177, %178 : vector<16x1xf32>
    %180 = vector.broadcast %179 : vector<16x1xf32> to vector<16x32xf32>
    %181 = arith.subf %175, %180 : vector<16x32xf32>
    %182 = arith.mulf %181, %181 : vector<16x32xf32>
    %cst_64 = arith.constant dense<0.000000e+00> : vector<16xf32>
    %183 = vector.multi_reduction <add>, %182, %cst_64 [1] : vector<16x32xf32> to vector<16xf32>
    %184 = vector.shape_cast %183 : vector<16xf32> to vector<16x1xf32>
    %cst_65 = arith.constant 3.200000e+01 : f32
    %185 = vector.broadcast %cst_65 : f32 to vector<16x1xf32>
    %186 = arith.divf %184, %185 : vector<16x1xf32>
    %187 = vector.broadcast %179 : vector<16x1xf32> to vector<16x32xf32>
    %188 = arith.subf %175, %187 : vector<16x32xf32>
    %cst_66 = arith.constant 9.99999974E-6 : f32
    %189 = vector.broadcast %cst_66 : f32 to vector<16x1xf32>
    %190 = arith.addf %186, %189 : vector<16x1xf32>
    %191 = math.rsqrt %190 : vector<16x1xf32>
    %192 = vector.broadcast %191 : vector<16x1xf32> to vector<16x32xf32>
    %193 = arith.mulf %188, %192 : vector<16x32xf32>
    %194 = vector.broadcast %6 : vector<1x32xf32> to vector<16x32xf32>
    %195 = arith.mulf %193, %194 : vector<16x32xf32>
    %196 = vector.broadcast %7 : vector<1x32xf32> to vector<16x32xf32>
    %197 = arith.addf %195, %196 : vector<16x32xf32>
    %198 = vector.shape_cast %197 : vector<16x32xf32> to vector<2x8x32xf32>
    %c0_67 = arith.constant 0 : index
    %c0_68 = arith.constant 0 : index
    %c0_69 = arith.constant 0 : index
    %199 = vector.load %arg18[%c0_67, %c0_68, %c0_69] : memref<2x8x32xf32, #tpu.memory_space<vmem>>, vector<2x8x32xf32>
    tpu.vector_store %arg18[%c0_67, %c0_68, %c0_69], %198 {strides = array<i32>} : memref<2x8x32xf32, #tpu.memory_space<vmem>>, vector<2x8x32xf32>,
    return
  }
  func.func @transform_0(%arg0: i32) -> (i32, i32, i32) {
    %c0_i32 = arith.constant 0 : i32
    %c0_i32_0 = arith.constant 0 : i32
    %c0_i32_1 = arith.constant 0 : i32
    return %arg0, %c0_i32, %c0_i32_0 : i32, i32, i32
  }
  func.func @transform_1(%arg0: i32) -> (i32, i32, i32) {
    %c0_i32 = arith.constant 0 : i32
    %c0_i32_0 = arith.constant 0 : i32
    %c0_i32_1 = arith.constant 0 : i32
    return %arg0, %c0_i32, %c0_i32_0 : i32, i32, i32
  }
  func.func @transform_2(%arg0: i32) -> (i32, i32) {
    %c0_i32 = arith.constant 0 : i32
    %c0_i32_0 = arith.constant 0 : i32
    %c0_i32_1 = arith.constant 0 : i32
    return %c0_i32, %c0_i32_0 : i32, i32
  }
  func.func @transform_3(%arg0: i32) -> (i32, i32) {
    %c0_i32 = arith.constant 0 : i32
    %c0_i32_0 = arith.constant 0 : i32
    %c0_i32_1 = arith.constant 0 : i32
    return %c0_i32, %c0_i32_0 : i32, i32
  }
  func.func @transform_4(%arg0: i32) -> (i32, i32) {
    %c0_i32 = arith.constant 0 : i32
    %c0_i32_0 = arith.constant 0 : i32
    %c0_i32_1 = arith.constant 0 : i32
    return %c0_i32, %c0_i32_0 : i32, i32
  }
  func.func @transform_5(%arg0: i32) -> (i32, i32) {
    %c0_i32 = arith.constant 0 : i32
    %c0_i32_0 = arith.constant 0 : i32
    %c0_i32_1 = arith.constant 0 : i32
    return %c0_i32, %c0_i32_0 : i32, i32
  }
  func.func @transform_6(%arg0: i32) -> (i32, i32) {
    %c0_i32 = arith.constant 0 : i32
    %c0_i32_0 = arith.constant 0 : i32
    %c0_i32_1 = arith.constant 0 : i32
    return %c0_i32, %c0_i32_0 : i32, i32
  }
  func.func @transform_7(%arg0: i32) -> (i32, i32) {
    %c0_i32 = arith.constant 0 : i32
    %c0_i32_0 = arith.constant 0 : i32
    %c0_i32_1 = arith.constant 0 : i32
    return %c0_i32, %c0_i32_0 : i32, i32
  }
  func.func @transform_8(%arg0: i32) -> (i32, i32) {
    %c0_i32 = arith.constant 0 : i32
    %c0_i32_0 = arith.constant 0 : i32
    %c0_i32_1 = arith.constant 0 : i32
    return %c0_i32, %c0_i32_0 : i32, i32
  }
  func.func @transform_9(%arg0: i32) -> (i32, i32) {
    %c0_i32 = arith.constant 0 : i32
    %c0_i32_0 = arith.constant 0 : i32
    %c0_i32_1 = arith.constant 0 : i32
    return %c0_i32, %c0_i32_0 : i32, i32
  }
  func.func @transform_10(%arg0: i32) -> (i32, i32) {
    %c0_i32 = arith.constant 0 : i32
    %c0_i32_0 = arith.constant 0 : i32
    %c0_i32_1 = arith.constant 0 : i32
    return %c0_i32, %c0_i32_0 : i32, i32
  }
  func.func @transform_11(%arg0: i32) -> (i32, i32) {
    %c0_i32 = arith.constant 0 : i32
    %c0_i32_0 = arith.constant 0 : i32
    %c0_i32_1 = arith.constant 0 : i32
    return %c0_i32, %c0_i32_0 : i32, i32
  }
  func.func @transform_12(%arg0: i32) -> (i32, i32) {
    %c0_i32 = arith.constant 0 : i32
    %c0_i32_0 = arith.constant 0 : i32
    %c0_i32_1 = arith.constant 0 : i32
    return %c0_i32, %c0_i32_0 : i32, i32
  }
  func.func @transform_13(%arg0: i32) -> (i32, i32) {
    %c0_i32 = arith.constant 0 : i32
    %c0_i32_0 = arith.constant 0 : i32
    %c0_i32_1 = arith.constant 0 : i32
    return %c0_i32, %c0_i32_0 : i32, i32
  }
  func.func @transform_14(%arg0: i32) -> (i32, i32) {
    %c0_i32 = arith.constant 0 : i32
    %c0_i32_0 = arith.constant 0 : i32
    %c0_i32_1 = arith.constant 0 : i32
    return %c0_i32, %c0_i32_0 : i32, i32
  }
  func.func @transform_15(%arg0: i32) -> (i32, i32) {
    %c0_i32 = arith.constant 0 : i32
    %c0_i32_0 = arith.constant 0 : i32
    %c0_i32_1 = arith.constant 0 : i32
    return %c0_i32, %c0_i32_0 : i32, i32
  }
  func.func @transform_16(%arg0: i32) -> (i32, i32) {
    %c0_i32 = arith.constant 0 : i32
    %c0_i32_0 = arith.constant 0 : i32
    %c0_i32_1 = arith.constant 0 : i32
    return %c0_i32, %c0_i32_0 : i32, i32
  }
  func.func @transform_17(%arg0: i32) -> (i32, i32, i32) {
    %c0_i32 = arith.constant 0 : i32
    %c0_i32_0 = arith.constant 0 : i32
    %c0_i32_1 = arith.constant 0 : i32
    return %arg0, %c0_i32, %c0_i32_0 : i32, i32, i32
  }
}

</mosaic_0001>

<llo_original>
// kernel: tpu_custom_call.1
$region0: #{tpu_custom_call.1}
  #allocation0 [shape = 'u32[]', space=smem, size = 0x4, offset = 0x4, fixed_abs, tag = 'smem constant byte address 0x4 - core index']
  #allocation1 [shape = 'u32[144,128]{1,0:T(1,128)}', space=vmem, size = 0x12000, scoped, tag = 'internal scratch']
  %s0 = inlined_call_operand.hbm [shape: f32[2,8,32], index: 0, kind: input, shape index: {}]
  %s1 = inlined_call_operand.vmem [shape: f32[2,16,32], index: 1, kind: input, shape index: {}]
  %s2 = inlined_call_operand.vmem [shape: f32[32,96], index: 2, kind: input, shape index: {}]
  %s3 = inlined_call_operand.vmem [shape: f32[32,32], index: 3, kind: input, shape index: {}]
  %s4 = inlined_call_operand.vmem [shape: f32[1,32], index: 4, kind: input, shape index: {}]
  %s5 = inlined_call_operand.vmem [shape: f32[1,32], index: 5, kind: input, shape index: {}]
  %s6 = inlined_call_operand.vmem [shape: f32[1,32], index: 6, kind: input, shape index: {}]
  %s7 = inlined_call_operand.hbm [shape: f32[32,32], index: 7, kind: input, shape index: {}]
  %s8 = inlined_call_operand.hbm [shape: f32[32,64], index: 8, kind: input, shape index: {}]
  %s9 = inlined_call_operand.hbm [shape: f32[32,32], index: 9, kind: input, shape index: {}]
  %s10 = inlined_call_operand.vmem [shape: f32[1,32], index: 10, kind: input, shape index: {}]
  %s11 = inlined_call_operand.vmem [shape: f32[1,32], index: 11, kind: input, shape index: {}]
  %s12 = inlined_call_operand.vmem [shape: f32[1,32], index: 12, kind: input, shape index: {}]
  %s13 = inlined_call_operand.hbm [shape: f32[32,64], index: 13, kind: input, shape index: {}]
  %s14 = inlined_call_operand.vmem [shape: f32[1,64], index: 14, kind: input, shape index: {}]
  %s15 = inlined_call_operand.vmem [shape: f32[64,32], index: 15, kind: input, shape index: {}]
  %s16 = inlined_call_operand.vmem [shape: f32[1,32], index: 16, kind: input, shape index: {}]
  %s17 = inlined_call_operand.hbm [shape: f32[2,8,32], index: 17, kind: output, shape index: {}]
  %s18 = sld [smem:[#allocation0]]
  $region98: #{tpu_custom_call.1} parent=0
    _
  %s20 = ssub.s32 1, %s18
  %s21 = scalar_select 0, %s20, %s18
  $region1: #{tpu_custom_call.1} parent=0
    #allocation2 [shape = 'u8[8192]{0}', space=vmem, size = 0x2000, scoped, tag = 'input window, operand 0, single buffered']
    #allocation3 [shape = 's32[1]{0}', space=sflag, size = 0x4, scoped, tag = 'scoped memory for tpu_custom_call.1']
    #allocation4 [shape = 's32[1]{0}', space=sflag, size = 0x4, scoped, tag = 'scoped memory for tpu_custom_call.1']
    #allocation5 [shape = 'u8[16384]{0}', space=vmem, size = 0x4000, scoped, tag = 'input window, operand 7, single buffered']
    #allocation6 [shape = 's32[1]{0}', space=sflag, size = 0x4, scoped, tag = 'scoped memory for tpu_custom_call.1']
    #allocation7 [shape = 'u8[16384]{0}', space=vmem, size = 0x4000, scoped, tag = 'input window, operand 8, single buffered']
    #allocation8 [shape = 'u8[16384]{0}', space=vmem, size = 0x4000, scoped, tag = 'input window, operand 9, single buffered']
    #allocation9 [shape = 's32[1]{0}', space=sflag, size = 0x4, scoped, tag = 'scoped memory for tpu_custom_call.1']
    #allocation10 [shape = 'u8[16384]{0}', space=vmem, size = 0x4000, scoped, tag = 'input window, operand 13, single buffered']
    #allocation11 [shape = 'u8[8192]{0}', space=vmem, size = 0x2000, scoped, tag = 'output window, operand 0, single buffered']
    %22 = vsyncpa [#allocation3], 0
    %23 = vsyncpa [#allocation6], 0
    %24 = vsyncpa [#allocation9], 0
    %25 = vsyncpa [#allocation4], 0
    // Predicated region
    $region2: #{tpu_custom_call.1} parent=1 // pred_check
      _
    $region3: #{tpu_custom_call.1} parent=1 // pred_check_branch
      %27 = sbr.rel (0) target = $region5
    $region4: #{tpu_custom_call.1} parent=1 // pred_region
      %s29 = ssub.s32 256, 256
      %30 = vsyncadd [#allocation3], %s29
      %s31 = sshll.u32 [#allocation2], 4
      %s32 = int_to_ptr.vmem [resolvable:$true] %s31
      %37 = dma.hbm_to_vmem [thread:$0]  %s0, 256, %s32, [#allocation3], 128, 128, 8
    $region5: #{tpu_custom_call.1} parent=1 // pred_fallthru
      _
    // Predicated region
    $region6: #{tpu_custom_call.1} parent=1 // pred_check
      _
    $region7: #{tpu_custom_call.1} parent=1 // pred_check_branch
      %39 = sbr.rel (0) target = $region9
    $region8: #{tpu_custom_call.1} parent=1 // pred_region
      _
    $region9: #{tpu_custom_call.1} parent=1 // pred_fallthru
      _
    // Predicated region
    $region10: #{tpu_custom_call.1} parent=1 // pred_check
      _
    $region11: #{tpu_custom_call.1} parent=1 // pred_check_branch
      %41 = sbr.rel (0) target = $region13
    $region12: #{tpu_custom_call.1} parent=1 // pred_region
      _
    $region13: #{tpu_custom_call.1} parent=1 // pred_fallthru
      _
    // Predicated region
    $region14: #{tpu_custom_call.1} parent=1 // pred_check
      _
    $region15: #{tpu_custom_call.1} parent=1 // pred_check_branch
      %43 = sbr.rel (0) target = $region17
    $region16: #{tpu_custom_call.1} parent=1 // pred_region
      _
    $region17: #{tpu_custom_call.1} parent=1 // pred_fallthru
      _
    // Predicated region
    $region18: #{tpu_custom_call.1} parent=1 // pred_check
      _
    $region19: #{tpu_custom_call.1} parent=1 // pred_check_branch
      %45 = sbr.rel (0) target = $region21
    $region20: #{tpu_custom_call.1} parent=1 // pred_region
      _
    $region21: #{tpu_custom_call.1} parent=1 // pred_fallthru
      _
    // Predicated region
    $region22: #{tpu_custom_call.1} parent=1 // pred_check
      _
    $region23: #{tpu_custom_call.1} parent=1 // pred_check_branch
      %47 = sbr.rel (0) target = $region25
    $region24: #{tpu_custom_call.1} parent=1 // pred_region
      _
    $region25: #{tpu_custom_call.1} parent=1 // pred_fallthru
      _
    // Predicated region
    $region26: #{tpu_custom_call.1} parent=1 // pred_check
      _
    $region27: #{tpu_custom_call.1} parent=1 // pred_check_branch
      %49 = sbr.rel (0) target = $region29
    $region28: #{tpu_custom_call.1} parent=1 // pred_region
      _
    $region29: #{tpu_custom_call.1} parent=1 // pred_fallthru
      _
    // Predicated region
    $region30: #{tpu_custom_call.1} parent=1 // pred_check
      _
    $region31: #{tpu_custom_call.1} parent=1 // pred_check_branch
      %51 = sbr.rel (0) target = $region33
    $region32: #{tpu_custom_call.1} parent=1 // pred_region
      %s53 = ssub.s32 512, 512
      %54 = vsyncadd [#allocation6], %s53
      %s55 = sshll.u32 [#allocation5], 4
      %s56 = int_to_ptr.vmem [resolvable:$true] %s55
      %61 = dma.hbm_to_vmem [thread:$0]  %s7, 512, %s56, [#allocation6], 128, 128, 8
    $region33: #{tpu_custom_call.1} parent=1 // pred_fallthru
      _
    // Predicated region
    $region34: #{tpu_custom_call.1} parent=1 // pred_check
      _
    $region35: #{tpu_custom_call.1} parent=1 // pred_check_branch
      %63 = sbr.rel (0) target = $region37
    $region36: #{tpu_custom_call.1} parent=1 // pred_region
      %s65 = ssub.s32 512, 512
      %66 = vsyncadd [#allocation6], %s65
      %s67 = sshll.u32 [#allocation7], 4
      %s68 = int_to_ptr.vmem [resolvable:$true] %s67
      %73 = dma.hbm_to_vmem [thread:$0]  %s8, 512, %s68, [#allocation6], 128, 128, 8
    $region37: #{tpu_custom_call.1} parent=1 // pred_fallthru
      _
    // Predicated region
    $region38: #{tpu_custom_call.1} parent=1 // pred_check
      _
    $region39: #{tpu_custom_call.1} parent=1 // pred_check_branch
      %75 = sbr.rel (0) target = $region41
    $region40: #{tpu_custom_call.1} parent=1 // pred_region
      %s77 = ssub.s32 512, 512
      %78 = vsyncadd [#allocation9], %s77
      %s79 = sshll.u32 [#allocation8], 4
      %s80 = int_to_ptr.vmem [resolvable:$true] %s79
      %85 = dma.hbm_to_vmem [thread:$0]  %s9, 512, %s80, [#allocation9], 128, 128, 8
    $region41: #{tpu_custom_call.1} parent=1 // pred_fallthru
      _
    // Predicated region
    $region42: #{tpu_custom_call.1} parent=1 // pred_check
      _
    $region43: #{tpu_custom_call.1} parent=1 // pred_check_branch
      %87 = sbr.rel (0) target = $region45
    $region44: #{tpu_custom_call.1} parent=1 // pred_region
      _
    $region45: #{tpu_custom_call.1} parent=1 // pred_fallthru
      _
    // Predicated region
    $region46: #{tpu_custom_call.1} parent=1 // pred_check
      _
    $region47: #{tpu_custom_call.1} parent=1 // pred_check_branch
      %89 = sbr.rel (0) target = $region49
    $region48: #{tpu_custom_call.1} parent=1 // pred_region
      _
    $region49: #{tpu_custom_call.1} parent=1 // pred_fallthru
      _
    // Predicated region
    $region50: #{tpu_custom_call.1} parent=1 // pred_check
      _
    $region51: #{tpu_custom_call.1} parent=1 // pred_check_branch
      %91 = sbr.rel (0) target = $region53
    $region52: #{tpu_custom_call.1} parent=1 // pred_region
      _
    $region53: #{tpu_custom_call.1} parent=1 // pred_fallthru
      _
    // Predicated region
    $region54: #{tpu_custom_call.1} parent=1 // pred_check
      _
    $region55: #{tpu_custom_call.1} parent=1 // pred_check_branch
      %93 = sbr.rel (0) target = $region57
    $region56: #{tpu_custom_call.1} parent=1 // pred_region
      %s95 = ssub.s32 512, 512
      %96 = vsyncadd [#allocation9], %s95
      %s97 = sshll.u32 [#allocation10], 4
      %s98 = int_to_ptr.vmem [resolvable:$true] %s97
      %103 = dma.hbm_to_vmem [thread:$0]  %s13, 512, %s98, [#allocation9], 128, 128, 8
    $region57: #{tpu_custom_call.1} parent=1 // pred_fallthru
      _
    // Predicated region
    $region58: #{tpu_custom_call.1} parent=1 // pred_check
      _
    $region59: #{tpu_custom_call.1} parent=1 // pred_check_branch
      %105 = sbr.rel (0) target = $region61
    $region60: #{tpu_custom_call.1} parent=1 // pred_region
      _
    $region61: #{tpu_custom_call.1} parent=1 // pred_fallthru
      _
    // Predicated region
    $region62: #{tpu_custom_call.1} parent=1 // pred_check
      _
    $region63: #{tpu_custom_call.1} parent=1 // pred_check_branch
      %107 = sbr.rel (0) target = $region65
    $region64: #{tpu_custom_call.1} parent=1 // pred_region
      _
    $region65: #{tpu_custom_call.1} parent=1 // pred_fallthru
      _
    // Predicated region
    $region66: #{tpu_custom_call.1} parent=1 // pred_check
      _
    $region67: #{tpu_custom_call.1} parent=1 // pred_check_branch
      %109 = sbr.rel (0) target = $region69
    $region68: #{tpu_custom_call.1} parent=1 // pred_region
      _
    $region69: #{tpu_custom_call.1} parent=1 // pred_fallthru
      _
    // Predicated region
    $region70: #{tpu_custom_call.1} parent=1 // pred_check
      _
    $region71: #{tpu_custom_call.1} parent=1 // pred_check_branch
      %111 = sbr.rel (0) target = $region73
    $region72: #{tpu_custom_call.1} parent=1 // pred_region
      %112 = dma.done [#allocation3], 256
    $region73: #{tpu_custom_call.1} parent=1 // pred_fallthru
      _
    // Predicated region
    $region74: #{tpu_custom_call.1} parent=1 // pred_check
      _
    $region75: #{tpu_custom_call.1} parent=1 // pred_check_branch
      %114 = sbr.rel (0) target = $region77
    $region76: #{tpu_custom_call.1} parent=1 // pred_region
      %115 = dma.done [#allocation6], 512
    $region77: #{tpu_custom_call.1} parent=1 // pred_fallthru
      _
    // Predicated region
    $region78: #{tpu_custom_call.1} parent=1 // pred_check
      _
    $region79: #{tpu_custom_call.1} parent=1 // pred_check_branch
      %117 = sbr.rel (0) target = $region81
    $region80: #{tpu_custom_call.1} parent=1 // pred_region
      %118 = dma.done [#allocation6], 512
    $region81: #{tpu_custom_call.1} parent=1 // pred_fallthru
      _
    // Predicated region
    $region82: #{tpu_custom_call.1} parent=1 // pred_check
      _
    $region83: #{tpu_custom_call.1} parent=1 // pred_check_branch
      %120 = sbr.rel (0) target = $region85
    $region84: #{tpu_custom_call.1} parent=1 // pred_region
      %121 = dma.done [#allocation9], 512
    $region85: #{tpu_custom_call.1} parent=1 // pred_fallthru
      _
    // Predicated region
    $region86: #{tpu_custom_call.1} parent=1 // pred_check
      _
    $region87: #{tpu_custom_call.1} parent=1 // pred_check_branch
      %123 = sbr.rel (0) target = $region89
    $region88: #{tpu_custom_call.1} parent=1 // pred_region
      %124 = dma.done [#allocation9], 512
    $region89: #{tpu_custom_call.1} parent=1 // pred_fallthru
      _
    %v125 = vld [vmem:[#allocation2] sm:$0xff]
    %v126 = vld [vmem:[#allocation2 + $0x8] sm:$0xff]
    %v127 = vld [vmem:[%s1] sm:$0xff]
    %v128 = vld [vmem:[%s1 + $0x8] sm:$0xff]
    %v129 = vld [vmem:[%s1 + $0x10] sm:$0xff]
    %v130 = vld [vmem:[%s1 + $0x18] sm:$0xff]
    %v131 = vld [vmem:[%s5] sm:$0x1]
    %v132 = vld [vmem:[%s6] sm:$0x1]
    %v133 = vld [vmem:[%s11] sm:$0x1]
    %v134 = vld [vmem:[%s12] sm:$0x1]
    %v135 = vld [vmem:[%s4] sm:$0x1]
    %v136 = vld [vmem:[%s10] sm:$0x1]
    %v137 = vlaneseq
    %v138 = vshrl.u32 %v137, 7
    %v139 = vlaneseq
    %v140 = vand.u32 %v139, 127
    %vm141 = vcmp.gt.s32.totalorder %v140, %v138
    %v142 = vsel %vm141, -1e+30, 0.0
    %v143 = vld [vmem:[%s2] sm:$0xff]
    %v144 = vld [vmem:[%s2 + $0x8] sm:$0xff]
    %v145 = vld [vmem:[%s2 + $0x10] sm:$0xff]
    %v146 = vld [vmem:[%s2 + $0x18] sm:$0xff]
    %vm147 = vcmask 261120
    %v149 = vsel %vm147, %v125, 0
    %v152 = vsel %vm147, %v126, 0
    %154 = vmatprep.subr.mxu0 0.0
    %155 = vmatpush1.msra.mxu0 0.0
    %156 = vmatprep.subr.mxu0 0.0
    %157 = vmatpush1.msra.mxu0 0.0
    %158 = vmatprep.subr.mxu0 0.0
    %159 = vmatpush1.msra.mxu0 0.0
    %160 = vmatprep.subr.mxu0 0.0
    %161 = vmatpush1.msra.mxu0 0.0
    %162 = vmatprep.subr.mxu0 0.0
    %163 = vmatpush1.msra.mxu0 0.0
    %164 = vmatprep.subr.mxu0 0.0
    %165 = vmatpush1.msra.mxu0 0.0
    %166 = vmatprep.subr.mxu0 0.0
    %167 = vmatpush1.msra.mxu0 0.0
    %168 = vmatprep.subr.mxu0 0.0
    %169 = vmatpush1.msra.mxu0 0.0
    %170 = vmatprep.subr.mxu0 0.0
    %171 = vmatpush1.msra.mxu0 0.0
    %172 = vmatprep.subr.mxu0 0.0
    %173 = vmatpush1.msra.mxu0 0.0
    %174 = vmatprep.subr.mxu0 0.0
    %175 = vmatpush1.msra.mxu0 0.0
    %176 = vmatprep.subr.mxu0 0.0
    %177 = vmatpush1.msra.mxu0 0.0
    %178 = vmatprep.subr.mxu0 0.0
    %179 = vmatpush1.msra.mxu0 %v146
    %180 = vmatprep.subr.mxu0 0.0
    %181 = vmatpush1.msra.mxu0 %v145
    %182 = vmatprep.subr.mxu0 0.0
    %183 = vmatpush1.msra.mxu0 %v144
    %184 = vmatprep.subr.mxu0 0.0
    %185 = vmatpush1.msra.mxu0 %v143
    %186 = vmatprep.subr.mxu0 0.0
    %187 = vmatpush2.msra.mxu0 0.0
    %188 = vmatprep.subr.mxu0 0.0
    %189 = vmatpush2.msra.mxu0 0.0
    %190 = vmatprep.subr.mxu0 0.0
    %191 = vmatpush2.msra.mxu0 0.0
    %192 = vmatprep.subr.mxu0 0.0
    %193 = vmatpush2.msra.mxu0 0.0
    %194 = vmatprep.subr.mxu0 0.0
    %195 = vmatpush2.msra.mxu0 0.0
    %196 = vmatprep.subr.mxu0 0.0
    %197 = vmatpush2.msra.mxu0 0.0
    %198 = vmatprep.subr.mxu0 0.0
    %199 = vmatpush2.msra.mxu0 0.0
    %200 = vmatprep.subr.mxu0 0.0
    %201 = vmatpush2.msra.mxu0 0.0
    %202 = vmatprep.subr.mxu0 0.0
    %203 = vmatpush2.msra.mxu0 0.0
    %204 = vmatprep.subr.mxu0 0.0
    %205 = vmatpush2.msra.mxu0 0.0
    %206 = vmatprep.subr.mxu0 0.0
    %207 = vmatpush2.msra.mxu0 0.0
    %208 = vmatprep.subr.mxu0 0.0
    %209 = vmatpush2.msra.mxu0 0.0
    %210 = vmatprep.subr.mxu0 0.0
    %211 = vmatpush2.msra.mxu0 0.0
    %212 = vmatprep.subr.mxu0 0.0
    %213 = vmatpush2.msra.mxu0 0.0
    %214 = vmatprep.subr.mxu0 0.0
    %215 = vmatpush2.msra.mxu0 0.0
    %216 = vmatprep.subr.mxu0 0.0
    %217 = vmatpush2.msra.mxu0 0.0
    %218 = vmatprep.mubr.f32.mxu0 0.0
    %219 = vmatmul.mubr.f32.gmra.mxu0 %v149
    %v220 = vpop.f32.mrf.mxu0
    %v221 = vadd.f32 0.0, %v220
    %v222 = vpop.f32.mrf.mxu0
    %223 = vmatprep.mubr.f32.mxu0 0.0
    %224 = vmatmul.mubr.f32.gmra.mxu0 %v152
    %v225 = vpop.f32.mrf.mxu0
    %v226 = vadd.f32 0.0, %v225
    %v227 = vpop.f32.mrf.mxu0
    %228 = vdwg.mxu0
    %231 = vrot.lane.b32.xlu0 %v221, 104
    %v232 = vpop.permute.xlu0 %231
    %233 = vrot.lane.b32.xlu0 %v226, 104
    %v234 = vpop.permute.xlu0 %233
    %235 = vrot.lane.b32.xlu0 %v221, 80
    %v236 = vpop.permute.xlu0 %235
    %237 = vrot.lane.b32.xlu0 %v226, 80
    %v238 = vpop.permute.xlu0 %237
    %239 = vrot.lane.b32.xlu0 %v221, 56
    %v240 = vpop.permute.xlu0 %239
    %241 = vrot.lane.b32.xlu0 %v226, 56
    %v242 = vpop.permute.xlu0 %241
    %v243 = vld [vmem:[%s3] sm:$0xff]
    %v244 = vld [vmem:[%s3 + $0x8] sm:$0xff]
    %v245 = vld [vmem:[%s3 + $0x10] sm:$0xff]
    %v246 = vld [vmem:[%s3 + $0x18] sm:$0xff]
    %247 = vrot.lane.b32.xlu0 %v221, 120
    %v248 = vpop.permute.xlu0 %247
    %vm249 = vcmask 64512
    %v250 = vsel %vm249, %v221, 0
    %v252 = vsel %vm249, %v248, 0
    %254 = vmatprep.subr.mxu0 0.0
    %255 = vmatpush1.xpose.msra.mxu0 0.0
    %256 = vmatprep.subr.mxu0 0.0
    %257 = vmatpush1.xpose.msra.mxu0 0.0
    %258 = vmatprep.subr.mxu0 0.0
    %259 = vmatpush1.xpose.msra.mxu0 0.0
    %260 = vmatprep.subr.mxu0 0.0
    %261 = vmatpush1.xpose.msra.mxu0 0.0
    %262 = vmatprep.subr.mxu0 0.0
    %263 = vmatpush1.xpose.msra.mxu0 0.0
    %264 = vmatprep.subr.mxu0 0.0
    %265 = vmatpush1.xpose.msra.mxu0 0.0
    %266 = vmatprep.subr.mxu0 0.0
    %267 = vmatpush1.xpose.msra.mxu0 0.0
    %268 = vmatprep.subr.mxu0 0.0
    %269 = vmatpush1.xpose.msra.mxu0 0.0
    %270 = vmatprep.subr.mxu0 0.0
    %271 = vmatpush1.xpose.msra.mxu0 0.0
    %272 = vmatprep.subr.mxu0 0.0
    %273 = vmatpush1.xpose.msra.mxu0 0.0
    %274 = vmatprep.subr.mxu0 0.0
    %275 = vmatpush1.xpose.msra.mxu0 0.0
    %276 = vmatprep.subr.mxu0 0.0
    %277 = vmatpush1.xpose.msra.mxu0 0.0
    %278 = vmatprep.subr.mxu0 0.0
    %279 = vmatpush1.xpose.msra.mxu0 0.0
    %280 = vmatprep.subr.mxu0 0.0
    %281 = vmatpush1.xpose.msra.mxu0 0.0
    %282 = vmatprep.subr.mxu0 0.0
    %283 = vmatpush1.xpose.msra.mxu0 0.0
    %284 = vmatprep.subr.mxu0 0.0
    %285 = vmatpush1.xpose.msra.mxu0 %v252
    %286 = vmatprep.subr.mxu0 0.0
    %287 = vmatpush2.xpose.msra.mxu0 0.0
    %288 = vmatprep.subr.mxu0 0.0
    %289 = vmatpush2.xpose.msra.mxu0 0.0
    %290 = vmatprep.subr.mxu0 0.0
    %291 = vmatpush2.xpose.msra.mxu0 0.0
    %292 = vmatprep.subr.mxu0 0.0
    %293 = vmatpush2.xpose.msra.mxu0 0.0
    %294 = vmatprep.subr.mxu0 0.0
    %295 = vmatpush2.xpose.msra.mxu0 0.0
    %296 = vmatprep.subr.mxu0 0.0
    %297 = vmatpush2.xpose.msra.mxu0 0.0
    %298 = vmatprep.subr.mxu0 0.0
    %299 = vmatpush2.xpose.msra.mxu0 0.0
    %300 = vmatprep.subr.mxu0 0.0
    %301 = vmatpush2.xpose.msra.mxu0 0.0
    %302 = vmatprep.subr.mxu0 0.0
    %303 = vmatpush2.xpose.msra.mxu0 0.0
    %304 = vmatprep.subr.mxu0 0.0
    %305 = vmatpush2.xpose.msra.mxu0 0.0
    %306 = vmatprep.subr.mxu0 0.0
    %307 = vmatpush2.xpose.msra.mxu0 0.0
    %308 = vmatprep.subr.mxu0 0.0
    %309 = vmatpush2.xpose.msra.mxu0 0.0
    %310 = vmatprep.subr.mxu0 0.0
    %311 = vmatpush2.xpose.msra.mxu0 0.0
    %312 = vmatprep.subr.mxu0 0.0
    %313 = vmatpush2.xpose.msra.mxu0 0.0
    %314 = vmatprep.subr.mxu0 0.0
    %315 = vmatpush2.xpose.msra.mxu0 0.0
    %316 = vmatprep.subr.mxu0 0.0
    %317 = vmatpush2.xpose.msra.mxu0 0.0
    %318 = vmatprep.mubr.f32.mxu0 0.0
    %319 = vmatmul.mubr.f32.gmra.mxu0 %v250
    %v320 = vpop.f32.mrf.mxu0
    %v321 = vadd.f32 %v142, %v320
    %v322 = vpop.f32.mrf.mxu0
    %323 = vdwg.mxu0
    %324 = vrot.lane.b32.xlu0 %v232, 120
    %v325 = vpop.permute.xlu0 %324
    %v326 = vsel %vm249, %v232, 0
    %v328 = vsel %vm249, %v325, 0
    %330 = vmatprep.subr.mxu0 0.0
    %331 = vmatpush1.xpose.msra.mxu0 0.0
    %332 = vmatprep.subr.mxu0 0.0
    %333 = vmatpush1.xpose.msra.mxu0 0.0
    %334 = vmatprep.subr.mxu0 0.0
    %335 = vmatpush1.xpose.msra.mxu0 0.0
    %336 = vmatprep.subr.mxu0 0.0
    %337 = vmatpush1.xpose.msra.mxu0 0.0
    %338 = vmatprep.subr.mxu0 0.0
    %339 = vmatpush1.xpose.msra.mxu0 0.0
    %340 = vmatprep.subr.mxu0 0.0
    %341 = vmatpush1.xpose.msra.mxu0 0.0
    %342 = vmatprep.subr.mxu0 0.0
    %343 = vmatpush1.xpose.msra.mxu0 0.0
    %344 = vmatprep.subr.mxu0 0.0
    %345 = vmatpush1.xpose.msra.mxu0 0.0
    %346 = vmatprep.subr.mxu0 0.0
    %347 = vmatpush1.xpose.msra.mxu0 0.0
    %348 = vmatprep.subr.mxu0 0.0
    %349 = vmatpush1.xpose.msra.mxu0 0.0
    %350 = vmatprep.subr.mxu0 0.0
    %351 = vmatpush1.xpose.msra.mxu0 0.0
    %352 = vmatprep.subr.mxu0 0.0
    %353 = vmatpush1.xpose.msra.mxu0 0.0
    %354 = vmatprep.subr.mxu0 0.0
    %355 = vmatpush1.xpose.msra.mxu0 0.0
    %356 = vmatprep.subr.mxu0 0.0
    %357 = vmatpush1.xpose.msra.mxu0 0.0
    %358 = vmatprep.subr.mxu0 0.0
    %359 = vmatpush1.xpose.msra.mxu0 0.0
    %360 = vmatprep.subr.mxu0 0.0
    %361 = vmatpush1.xpose.msra.mxu0 %v328
    %362 = vmatprep.subr.mxu0 0.0
    %363 = vmatpush2.xpose.msra.mxu0 0.0
    %364 = vmatprep.subr.mxu0 0.0
    %365 = vmatpush2.xpose.msra.mxu0 0.0
    %366 = vmatprep.subr.mxu0 0.0
    %367 = vmatpush2.xpose.msra.mxu0 0.0
    %368 = vmatprep.subr.mxu0 0.0
    %369 = vmatpush2.xpose.msra.mxu0 0.0
    %370 = vmatprep.subr.mxu0 0.0
    %371 = vmatpush2.xpose.msra.mxu0 0.0
    %372 = vmatprep.subr.mxu0 0.0
    %373 = vmatpush2.xpose.msra.mxu0 0.0
    %374 = vmatprep.subr.mxu0 0.0
    %375 = vmatpush2.xpose.msra.mxu0 0.0
    %376 = vmatprep.subr.mxu0 0.0
    %377 = vmatpush2.xpose.msra.mxu0 0.0
    %378 = vmatprep.subr.mxu0 0.0
    %379 = vmatpush2.xpose.msra.mxu0 0.0
    %380 = vmatprep.subr.mxu0 0.0
    %381 = vmatpush2.xpose.msra.mxu0 0.0
    %382 = vmatprep.subr.mxu0 0.0
    %383 = vmatpush2.xpose.msra.mxu0 0.0
    %384 = vmatprep.subr.mxu0 0.0
    %385 = vmatpush2.xpose.msra.mxu0 0.0
    %386 = vmatprep.subr.mxu0 0.0
    %387 = vmatpush2.xpose.msra.mxu0 0.0
    %388 = vmatprep.subr.mxu0 0.0
    %389 = vmatpush2.xpose.msra.mxu0 0.0
    %390 = vmatprep.subr.mxu0 0.0
    %391 = vmatpush2.xpose.msra.mxu0 0.0
    %392 = vmatprep.subr.mxu0 0.0
    %393 = vmatpush2.xpose.msra.mxu0 0.0
    %394 = vmatprep.mubr.f32.mxu0 0.0
    %395 = vmatmul.mubr.f32.gmra.mxu0 %v326
    %v396 = vpop.f32.mrf.mxu0
    %v397 = vadd.f32 %v142, %v396
    %v398 = vpop.f32.mrf.mxu0
    %399 = vdwg.mxu0
    %400 = vrot.lane.b32.xlu0 %v236, 120
    %v401 = vpop.permute.xlu0 %400
    %v402 = vsel %vm249, %v236, 0
    %v404 = vsel %vm249, %v401, 0
    %406 = vmatprep.subr.mxu0 0.0
    %407 = vmatpush1.xpose.msra.mxu0 0.0
    %408 = vmatprep.subr.mxu0 0.0
    %409 = vmatpush1.xpose.msra.mxu0 0.0
    %410 = vmatprep.subr.mxu0 0.0
    %411 = vmatpush1.xpose.msra.mxu0 0.0
    %412 = vmatprep.subr.mxu0 0.0
    %413 = vmatpush1.xpose.msra.mxu0 0.0
    %414 = vmatprep.subr.mxu0 0.0
    %415 = vmatpush1.xpose.msra.mxu0 0.0
    %416 = vmatprep.subr.mxu0 0.0
    %417 = vmatpush1.xpose.msra.mxu0 0.0
    %418 = vmatprep.subr.mxu0 0.0
    %419 = vmatpush1.xpose.msra.mxu0 0.0
    %420 = vmatprep.subr.mxu0 0.0
    %421 = vmatpush1.xpose.msra.mxu0 0.0
    %422 = vmatprep.subr.mxu0 0.0
    %423 = vmatpush1.xpose.msra.mxu0 0.0
    %424 = vmatprep.subr.mxu0 0.0
    %425 = vmatpush1.xpose.msra.mxu0 0.0
    %426 = vmatprep.subr.mxu0 0.0
    %427 = vmatpush1.xpose.msra.mxu0 0.0
    %428 = vmatprep.subr.mxu0 0.0
    %429 = vmatpush1.xpose.msra.mxu0 0.0
    %430 = vmatprep.subr.mxu0 0.0
    %431 = vmatpush1.xpose.msra.mxu0 0.0
    %432 = vmatprep.subr.mxu0 0.0
    %433 = vmatpush1.xpose.msra.mxu0 0.0
    %434 = vmatprep.subr.mxu0 0.0
    %435 = vmatpush1.xpose.msra.mxu0 0.0
    %436 = vmatprep.subr.mxu0 0.0
    %437 = vmatpush1.xpose.msra.mxu0 %v404
    %438 = vmatprep.subr.mxu0 0.0
    %439 = vmatpush2.xpose.msra.mxu0 0.0
    %440 = vmatprep.subr.mxu0 0.0
    %441 = vmatpush2.xpose.msra.mxu0 0.0
    %442 = vmatprep.subr.mxu0 0.0
    %443 = vmatpush2.xpose.msra.mxu0 0.0
    %444 = vmatprep.subr.mxu0 0.0
    %445 = vmatpush2.xpose.msra.mxu0 0.0
    %446 = vmatprep.subr.mxu0 0.0
    %447 = vmatpush2.xpose.msra.mxu0 0.0
    %448 = vmatprep.subr.mxu0 0.0
    %449 = vmatpush2.xpose.msra.mxu0 0.0
    %450 = vmatprep.subr.mxu0 0.0
    %451 = vmatpush2.xpose.msra.mxu0 0.0
    %452 = vmatprep.subr.mxu0 0.0
    %453 = vmatpush2.xpose.msra.mxu0 0.0
    %454 = vmatprep.subr.mxu0 0.0
    %455 = vmatpush2.xpose.msra.mxu0 0.0
    %456 = vmatprep.subr.mxu0 0.0
    %457 = vmatpush2.xpose.msra.mxu0 0.0
    %458 = vmatprep.subr.mxu0 0.0
    %459 = vmatpush2.xpose.msra.mxu0 0.0
    %460 = vmatprep.subr.mxu0 0.0
    %461 = vmatpush2.xpose.msra.mxu0 0.0
    %462 = vmatprep.subr.mxu0 0.0
    %463 = vmatpush2.xpose.msra.mxu0 0.0
    %464 = vmatprep.subr.mxu0 0.0
    %465 = vmatpush2.xpose.msra.mxu0 0.0
    %466 = vmatprep.subr.mxu0 0.0
    %467 = vmatpush2.xpose.msra.mxu0 0.0
    %468 = vmatprep.subr.mxu0 0.0
    %469 = vmatpush2.xpose.msra.mxu0 0.0
    %470 = vmatprep.mubr.f32.mxu0 0.0
    %471 = vmatmul.mubr.f32.gmra.mxu0 %v402
    %v472 = vpop.f32.mrf.mxu0
    %v473 = vadd.f32 %v142, %v472
    %v474 = vpop.f32.mrf.mxu0
    %475 = vdwg.mxu0
    %476 = vrot.lane.b32.xlu0 %v240, 120
    %v477 = vpop.permute.xlu0 %476
    %v478 = vsel %vm249, %v240, 0
    %v480 = vsel %vm249, %v477, 0
    %482 = vmatprep.subr.mxu0 0.0
    %483 = vmatpush1.xpose.msra.mxu0 0.0
    %484 = vmatprep.subr.mxu0 0.0
    %485 = vmatpush1.xpose.msra.mxu0 0.0
    %486 = vmatprep.subr.mxu0 0.0
    %487 = vmatpush1.xpose.msra.mxu0 0.0
    %488 = vmatprep.subr.mxu0 0.0
    %489 = vmatpush1.xpose.msra.mxu0 0.0
    %490 = vmatprep.subr.mxu0 0.0
    %491 = vmatpush1.xpose.msra.mxu0 0.0
    %492 = vmatprep.subr.mxu0 0.0
    %493 = vmatpush1.xpose.msra.mxu0 0.0
    %494 = vmatprep.subr.mxu0 0.0
    %495 = vmatpush1.xpose.msra.mxu0 0.0
    %496 = vmatprep.subr.mxu0 0.0
    %497 = vmatpush1.xpose.msra.mxu0 0.0
    %498 = vmatprep.subr.mxu0 0.0
    %499 = vmatpush1.xpose.msra.mxu0 0.0
    %500 = vmatprep.subr.mxu0 0.0
    %501 = vmatpush1.xpose.msra.mxu0 0.0
    %502 = vmatprep.subr.mxu0 0.0
    %503 = vmatpush1.xpose.msra.mxu0 0.0
    %504 = vmatprep.subr.mxu0 0.0
    %505 = vmatpush1.xpose.msra.mxu0 0.0
    %506 = vmatprep.subr.mxu0 0.0
    %507 = vmatpush1.xpose.msra.mxu0 0.0
    %508 = vmatprep.subr.mxu0 0.0
    %509 = vmatpush1.xpose.msra.mxu0 0.0
    %510 = vmatprep.subr.mxu0 0.0
    %511 = vmatpush1.xpose.msra.mxu0 0.0
    %512 = vmatprep.subr.mxu0 0.0
    %513 = vmatpush1.xpose.msra.mxu0 %v480
    %514 = vmatprep.subr.mxu0 0.0
    %515 = vmatpush2.xpose.msra.mxu0 0.0
    %516 = vmatprep.subr.mxu0 0.0
    %517 = vmatpush2.xpose.msra.mxu0 0.0
    %518 = vmatprep.subr.mxu0 0.0
    %519 = vmatpush2.xpose.msra.mxu0 0.0
    %520 = vmatprep.subr.mxu0 0.0
    %521 = vmatpush2.xpose.msra.mxu0 0.0
    %522 = vmatprep.subr.mxu0 0.0
    %523 = vmatpush2.xpose.msra.mxu0 0.0
    %524 = vmatprep.subr.mxu0 0.0
    %525 = vmatpush2.xpose.msra.mxu0 0.0
    %526 = vmatprep.subr.mxu0 0.0
    %527 = vmatpush2.xpose.msra.mxu0 0.0
    %528 = vmatprep.subr.mxu0 0.0
    %529 = vmatpush2.xpose.msra.mxu0 0.0
    %530 = vmatprep.subr.mxu0 0.0
    %531 = vmatpush2.xpose.msra.mxu0 0.0
    %532 = vmatprep.subr.mxu0 0.0
    %533 = vmatpush2.xpose.msra.mxu0 0.0
    %534 = vmatprep.subr.mxu0 0.0
    %535 = vmatpush2.xpose.msra.mxu0 0.0
    %536 = vmatprep.subr.mxu0 0.0
    %537 = vmatpush2.xpose.msra.mxu0 0.0
    %538 = vmatprep.subr.mxu0 0.0
    %539 = vmatpush2.xpose.msra.mxu0 0.0
    %540 = vmatprep.subr.mxu0 0.0
    %541 = vmatpush2.xpose.msra.mxu0 0.0
    %542 = vmatprep.subr.mxu0 0.0
    %543 = vmatpush2.xpose.msra.mxu0 0.0
    %544 = vmatprep.subr.mxu0 0.0
    %545 = vmatpush2.xpose.msra.mxu0 0.0
    %546 = vmatprep.mubr.f32.mxu0 0.0
    %547 = vmatmul.mubr.f32.gmra.mxu0 %v478
    %v548 = vpop.f32.mrf.mxu0
    %v549 = vadd.f32 %v142, %v548
    %v550 = vpop.f32.mrf.mxu0
    %551 = vdwg.mxu0
    %552 = vrot.lane.b32.xlu0 %v226, 120
    %v553 = vpop.permute.xlu0 %552
    %v554 = vsel %vm249, %v226, 0
    %v556 = vsel %vm249, %v553, 0
    %558 = vmatprep.subr.mxu0 0.0
    %559 = vmatpush1.xpose.msra.mxu0 0.0
    %560 = vmatprep.subr.mxu0 0.0
    %561 = vmatpush1.xpose.msra.mxu0 0.0
    %562 = vmatprep.subr.mxu0 0.0
    %563 = vmatpush1.xpose.msra.mxu0 0.0
    %564 = vmatprep.subr.mxu0 0.0
    %565 = vmatpush1.xpose.msra.mxu0 0.0
    %566 = vmatprep.subr.mxu0 0.0
    %567 = vmatpush1.xpose.msra.mxu0 0.0
    %568 = vmatprep.subr.mxu0 0.0
    %569 = vmatpush1.xpose.msra.mxu0 0.0
    %570 = vmatprep.subr.mxu0 0.0
    %571 = vmatpush1.xpose.msra.mxu0 0.0
    %572 = vmatprep.subr.mxu0 0.0
    %573 = vmatpush1.xpose.msra.mxu0 0.0
    %574 = vmatprep.subr.mxu0 0.0
    %575 = vmatpush1.xpose.msra.mxu0 0.0
    %576 = vmatprep.subr.mxu0 0.0
    %577 = vmatpush1.xpose.msra.mxu0 0.0
    %578 = vmatprep.subr.mxu0 0.0
    %579 = vmatpush1.xpose.msra.mxu0 0.0
    %580 = vmatprep.subr.mxu0 0.0
    %581 = vmatpush1.xpose.msra.mxu0 0.0
    %582 = vmatprep.subr.mxu0 0.0
    %583 = vmatpush1.xpose.msra.mxu0 0.0
    %584 = vmatprep.subr.mxu0 0.0
    %585 = vmatpush1.xpose.msra.mxu0 0.0
    %586 = vmatprep.subr.mxu0 0.0
    %587 = vmatpush1.xpose.msra.mxu0 0.0
    %588 = vmatprep.subr.mxu0 0.0
    %589 = vmatpush1.xpose.msra.mxu0 %v556
    %590 = vmatprep.subr.mxu0 0.0
    %591 = vmatpush2.xpose.msra.mxu0 0.0
    %592 = vmatprep.subr.mxu0 0.0
    %593 = vmatpush2.xpose.msra.mxu0 0.0
    %594 = vmatprep.subr.mxu0 0.0
    %595 = vmatpush2.xpose.msra.mxu0 0.0
    %596 = vmatprep.subr.mxu0 0.0
    %597 = vmatpush2.xpose.msra.mxu0 0.0
    %598 = vmatprep.subr.mxu0 0.0
    %599 = vmatpush2.xpose.msra.mxu0 0.0
    %600 = vmatprep.subr.mxu0 0.0
    %601 = vmatpush2.xpose.msra.mxu0 0.0
    %602 = vmatprep.subr.mxu0 0.0
    %603 = vmatpush2.xpose.msra.mxu0 0.0
    %604 = vmatprep.subr.mxu0 0.0
    %605 = vmatpush2.xpose.msra.mxu0 0.0
    %606 = vmatprep.subr.mxu0 0.0
    %607 = vmatpush2.xpose.msra.mxu0 0.0
    %608 = vmatprep.subr.mxu0 0.0
    %609 = vmatpush2.xpose.msra.mxu0 0.0
    %610 = vmatprep.subr.mxu0 0.0
    %611 = vmatpush2.xpose.msra.mxu0 0.0
    %612 = vmatprep.subr.mxu0 0.0
    %613 = vmatpush2.xpose.msra.mxu0 0.0
    %614 = vmatprep.subr.mxu0 0.0
    %615 = vmatpush2.xpose.msra.mxu0 0.0
    %616 = vmatprep.subr.mxu0 0.0
    %617 = vmatpush2.xpose.msra.mxu0 0.0
    %618 = vmatprep.subr.mxu0 0.0
    %619 = vmatpush2.xpose.msra.mxu0 0.0
    %620 = vmatprep.subr.mxu0 0.0
    %621 = vmatpush2.xpose.msra.mxu0 0.0
    %622 = vmatprep.mubr.f32.mxu0 0.0
    %623 = vmatmul.mubr.f32.gmra.mxu0 %v554
    %v624 = vpop.f32.mrf.mxu0
    %v625 = vadd.f32 %v142, %v624
    %v626 = vpop.f32.mrf.mxu0
    %627 = vdwg.mxu0
    %628 = vrot.lane.b32.xlu0 %v234, 120
    %v629 = vpop.permute.xlu0 %628
    %v630 = vsel %vm249, %v234, 0
    %v632 = vsel %vm249, %v629, 0
    %634 = vmatprep.subr.mxu0 0.0
    %635 = vmatpush1.xpose.msra.mxu0 0.0
    %636 = vmatprep.subr.mxu0 0.0
    %637 = vmatpush1.xpose.msra.mxu0 0.0
    %638 = vmatprep.subr.mxu0 0.0
    %639 = vmatpush1.xpose.msra.mxu0 0.0
    %640 = vmatprep.subr.mxu0 0.0
    %641 = vmatpush1.xpose.msra.mxu0 0.0
    %642 = vmatprep.subr.mxu0 0.0
    %643 = vmatpush1.xpose.msra.mxu0 0.0
    %644 = vmatprep.subr.mxu0 0.0
    %645 = vmatpush1.xpose.msra.mxu0 0.0
    %646 = vmatprep.subr.mxu0 0.0
    %647 = vmatpush1.xpose.msra.mxu0 0.0
    %648 = vmatprep.subr.mxu0 0.0
    %649 = vmatpush1.xpose.msra.mxu0 0.0
    %650 = vmatprep.subr.mxu0 0.0
    %651 = vmatpush1.xpose.msra.mxu0 0.0
    %652 = vmatprep.subr.mxu0 0.0
    %653 = vmatpush1.xpose.msra.mxu0 0.0
    %654 = vmatprep.subr.mxu0 0.0
    %655 = vmatpush1.xpose.msra.mxu0 0.0
    %656 = vmatprep.subr.mxu0 0.0
    %657 = vmatpush1.xpose.msra.mxu0 0.0
    %658 = vmatprep.subr.mxu0 0.0
    %659 = vmatpush1.xpose.msra.mxu0 0.0
    %660 = vmatprep.subr.mxu0 0.0
    %661 = vmatpush1.xpose.msra.mxu0 0.0
    %662 = vmatprep.subr.mxu0 0.0
    %663 = vmatpush1.xpose.msra.mxu0 0.0
    %664 = vmatprep.subr.mxu0 0.0
    %665 = vmatpush1.xpose.msra.mxu0 %v632
    %666 = vmatprep.subr.mxu0 0.0
    %667 = vmatpush2.xpose.msra.mxu0 0.0
    %668 = vmatprep.subr.mxu0 0.0
    %669 = vmatpush2.xpose.msra.mxu0 0.0
    %670 = vmatprep.subr.mxu0 0.0
    %671 = vmatpush2.xpose.msra.mxu0 0.0
    %672 = vmatprep.subr.mxu0 0.0
    %673 = vmatpush2.xpose.msra.mxu0 0.0
    %674 = vmatprep.subr.mxu0 0.0
    %675 = vmatpush2.xpose.msra.mxu0 0.0
    %676 = vmatprep.subr.mxu0 0.0
    %677 = vmatpush2.xpose.msra.mxu0 0.0
    %678 = vmatprep.subr.mxu0 0.0
    %679 = vmatpush2.xpose.msra.mxu0 0.0
    %680 = vmatprep.subr.mxu0 0.0
    %681 = vmatpush2.xpose.msra.mxu0 0.0
    %682 = vmatprep.subr.mxu0 0.0
    %683 = vmatpush2.xpose.msra.mxu0 0.0
    %684 = vmatprep.subr.mxu0 0.0
    %685 = vmatpush2.xpose.msra.mxu0 0.0
    %686 = vmatprep.subr.mxu0 0.0
    %687 = vmatpush2.xpose.msra.mxu0 0.0
    %688 = vmatprep.subr.mxu0 0.0
    %689 = vmatpush2.xpose.msra.mxu0 0.0
    %690 = vmatprep.subr.mxu0 0.0
    %691 = vmatpush2.xpose.msra.mxu0 0.0
    %692 = vmatprep.subr.mxu0 0.0
    %693 = vmatpush2.xpose.msra.mxu0 0.0
    %694 = vmatprep.subr.mxu0 0.0
    %695 = vmatpush2.xpose.msra.mxu0 0.0
    %696 = vmatprep.subr.mxu0 0.0
    %697 = vmatpush2.xpose.msra.mxu0 0.0
    %698 = vmatprep.mubr.f32.mxu0 0.0
    %699 = vmatmul.mubr.f32.gmra.mxu0 %v630
    %v700 = vpop.f32.mrf.mxu0
    %v701 = vadd.f32 %v142, %v700
    %v702 = vpop.f32.mrf.mxu0
    %703 = vdwg.mxu0
    %704 = vrot.lane.b32.xlu0 %v238, 120
    %v705 = vpop.permute.xlu0 %704
    %v706 = vsel %vm249, %v238, 0
    %v708 = vsel %vm249, %v705, 0
    %710 = vmatprep.subr.mxu0 0.0
    %711 = vmatpush1.xpose.msra.mxu0 0.0
    %712 = vmatprep.subr.mxu0 0.0
    %713 = vmatpush1.xpose.msra.mxu0 0.0
    %714 = vmatprep.subr.mxu0 0.0
    %715 = vmatpush1.xpose.msra.mxu0 0.0
    %716 = vmatprep.subr.mxu0 0.0
    %717 = vmatpush1.xpose.msra.mxu0 0.0
    %718 = vmatprep.subr.mxu0 0.0
    %719 = vmatpush1.xpose.msra.mxu0 0.0
    %720 = vmatprep.subr.mxu0 0.0
    %721 = vmatpush1.xpose.msra.mxu0 0.0
    %722 = vmatprep.subr.mxu0 0.0
    %723 = vmatpush1.xpose.msra.mxu0 0.0
    %724 = vmatprep.subr.mxu0 0.0
    %725 = vmatpush1.xpose.msra.mxu0 0.0
    %726 = vmatprep.subr.mxu0 0.0
    %727 = vmatpush1.xpose.msra.mxu0 0.0
    %728 = vmatprep.subr.mxu0 0.0
    %729 = vmatpush1.xpose.msra.mxu0 0.0
    %730 = vmatprep.subr.mxu0 0.0
    %731 = vmatpush1.xpose.msra.mxu0 0.0
    %732 = vmatprep.subr.mxu0 0.0
    %733 = vmatpush1.xpose.msra.mxu0 0.0
    %734 = vmatprep.subr.mxu0 0.0
    %735 = vmatpush1.xpose.msra.mxu0 0.0
    %736 = vmatprep.subr.mxu0 0.0
    %737 = vmatpush1.xpose.msra.mxu0 0.0
    %738 = vmatprep.subr.mxu0 0.0
    %739 = vmatpush1.xpose.msra.mxu0 0.0
    %740 = vmatprep.subr.mxu0 0.0
    %741 = vmatpush1.xpose.msra.mxu0 %v708
    %742 = vmatprep.subr.mxu0 0.0
    %743 = vmatpush2.xpose.msra.mxu0 0.0
    %744 = vmatprep.subr.mxu0 0.0
    %745 = vmatpush2.xpose.msra.mxu0 0.0
    %746 = vmatprep.subr.mxu0 0.0
    %747 = vmatpush2.xpose.msra.mxu0 0.0
    %748 = vmatprep.subr.mxu0 0.0
    %749 = vmatpush2.xpose.msra.mxu0 0.0
    %750 = vmatprep.subr.mxu0 0.0
    %751 = vmatpush2.xpose.msra.mxu0 0.0
    %752 = vmatprep.subr.mxu0 0.0
    %753 = vmatpush2.xpose.msra.mxu0 0.0
    %754 = vmatprep.subr.mxu0 0.0
    %755 = vmatpush2.xpose.msra.mxu0 0.0
    %756 = vmatprep.subr.mxu0 0.0
    %757 = vmatpush2.xpose.msra.mxu0 0.0
    %758 = vmatprep.subr.mxu0 0.0
    %759 = vmatpush2.xpose.msra.mxu0 0.0
    %760 = vmatprep.subr.mxu0 0.0
    %761 = vmatpush2.xpose.msra.mxu0 0.0
    %762 = vmatprep.subr.mxu0 0.0
    %763 = vmatpush2.xpose.msra.mxu0 0.0
    %764 = vmatprep.subr.mxu0 0.0
    %765 = vmatpush2.xpose.msra.mxu0 0.0
    %766 = vmatprep.subr.mxu0 0.0
    %767 = vmatpush2.xpose.msra.mxu0 0.0
    %768 = vmatprep.subr.mxu0 0.0
    %769 = vmatpush2.xpose.msra.mxu0 0.0
    %770 = vmatprep.subr.mxu0 0.0
    %771 = vmatpush2.xpose.msra.mxu0 0.0
    %772 = vmatprep.subr.mxu0 0.0
    %773 = vmatpush2.xpose.msra.mxu0 0.0
    %774 = vmatprep.mubr.f32.mxu0 0.0
    %775 = vmatmul.mubr.f32.gmra.mxu0 %v706
    %v776 = vpop.f32.mrf.mxu0
    %v777 = vadd.f32 %v142, %v776
    %v778 = vpop.f32.mrf.mxu0
    %779 = vdwg.mxu0
    %780 = vrot.lane.b32.xlu0 %v242, 120
    %v781 = vpop.permute.xlu0 %780
    %v782 = vsel %vm249, %v242, 0
    %v784 = vsel %vm249, %v781, 0
    %786 = vmatprep.subr.mxu0 0.0
    %787 = vmatpush1.xpose.msra.mxu0 0.0
    %788 = vmatprep.subr.mxu0 0.0
    %789 = vmatpush1.xpose.msra.mxu0 0.0
    %790 = vmatprep.subr.mxu0 0.0
    %791 = vmatpush1.xpose.msra.mxu0 0.0
    %792 = vmatprep.subr.mxu0 0.0
    %793 = vmatpush1.xpose.msra.mxu0 0.0
    %794 = vmatprep.subr.mxu0 0.0
    %795 = vmatpush1.xpose.msra.mxu0 0.0
    %796 = vmatprep.subr.mxu0 0.0
    %797 = vmatpush1.xpose.msra.mxu0 0.0
    %798 = vmatprep.subr.mxu0 0.0
    %799 = vmatpush1.xpose.msra.mxu0 0.0
    %800 = vmatprep.subr.mxu0 0.0
    %801 = vmatpush1.xpose.msra.mxu0 0.0
    %802 = vmatprep.subr.mxu0 0.0
    %803 = vmatpush1.xpose.msra.mxu0 0.0
    %804 = vmatprep.subr.mxu0 0.0
    %805 = vmatpush1.xpose.msra.mxu0 0.0
    %806 = vmatprep.subr.mxu0 0.0
    %807 = vmatpush1.xpose.msra.mxu0 0.0
    %808 = vmatprep.subr.mxu0 0.0
    %809 = vmatpush1.xpose.msra.mxu0 0.0
    %810 = vmatprep.subr.mxu0 0.0
    %811 = vmatpush1.xpose.msra.mxu0 0.0
    %812 = vmatprep.subr.mxu0 0.0
    %813 = vmatpush1.xpose.msra.mxu0 0.0
    %814 = vmatprep.subr.mxu0 0.0
    %815 = vmatpush1.xpose.msra.mxu0 0.0
    %816 = vmatprep.subr.mxu0 0.0
    %817 = vmatpush1.xpose.msra.mxu0 %v784
    %818 = vmatprep.subr.mxu0 0.0
    %819 = vmatpush2.xpose.msra.mxu0 0.0
    %820 = vmatprep.subr.mxu0 0.0
    %821 = vmatpush2.xpose.msra.mxu0 0.0
    %822 = vmatprep.subr.mxu0 0.0
    %823 = vmatpush2.xpose.msra.mxu0 0.0
    %824 = vmatprep.subr.mxu0 0.0
    %825 = vmatpush2.xpose.msra.mxu0 0.0
    %826 = vmatprep.subr.mxu0 0.0
    %827 = vmatpush2.xpose.msra.mxu0 0.0
    %828 = vmatprep.subr.mxu0 0.0
    %829 = vmatpush2.xpose.msra.mxu0 0.0
    %830 = vmatprep.subr.mxu0 0.0
    %831 = vmatpush2.xpose.msra.mxu0 0.0
    %832 = vmatprep.subr.mxu0 0.0
    %833 = vmatpush2.xpose.msra.mxu0 0.0
    %834 = vmatprep.subr.mxu0 0.0
    %835 = vmatpush2.xpose.msra.mxu0 0.0
    %836 = vmatprep.subr.mxu0 0.0
    %837 = vmatpush2.xpose.msra.mxu0 0.0
    %838 = vmatprep.subr.mxu0 0.0
    %839 = vmatpush2.xpose.msra.mxu0 0.0
    %840 = vmatprep.subr.mxu0 0.0
    %841 = vmatpush2.xpose.msra.mxu0 0.0
    %842 = vmatprep.subr.mxu0 0.0
    %843 = vmatpush2.xpose.msra.mxu0 0.0
    %844 = vmatprep.subr.mxu0 0.0
    %845 = vmatpush2.xpose.msra.mxu0 0.0
    %846 = vmatprep.subr.mxu0 0.0
    %847 = vmatpush2.xpose.msra.mxu0 0.0
    %848 = vmatprep.subr.mxu0 0.0
    %849 = vmatpush2.xpose.msra.mxu0 0.0
    %850 = vmatprep.mubr.f32.mxu0 0.0
    %851 = vmatmul.mubr.f32.gmra.mxu0 %v782
    %v852 = vpop.f32.mrf.mxu0
    %v853 = vadd.f32 %v142, %v852
    %v854 = vpop.f32.mrf.mxu0
    %855 = vdwg.mxu0
    %v856 = vsel %vm249, %v321, -inf
    %857 = vmax.xlane.f32.xlu0 %v856
    %v858 = vpop.xlane.xlu0 %857
    %v859 = vsel %vm249, %v397, -inf
    %860 = vmax.xlane.f32.xlu0 %v859
    %v861 = vpop.xlane.xlu0 %860
    %v862 = vsel %vm249, %v473, -inf
    %863 = vmax.xlane.f32.xlu0 %v862
    %v864 = vpop.xlane.xlu0 %863
    %v865 = vsel %vm249, %v549, -inf
    %866 = vmax.xlane.f32.xlu0 %v865
    %v867 = vpop.xlane.xlu0 %866
    %v868 = vsel %vm249, %v625, -inf
    %869 = vmax.xlane.f32.xlu0 %v868
    %v870 = vpop.xlane.xlu0 %869
    %v871 = vsel %vm249, %v701, -inf
    %872 = vmax.xlane.f32.xlu0 %v871
    %v873 = vpop.xlane.xlu0 %872
    %v874 = vsel %vm249, %v777, -inf
    %875 = vmax.xlane.f32.xlu0 %v874
    %v876 = vpop.xlane.xlu0 %875
    %v877 = vsel %vm249, %v853, -inf
    %878 = vmax.xlane.f32.xlu0 %v877
    %v879 = vpop.xlane.xlu0 %878
    %v880 = vsub.f32 %v321, %v858
    %v881 = vsub.f32 %v397, %v861
    %v882 = vsub.f32 %v473, %v864
    %v883 = vsub.f32 %v549, %v867
    %v884 = vsub.f32 %v625, %v870
    %v885 = vsub.f32 %v701, %v873
    %v886 = vsub.f32 %v777, %v876
    %v887 = vsub.f32 %v853, %v879
    %v888 = vmul.f32 %v880, 1.442695
    %v889 = vpow.pop %v888
    %v890 = vmul.f32 %v881, 1.442695
    %v891 = vpow.pop %v890
    %v892 = vmul.f32 %v882, 1.442695
    %v893 = vpow.pop %v892
    %v894 = vmul.f32 %v883, 1.442695
    %v895 = vpow.pop %v894
    %v896 = vmul.f32 %v884, 1.442695
    %v897 = vpow.pop %v896
    %v898 = vmul.f32 %v885, 1.442695
    %v899 = vpow.pop %v898
    %v900 = vmul.f32 %v886, 1.442695
    %v901 = vpow.pop %v900
    %v902 = vmul.f32 %v887, 1.442695
    %v903 = vpow.pop %v902
    %v904 = vsel %vm249, %v889, 0.0
    %905 = vadd.xlane.f32.xlu0 %v904
    %v906 = vpop.xlane.xlu0 %905
    %v907 = vsel %vm249, %v891, 0.0
    %908 = vadd.xlane.f32.xlu0 %v907
    %v909 = vpop.xlane.xlu0 %908
    %v910 = vsel %vm249, %v893, 0.0
    %911 = vadd.xlane.f32.xlu0 %v910
    %v912 = vpop.xlane.xlu0 %911
    %v913 = vsel %vm249, %v895, 0.0
    %914 = vadd.xlane.f32.xlu0 %v913
    %v915 = vpop.xlane.xlu0 %914
    %v916 = vsel %vm249, %v897, 0.0
    %917 = vadd.xlane.f32.xlu0 %v916
    %v918 = vpop.xlane.xlu0 %917
    %v919 = vsel %vm249, %v899, 0.0
    %920 = vadd.xlane.f32.xlu0 %v919
    %v921 = vpop.xlane.xlu0 %920
    %v922 = vsel %vm249, %v901, 0.0
    %923 = vadd.xlane.f32.xlu0 %v922
    %v924 = vpop.xlane.xlu0 %923
    %v925 = vsel %vm249, %v903, 0.0
    %926 = vadd.xlane.f32.xlu0 %v925
    %v927 = vpop.xlane.xlu0 %926
    %v928 = vrcp.pop %v906
    %v929 = vrcp.pop %v909
    %v930 = vrcp.pop %v912
    %v931 = vrcp.pop %v915
    %v932 = vrcp.pop %v918
    %v933 = vrcp.pop %v921
    %v934 = vrcp.pop %v924
    %v935 = vrcp.pop %v927
    %v936 = vmul.f32 %v889, %v928
    %v937 = vmul.f32 %v891, %v929
    %v938 = vmul.f32 %v893, %v930
    %v939 = vmul.f32 %v895, %v931
    %v940 = vmul.f32 %v897, %v932
    %v941 = vmul.f32 %v899, %v933
    %v942 = vmul.f32 %v901, %v934
    %v943 = vmul.f32 %v903, %v935
    %944 = vrot.lane.b32.xlu0 %v221, 112
    %v945 = vpop.permute.xlu0 %944
    %v948 = vsel %vm249, %v936, 0
    %950 = vmatprep.subr.mxu0 0.0
    %951 = vmatpush1.msra.mxu0 0.0
    %952 = vmatprep.subr.mxu0 0.0
    %953 = vmatpush1.msra.mxu0 0.0
    %954 = vmatprep.subr.mxu0 0.0
    %955 = vmatpush1.msra.mxu0 0.0
    %956 = vmatprep.subr.mxu0 0.0
    %957 = vmatpush1.msra.mxu0 0.0
    %958 = vmatprep.subr.mxu0 0.0
    %959 = vmatpush1.msra.mxu0 0.0
    %960 = vmatprep.subr.mxu0 0.0
    %961 = vmatpush1.msra.mxu0 0.0
    %962 = vmatprep.subr.mxu0 0.0
    %963 = vmatpush1.msra.mxu0 0.0
    %964 = vmatprep.subr.mxu0 0.0
    %965 = vmatpush1.msra.mxu0 0.0
    %966 = vmatprep.subr.mxu0 0.0
    %967 = vmatpush1.msra.mxu0 0.0
    %968 = vmatprep.subr.mxu0 0.0
    %969 = vmatpush1.msra.mxu0 0.0
    %970 = vmatprep.subr.mxu0 0.0
    %971 = vmatpush1.msra.mxu0 0.0
    %972 = vmatprep.subr.mxu0 0.0
    %973 = vmatpush1.msra.mxu0 0.0
    %974 = vmatprep.subr.mxu0 0.0
    %975 = vmatpush1.msra.mxu0 0.0
    %976 = vmatprep.subr.mxu0 0.0
    %977 = vmatpush1.msra.mxu0 0.0
    %978 = vmatprep.subr.mxu0 0.0
    %979 = vmatpush1.msra.mxu0 0.0
    %980 = vmatprep.subr.mxu0 0.0
    %981 = vmatpush1.msra.mxu0 %v945
    %982 = vmatprep.subr.mxu0 0.0
    %983 = vmatpush2.msra.mxu0 0.0
    %984 = vmatprep.subr.mxu0 0.0
    %985 = vmatpush2.msra.mxu0 0.0
    %986 = vmatprep.subr.mxu0 0.0
    %987 = vmatpush2.msra.mxu0 0.0
    %988 = vmatprep.subr.mxu0 0.0
    %989 = vmatpush2.msra.mxu0 0.0
    %990 = vmatprep.subr.mxu0 0.0
    %991 = vmatpush2.msra.mxu0 0.0
    %992 = vmatprep.subr.mxu0 0.0
    %993 = vmatpush2.msra.mxu0 0.0
    %994 = vmatprep.subr.mxu0 0.0
    %995 = vmatpush2.msra.mxu0 0.0
    %996 = vmatprep.subr.mxu0 0.0
    %997 = vmatpush2.msra.mxu0 0.0
    %998 = vmatprep.subr.mxu0 0.0
    %999 = vmatpush2.msra.mxu0 0.0
    %1000 = vmatprep.subr.mxu0 0.0
    %1001 = vmatpush2.msra.mxu0 0.0
    %1002 = vmatprep.subr.mxu0 0.0
    %1003 = vmatpush2.msra.mxu0 0.0
    %1004 = vmatprep.subr.mxu0 0.0
    %1005 = vmatpush2.msra.mxu0 0.0
    %1006 = vmatprep.subr.mxu0 0.0
    %1007 = vmatpush2.msra.mxu0 0.0
    %1008 = vmatprep.subr.mxu0 0.0
    %1009 = vmatpush2.msra.mxu0 0.0
    %1010 = vmatprep.subr.mxu0 0.0
    %1011 = vmatpush2.msra.mxu0 0.0
    %1012 = vmatprep.subr.mxu0 0.0
    %1013 = vmatpush2.msra.mxu0 0.0
    %1014 = vmatprep.mubr.f32.mxu0 0.0
    %1015 = vmatmul.mubr.f32.gmra.mxu0 %v948
    %v1016 = vpop.f32.mrf.mxu0
    %v1017 = vadd.f32 0.0, %v1016
    %v1018 = vpop.f32.mrf.mxu0
    %1019 = vdwg.mxu0
    %1020 = vrot.lane.b32.xlu0 %v232, 112
    %v1021 = vpop.permute.xlu0 %1020
    %v1024 = vsel %vm249, %v937, 0
    %1026 = vmatprep.subr.mxu0 0.0
    %1027 = vmatpush1.msra.mxu0 0.0
    %1028 = vmatprep.subr.mxu0 0.0
    %1029 = vmatpush1.msra.mxu0 0.0
    %1030 = vmatprep.subr.mxu0 0.0
    %1031 = vmatpush1.msra.mxu0 0.0
    %1032 = vmatprep.subr.mxu0 0.0
    %1033 = vmatpush1.msra.mxu0 0.0
    %1034 = vmatprep.subr.mxu0 0.0
    %1035 = vmatpush1.msra.mxu0 0.0
    %1036 = vmatprep.subr.mxu0 0.0
    %1037 = vmatpush1.msra.mxu0 0.0
    %1038 = vmatprep.subr.mxu0 0.0
    %1039 = vmatpush1.msra.mxu0 0.0
    %1040 = vmatprep.subr.mxu0 0.0
    %1041 = vmatpush1.msra.mxu0 0.0
    %1042 = vmatprep.subr.mxu0 0.0
    %1043 = vmatpush1.msra.mxu0 0.0
    %1044 = vmatprep.subr.mxu0 0.0
    %1045 = vmatpush1.msra.mxu0 0.0
    %1046 = vmatprep.subr.mxu0 0.0
    %1047 = vmatpush1.msra.mxu0 0.0
    %1048 = vmatprep.subr.mxu0 0.0
    %1049 = vmatpush1.msra.mxu0 0.0
    %1050 = vmatprep.subr.mxu0 0.0
    %1051 = vmatpush1.msra.mxu0 0.0
    %1052 = vmatprep.subr.mxu0 0.0
    %1053 = vmatpush1.msra.mxu0 0.0
    %1054 = vmatprep.subr.mxu0 0.0
    %1055 = vmatpush1.msra.mxu0 0.0
    %1056 = vmatprep.subr.mxu0 0.0
    %1057 = vmatpush1.msra.mxu0 %v1021
    %1058 = vmatprep.subr.mxu0 0.0
    %1059 = vmatpush2.msra.mxu0 0.0
    %1060 = vmatprep.subr.mxu0 0.0
    %1061 = vmatpush2.msra.mxu0 0.0
    %1062 = vmatprep.subr.mxu0 0.0
    %1063 = vmatpush2.msra.mxu0 0.0
    %1064 = vmatprep.subr.mxu0 0.0
    %1065 = vmatpush2.msra.mxu0 0.0
    %1066 = vmatprep.subr.mxu0 0.0
    %1067 = vmatpush2.msra.mxu0 0.0
    %1068 = vmatprep.subr.mxu0 0.0
    %1069 = vmatpush2.msra.mxu0 0.0
    %1070 = vmatprep.subr.mxu0 0.0
    %1071 = vmatpush2.msra.mxu0 0.0
    %1072 = vmatprep.subr.mxu0 0.0
    %1073 = vmatpush2.msra.mxu0 0.0
    %1074 = vmatprep.subr.mxu0 0.0
    %1075 = vmatpush2.msra.mxu0 0.0
    %1076 = vmatprep.subr.mxu0 0.0
    %1077 = vmatpush2.msra.mxu0 0.0
    %1078 = vmatprep.subr.mxu0 0.0
    %1079 = vmatpush2.msra.mxu0 0.0
    %1080 = vmatprep.subr.mxu0 0.0
    %1081 = vmatpush2.msra.mxu0 0.0
    %1082 = vmatprep.subr.mxu0 0.0
    %1083 = vmatpush2.msra.mxu0 0.0
    %1084 = vmatprep.subr.mxu0 0.0
    %1085 = vmatpush2.msra.mxu0 0.0
    %1086 = vmatprep.subr.mxu0 0.0
    %1087 = vmatpush2.msra.mxu0 0.0
    %1088 = vmatprep.subr.mxu0 0.0
    %1089 = vmatpush2.msra.mxu0 0.0
    %1090 = vmatprep.mubr.f32.mxu0 0.0
    %1091 = vmatmul.mubr.f32.gmra.mxu0 %v1024
    %v1092 = vpop.f32.mrf.mxu0
    %v1093 = vadd.f32 0.0, %v1092
    %v1094 = vpop.f32.mrf.mxu0
    %1095 = vdwg.mxu0
    %1096 = vrot.lane.b32.xlu0 %v236, 112
    %v1097 = vpop.permute.xlu0 %1096
    %v1100 = vsel %vm249, %v938, 0
    %1102 = vmatprep.subr.mxu0 0.0
    %1103 = vmatpush1.msra.mxu0 0.0
    %1104 = vmatprep.subr.mxu0 0.0
    %1105 = vmatpush1.msra.mxu0 0.0
    %1106 = vmatprep.subr.mxu0 0.0
    %1107 = vmatpush1.msra.mxu0 0.0
    %1108 = vmatprep.subr.mxu0 0.0
    %1109 = vmatpush1.msra.mxu0 0.0
    %1110 = vmatprep.subr.mxu0 0.0
    %1111 = vmatpush1.msra.mxu0 0.0
    %1112 = vmatprep.subr.mxu0 0.0
    %1113 = vmatpush1.msra.mxu0 0.0
    %1114 = vmatprep.subr.mxu0 0.0
    %1115 = vmatpush1.msra.mxu0 0.0
    %1116 = vmatprep.subr.mxu0 0.0
    %1117 = vmatpush1.msra.mxu0 0.0
    %1118 = vmatprep.subr.mxu0 0.0
    %1119 = vmatpush1.msra.mxu0 0.0
    %1120 = vmatprep.subr.mxu0 0.0
    %1121 = vmatpush1.msra.mxu0 0.0
    %1122 = vmatprep.subr.mxu0 0.0
    %1123 = vmatpush1.msra.mxu0 0.0
    %1124 = vmatprep.subr.mxu0 0.0
    %1125 = vmatpush1.msra.mxu0 0.0
    %1126 = vmatprep.subr.mxu0 0.0
    %1127 = vmatpush1.msra.mxu0 0.0
    %1128 = vmatprep.subr.mxu0 0.0
    %1129 = vmatpush1.msra.mxu0 0.0
    %1130 = vmatprep.subr.mxu0 0.0
    %1131 = vmatpush1.msra.mxu0 0.0
    %1132 = vmatprep.subr.mxu0 0.0
    %1133 = vmatpush1.msra.mxu0 %v1097
    %1134 = vmatprep.subr.mxu0 0.0
    %1135 = vmatpush2.msra.mxu0 0.0
    %1136 = vmatprep.subr.mxu0 0.0
    %1137 = vmatpush2.msra.mxu0 0.0
    %1138 = vmatprep.subr.mxu0 0.0
    %1139 = vmatpush2.msra.mxu0 0.0
    %1140 = vmatprep.subr.mxu0 0.0
    %1141 = vmatpush2.msra.mxu0 0.0
    %1142 = vmatprep.subr.mxu0 0.0
    %1143 = vmatpush2.msra.mxu0 0.0
    %1144 = vmatprep.subr.mxu0 0.0
    %1145 = vmatpush2.msra.mxu0 0.0
    %1146 = vmatprep.subr.mxu0 0.0
    %1147 = vmatpush2.msra.mxu0 0.0
    %1148 = vmatprep.subr.mxu0 0.0
    %1149 = vmatpush2.msra.mxu0 0.0
    %1150 = vmatprep.subr.mxu0 0.0
    %1151 = vmatpush2.msra.mxu0 0.0
    %1152 = vmatprep.subr.mxu0 0.0
    %1153 = vmatpush2.msra.mxu0 0.0
    %1154 = vmatprep.subr.mxu0 0.0
    %1155 = vmatpush2.msra.mxu0 0.0
    %1156 = vmatprep.subr.mxu0 0.0
    %1157 = vmatpush2.msra.mxu0 0.0
    %1158 = vmatprep.subr.mxu0 0.0
    %1159 = vmatpush2.msra.mxu0 0.0
    %1160 = vmatprep.subr.mxu0 0.0
    %1161 = vmatpush2.msra.mxu0 0.0
    %1162 = vmatprep.subr.mxu0 0.0
    %1163 = vmatpush2.msra.mxu0 0.0
    %1164 = vmatprep.subr.mxu0 0.0
    %1165 = vmatpush2.msra.mxu0 0.0
    %1166 = vmatprep.mubr.f32.mxu0 0.0
    %1167 = vmatmul.mubr.f32.gmra.mxu0 %v1100
    %v1168 = vpop.f32.mrf.mxu0
    %v1169 = vadd.f32 0.0, %v1168
    %v1170 = vpop.f32.mrf.mxu0
    %1171 = vdwg.mxu0
    %1172 = vrot.lane.b32.xlu0 %v240, 112
    %v1173 = vpop.permute.xlu0 %1172
    %v1176 = vsel %vm249, %v939, 0
    %1178 = vmatprep.subr.mxu0 0.0
    %1179 = vmatpush1.msra.mxu0 0.0
    %1180 = vmatprep.subr.mxu0 0.0
    %1181 = vmatpush1.msra.mxu0 0.0
    %1182 = vmatprep.subr.mxu0 0.0
    %1183 = vmatpush1.msra.mxu0 0.0
    %1184 = vmatprep.subr.mxu0 0.0
    %1185 = vmatpush1.msra.mxu0 0.0
    %1186 = vmatprep.subr.mxu0 0.0
    %1187 = vmatpush1.msra.mxu0 0.0
    %1188 = vmatprep.subr.mxu0 0.0
    %1189 = vmatpush1.msra.mxu0 0.0
    %1190 = vmatprep.subr.mxu0 0.0
    %1191 = vmatpush1.msra.mxu0 0.0
    %1192 = vmatprep.subr.mxu0 0.0
    %1193 = vmatpush1.msra.mxu0 0.0
    %1194 = vmatprep.subr.mxu0 0.0
    %1195 = vmatpush1.msra.mxu0 0.0
    %1196 = vmatprep.subr.mxu0 0.0
    %1197 = vmatpush1.msra.mxu0 0.0
    %1198 = vmatprep.subr.mxu0 0.0
    %1199 = vmatpush1.msra.mxu0 0.0
    %1200 = vmatprep.subr.mxu0 0.0
    %1201 = vmatpush1.msra.mxu0 0.0
    %1202 = vmatprep.subr.mxu0 0.0
    %1203 = vmatpush1.msra.mxu0 0.0
    %1204 = vmatprep.subr.mxu0 0.0
    %1205 = vmatpush1.msra.mxu0 0.0
    %1206 = vmatprep.subr.mxu0 0.0
    %1207 = vmatpush1.msra.mxu0 0.0
    %1208 = vmatprep.subr.mxu0 0.0
    %1209 = vmatpush1.msra.mxu0 %v1173
    %1210 = vmatprep.subr.mxu0 0.0
    %1211 = vmatpush2.msra.mxu0 0.0
    %1212 = vmatprep.subr.mxu0 0.0
    %1213 = vmatpush2.msra.mxu0 0.0
    %1214 = vmatprep.subr.mxu0 0.0
    %1215 = vmatpush2.msra.mxu0 0.0
    %1216 = vmatprep.subr.mxu0 0.0
    %1217 = vmatpush2.msra.mxu0 0.0
    %1218 = vmatprep.subr.mxu0 0.0
    %1219 = vmatpush2.msra.mxu0 0.0
    %1220 = vmatprep.subr.mxu0 0.0
    %1221 = vmatpush2.msra.mxu0 0.0
    %1222 = vmatprep.subr.mxu0 0.0
    %1223 = vmatpush2.msra.mxu0 0.0
    %1224 = vmatprep.subr.mxu0 0.0
    %1225 = vmatpush2.msra.mxu0 0.0
    %1226 = vmatprep.subr.mxu0 0.0
    %1227 = vmatpush2.msra.mxu0 0.0
    %1228 = vmatprep.subr.mxu0 0.0
    %1229 = vmatpush2.msra.mxu0 0.0
    %1230 = vmatprep.subr.mxu0 0.0
    %1231 = vmatpush2.msra.mxu0 0.0
    %1232 = vmatprep.subr.mxu0 0.0
    %1233 = vmatpush2.msra.mxu0 0.0
    %1234 = vmatprep.subr.mxu0 0.0
    %1235 = vmatpush2.msra.mxu0 0.0
    %1236 = vmatprep.subr.mxu0 0.0
    %1237 = vmatpush2.msra.mxu0 0.0
    %1238 = vmatprep.subr.mxu0 0.0
    %1239 = vmatpush2.msra.mxu0 0.0
    %1240 = vmatprep.subr.mxu0 0.0
    %1241 = vmatpush2.msra.mxu0 0.0
    %1242 = vmatprep.mubr.f32.mxu0 0.0
    %1243 = vmatmul.mubr.f32.gmra.mxu0 %v1176
    %v1244 = vpop.f32.mrf.mxu0
    %v1245 = vadd.f32 0.0, %v1244
    %v1246 = vpop.f32.mrf.mxu0
    %1247 = vdwg.mxu0
    %1248 = vrot.lane.b32.xlu0 %v226, 112
    %v1249 = vpop.permute.xlu0 %1248
    %v1252 = vsel %vm249, %v940, 0
    %1254 = vmatprep.subr.mxu0 0.0
    %1255 = vmatpush1.msra.mxu0 0.0
    %1256 = vmatprep.subr.mxu0 0.0
    %1257 = vmatpush1.msra.mxu0 0.0
    %1258 = vmatprep.subr.mxu0 0.0
    %1259 = vmatpush1.msra.mxu0 0.0
    %1260 = vmatprep.subr.mxu0 0.0
    %1261 = vmatpush1.msra.mxu0 0.0
    %1262 = vmatprep.subr.mxu0 0.0
    %1263 = vmatpush1.msra.mxu0 0.0
    %1264 = vmatprep.subr.mxu0 0.0
    %1265 = vmatpush1.msra.mxu0 0.0
    %1266 = vmatprep.subr.mxu0 0.0
    %1267 = vmatpush1.msra.mxu0 0.0
    %1268 = vmatprep.subr.mxu0 0.0
    %1269 = vmatpush1.msra.mxu0 0.0
    %1270 = vmatprep.subr.mxu0 0.0
    %1271 = vmatpush1.msra.mxu0 0.0
    %1272 = vmatprep.subr.mxu0 0.0
    %1273 = vmatpush1.msra.mxu0 0.0
    %1274 = vmatprep.subr.mxu0 0.0
    %1275 = vmatpush1.msra.mxu0 0.0
    %1276 = vmatprep.subr.mxu0 0.0
    %1277 = vmatpush1.msra.mxu0 0.0
    %1278 = vmatprep.subr.mxu0 0.0
    %1279 = vmatpush1.msra.mxu0 0.0
    %1280 = vmatprep.subr.mxu0 0.0
    %1281 = vmatpush1.msra.mxu0 0.0
    %1282 = vmatprep.subr.mxu0 0.0
    %1283 = vmatpush1.msra.mxu0 0.0
    %1284 = vmatprep.subr.mxu0 0.0
    %1285 = vmatpush1.msra.mxu0 %v1249
    %1286 = vmatprep.subr.mxu0 0.0
    %1287 = vmatpush2.msra.mxu0 0.0
    %1288 = vmatprep.subr.mxu0 0.0
    %1289 = vmatpush2.msra.mxu0 0.0
    %1290 = vmatprep.subr.mxu0 0.0
    %1291 = vmatpush2.msra.mxu0 0.0
    %1292 = vmatprep.subr.mxu0 0.0
    %1293 = vmatpush2.msra.mxu0 0.0
    %1294 = vmatprep.subr.mxu0 0.0
    %1295 = vmatpush2.msra.mxu0 0.0
    %1296 = vmatprep.subr.mxu0 0.0
    %1297 = vmatpush2.msra.mxu0 0.0
    %1298 = vmatprep.subr.mxu0 0.0
    %1299 = vmatpush2.msra.mxu0 0.0
    %1300 = vmatprep.subr.mxu0 0.0
    %1301 = vmatpush2.msra.mxu0 0.0
    %1302 = vmatprep.subr.mxu0 0.0
    %1303 = vmatpush2.msra.mxu0 0.0
    %1304 = vmatprep.subr.mxu0 0.0
    %1305 = vmatpush2.msra.mxu0 0.0
    %1306 = vmatprep.subr.mxu0 0.0
    %1307 = vmatpush2.msra.mxu0 0.0
    %1308 = vmatprep.subr.mxu0 0.0
    %1309 = vmatpush2.msra.mxu0 0.0
    %1310 = vmatprep.subr.mxu0 0.0
    %1311 = vmatpush2.msra.mxu0 0.0
    %1312 = vmatprep.subr.mxu0 0.0
    %1313 = vmatpush2.msra.mxu0 0.0
    %1314 = vmatprep.subr.mxu0 0.0
    %1315 = vmatpush2.msra.mxu0 0.0
    %1316 = vmatprep.subr.mxu0 0.0
    %1317 = vmatpush2.msra.mxu0 0.0
    %1318 = vmatprep.mubr.f32.mxu0 0.0
    %1319 = vmatmul.mubr.f32.gmra.mxu0 %v1252
    %v1320 = vpop.f32.mrf.mxu0
    %v1321 = vadd.f32 0.0, %v1320
    %v1322 = vpop.f32.mrf.mxu0
    %1323 = vdwg.mxu0
    %1324 = vrot.lane.b32.xlu0 %v234, 112
    %v1325 = vpop.permute.xlu0 %1324
    %v1328 = vsel %vm249, %v941, 0
    %1330 = vmatprep.subr.mxu0 0.0
    %1331 = vmatpush1.msra.mxu0 0.0
    %1332 = vmatprep.subr.mxu0 0.0
    %1333 = vmatpush1.msra.mxu0 0.0
    %1334 = vmatprep.subr.mxu0 0.0
    %1335 = vmatpush1.msra.mxu0 0.0
    %1336 = vmatprep.subr.mxu0 0.0
    %1337 = vmatpush1.msra.mxu0 0.0
    %1338 = vmatprep.subr.mxu0 0.0
    %1339 = vmatpush1.msra.mxu0 0.0
    %1340 = vmatprep.subr.mxu0 0.0
    %1341 = vmatpush1.msra.mxu0 0.0
    %1342 = vmatprep.subr.mxu0 0.0
    %1343 = vmatpush1.msra.mxu0 0.0
    %1344 = vmatprep.subr.mxu0 0.0
    %1345 = vmatpush1.msra.mxu0 0.0
    %1346 = vmatprep.subr.mxu0 0.0
    %1347 = vmatpush1.msra.mxu0 0.0
    %1348 = vmatprep.subr.mxu0 0.0
    %1349 = vmatpush1.msra.mxu0 0.0
    %1350 = vmatprep.subr.mxu0 0.0
    %1351 = vmatpush1.msra.mxu0 0.0
    %1352 = vmatprep.subr.mxu0 0.0
    %1353 = vmatpush1.msra.mxu0 0.0
    %1354 = vmatprep.subr.mxu0 0.0
    %1355 = vmatpush1.msra.mxu0 0.0
    %1356 = vmatprep.subr.mxu0 0.0
    %1357 = vmatpush1.msra.mxu0 0.0
    %1358 = vmatprep.subr.mxu0 0.0
    %1359 = vmatpush1.msra.mxu0 0.0
    %1360 = vmatprep.subr.mxu0 0.0
    %1361 = vmatpush1.msra.mxu0 %v1325
    %1362 = vmatprep.subr.mxu0 0.0
    %1363 = vmatpush2.msra.mxu0 0.0
    %1364 = vmatprep.subr.mxu0 0.0
    %1365 = vmatpush2.msra.mxu0 0.0
    %1366 = vmatprep.subr.mxu0 0.0
    %1367 = vmatpush2.msra.mxu0 0.0
    %1368 = vmatprep.subr.mxu0 0.0
    %1369 = vmatpush2.msra.mxu0 0.0
    %1370 = vmatprep.subr.mxu0 0.0
    %1371 = vmatpush2.msra.mxu0 0.0
    %1372 = vmatprep.subr.mxu0 0.0
    %1373 = vmatpush2.msra.mxu0 0.0
    %1374 = vmatprep.subr.mxu0 0.0
    %1375 = vmatpush2.msra.mxu0 0.0
    %1376 = vmatprep.subr.mxu0 0.0
    %1377 = vmatpush2.msra.mxu0 0.0
    %1378 = vmatprep.subr.mxu0 0.0
    %1379 = vmatpush2.msra.mxu0 0.0
    %1380 = vmatprep.subr.mxu0 0.0
    %1381 = vmatpush2.msra.mxu0 0.0
    %1382 = vmatprep.subr.mxu0 0.0
    %1383 = vmatpush2.msra.mxu0 0.0
    %1384 = vmatprep.subr.mxu0 0.0
    %1385 = vmatpush2.msra.mxu0 0.0
    %1386 = vmatprep.subr.mxu0 0.0
    %1387 = vmatpush2.msra.mxu0 0.0
    %1388 = vmatprep.subr.mxu0 0.0
    %1389 = vmatpush2.msra.mxu0 0.0
    %1390 = vmatprep.subr.mxu0 0.0
    %1391 = vmatpush2.msra.mxu0 0.0
    %1392 = vmatprep.subr.mxu0 0.0
    %1393 = vmatpush2.msra.mxu0 0.0
    %1394 = vmatprep.mubr.f32.mxu0 0.0
    %1395 = vmatmul.mubr.f32.gmra.mxu0 %v1328
    %v1396 = vpop.f32.mrf.mxu0
    %v1397 = vadd.f32 0.0, %v1396
    %v1398 = vpop.f32.mrf.mxu0
    %1399 = vdwg.mxu0
    %1400 = vrot.lane.b32.xlu0 %v238, 112
    %v1401 = vpop.permute.xlu0 %1400
    %v1404 = vsel %vm249, %v942, 0
    %1406 = vmatprep.subr.mxu0 0.0
    %1407 = vmatpush1.msra.mxu0 0.0
    %1408 = vmatprep.subr.mxu0 0.0
    %1409 = vmatpush1.msra.mxu0 0.0
    %1410 = vmatprep.subr.mxu0 0.0
    %1411 = vmatpush1.msra.mxu0 0.0
    %1412 = vmatprep.subr.mxu0 0.0
    %1413 = vmatpush1.msra.mxu0 0.0
    %1414 = vmatprep.subr.mxu0 0.0
    %1415 = vmatpush1.msra.mxu0 0.0
    %1416 = vmatprep.subr.mxu0 0.0
    %1417 = vmatpush1.msra.mxu0 0.0
    %1418 = vmatprep.subr.mxu0 0.0
    %1419 = vmatpush1.msra.mxu0 0.0
    %1420 = vmatprep.subr.mxu0 0.0
    %1421 = vmatpush1.msra.mxu0 0.0
    %1422 = vmatprep.subr.mxu0 0.0
    %1423 = vmatpush1.msra.mxu0 0.0
    %1424 = vmatprep.subr.mxu0 0.0
    %1425 = vmatpush1.msra.mxu0 0.0
    %1426 = vmatprep.subr.mxu0 0.0
    %1427 = vmatpush1.msra.mxu0 0.0
    %1428 = vmatprep.subr.mxu0 0.0
    %1429 = vmatpush1.msra.mxu0 0.0
    %1430 = vmatprep.subr.mxu0 0.0
    %1431 = vmatpush1.msra.mxu0 0.0
    %1432 = vmatprep.subr.mxu0 0.0
    %1433 = vmatpush1.msra.mxu0 0.0
    %1434 = vmatprep.subr.mxu0 0.0
    %1435 = vmatpush1.msra.mxu0 0.0
    %1436 = vmatprep.subr.mxu0 0.0
    %1437 = vmatpush1.msra.mxu0 %v1401
    %1438 = vmatprep.subr.mxu0 0.0
    %1439 = vmatpush2.msra.mxu0 0.0
    %1440 = vmatprep.subr.mxu0 0.0
    %1441 = vmatpush2.msra.mxu0 0.0
    %1442 = vmatprep.subr.mxu0 0.0
    %1443 = vmatpush2.msra.mxu0 0.0
    %1444 = vmatprep.subr.mxu0 0.0
    %1445 = vmatpush2.msra.mxu0 0.0
    %1446 = vmatprep.subr.mxu0 0.0
    %1447 = vmatpush2.msra.mxu0 0.0
    %1448 = vmatprep.subr.mxu0 0.0
    %1449 = vmatpush2.msra.mxu0 0.0
    %1450 = vmatprep.subr.mxu0 0.0
    %1451 = vmatpush2.msra.mxu0 0.0
    %1452 = vmatprep.subr.mxu0 0.0
    %1453 = vmatpush2.msra.mxu0 0.0
    %1454 = vmatprep.subr.mxu0 0.0
    %1455 = vmatpush2.msra.mxu0 0.0
    %1456 = vmatprep.subr.mxu0 0.0
    %1457 = vmatpush2.msra.mxu0 0.0
    %1458 = vmatprep.subr.mxu0 0.0
    %1459 = vmatpush2.msra.mxu0 0.0
    %1460 = vmatprep.subr.mxu0 0.0
    %1461 = vmatpush2.msra.mxu0 0.0
    %1462 = vmatprep.subr.mxu0 0.0
    %1463 = vmatpush2.msra.mxu0 0.0
    %1464 = vmatprep.subr.mxu0 0.0
    %1465 = vmatpush2.msra.mxu0 0.0
    %1466 = vmatprep.subr.mxu0 0.0
    %1467 = vmatpush2.msra.mxu0 0.0
    %1468 = vmatprep.subr.mxu0 0.0
    %1469 = vmatpush2.msra.mxu0 0.0
    %1470 = vmatprep.mubr.f32.mxu0 0.0
    %1471 = vmatmul.mubr.f32.gmra.mxu0 %v1404
    %v1472 = vpop.f32.mrf.mxu0
    %v1473 = vadd.f32 0.0, %v1472
    %v1474 = vpop.f32.mrf.mxu0
    %1475 = vdwg.mxu0
    %1476 = vrot.lane.b32.xlu0 %v242, 112
    %v1477 = vpop.permute.xlu0 %1476
    %v1480 = vsel %vm249, %v943, 0
    %1482 = vmatprep.subr.mxu0 0.0
    %1483 = vmatpush1.msra.mxu0 0.0
    %1484 = vmatprep.subr.mxu0 0.0
    %1485 = vmatpush1.msra.mxu0 0.0
    %1486 = vmatprep.subr.mxu0 0.0
    %1487 = vmatpush1.msra.mxu0 0.0
    %1488 = vmatprep.subr.mxu0 0.0
    %1489 = vmatpush1.msra.mxu0 0.0
    %1490 = vmatprep.subr.mxu0 0.0
    %1491 = vmatpush1.msra.mxu0 0.0
    %1492 = vmatprep.subr.mxu0 0.0
    %1493 = vmatpush1.msra.mxu0 0.0
    %1494 = vmatprep.subr.mxu0 0.0
    %1495 = vmatpush1.msra.mxu0 0.0
    %1496 = vmatprep.subr.mxu0 0.0
    %1497 = vmatpush1.msra.mxu0 0.0
    %1498 = vmatprep.subr.mxu0 0.0
    %1499 = vmatpush1.msra.mxu0 0.0
    %1500 = vmatprep.subr.mxu0 0.0
    %1501 = vmatpush1.msra.mxu0 0.0
    %1502 = vmatprep.subr.mxu0 0.0
    %1503 = vmatpush1.msra.mxu0 0.0
    %1504 = vmatprep.subr.mxu0 0.0
    %1505 = vmatpush1.msra.mxu0 0.0
    %1506 = vmatprep.subr.mxu0 0.0
    %1507 = vmatpush1.msra.mxu0 0.0
    %1508 = vmatprep.subr.mxu0 0.0
    %1509 = vmatpush1.msra.mxu0 0.0
    %1510 = vmatprep.subr.mxu0 0.0
    %1511 = vmatpush1.msra.mxu0 0.0
    %1512 = vmatprep.subr.mxu0 0.0
    %1513 = vmatpush1.msra.mxu0 %v1477
    %1514 = vmatprep.subr.mxu0 0.0
    %1515 = vmatpush2.msra.mxu0 0.0
    %1516 = vmatprep.subr.mxu0 0.0
    %1517 = vmatpush2.msra.mxu0 0.0
    %1518 = vmatprep.subr.mxu0 0.0
    %1519 = vmatpush2.msra.mxu0 0.0
    %1520 = vmatprep.subr.mxu0 0.0
    %1521 = vmatpush2.msra.mxu0 0.0
    %1522 = vmatprep.subr.mxu0 0.0
    %1523 = vmatpush2.msra.mxu0 0.0
    %1524 = vmatprep.subr.mxu0 0.0
    %1525 = vmatpush2.msra.mxu0 0.0
    %1526 = vmatprep.subr.mxu0 0.0
    %1527 = vmatpush2.msra.mxu0 0.0
    %1528 = vmatprep.subr.mxu0 0.0
    %1529 = vmatpush2.msra.mxu0 0.0
    %1530 = vmatprep.subr.mxu0 0.0
    %1531 = vmatpush2.msra.mxu0 0.0
    %1532 = vmatprep.subr.mxu0 0.0
    %1533 = vmatpush2.msra.mxu0 0.0
    %1534 = vmatprep.subr.mxu0 0.0
    %1535 = vmatpush2.msra.mxu0 0.0
    %1536 = vmatprep.subr.mxu0 0.0
    %1537 = vmatpush2.msra.mxu0 0.0
    %1538 = vmatprep.subr.mxu0 0.0
    %1539 = vmatpush2.msra.mxu0 0.0
    %1540 = vmatprep.subr.mxu0 0.0
    %1541 = vmatpush2.msra.mxu0 0.0
    %1542 = vmatprep.subr.mxu0 0.0
    %1543 = vmatpush2.msra.mxu0 0.0
    %1544 = vmatprep.subr.mxu0 0.0
    %1545 = vmatpush2.msra.mxu0 0.0
    %1546 = vmatprep.mubr.f32.mxu0 0.0
    %1547 = vmatmul.mubr.f32.gmra.mxu0 %v1480
    %v1548 = vpop.f32.mrf.mxu0
    %v1549 = vadd.f32 0.0, %v1548
    %v1550 = vpop.f32.mrf.mxu0
    %1551 = vdwg.mxu0
    %1554 = vrot.lane.b32.xlu0 %v1093, 8
    %v1555 = vpop.permute.xlu0 %1554
    %1556 = vrot.lane.b32.xlu0 %v1397, 8
    %v1557 = vpop.permute.xlu0 %1556
    %1562 = vrot.lane.b32.xlu0 %v1169, 16
    %v1563 = vpop.permute.xlu0 %1562
    %1564 = vrot.lane.b32.xlu0 %v1473, 16
    %v1565 = vpop.permute.xlu0 %1564
    %1570 = vrot.lane.b32.xlu0 %v1245, 24
    %v1571 = vpop.permute.xlu0 %1570
    %1572 = vrot.lane.b32.xlu0 %v1549, 24
    %v1573 = vpop.permute.xlu0 %1572
    %v1576 = vsel %vm249, %v1017, %v1555
    %v1577 = vsel %vm249, %v1321, %v1557
    %vm1578 = vcmask 130048
    %v1579 = vsel %vm1578, %v1576, %v1563
    %v1580 = vsel %vm1578, %v1577, %v1565
    %vm1581 = vcmask 195584
    %v1582 = vsel %vm1581, %v1579, %v1571
    %v1583 = vsel %vm1581, %v1580, %v1573
    %v1585 = vlaneseq
    %v1586 = vshrl.u32 %v1585, 7
    %v1587 = vsub.s32 0, %v1586
    %v1588 = vrot.slane %v135, %v1587
    %v1591 = vsel %vm147, %v1582, 0
    %v1594 = vsel %vm147, %v1583, 0
    %1596 = vmatprep.subr.mxu0 0.0
    %1597 = vmatpush1.msra.mxu0 0.0
    %1598 = vmatprep.subr.mxu0 0.0
    %1599 = vmatpush1.msra.mxu0 0.0
    %1600 = vmatprep.subr.mxu0 0.0
    %1601 = vmatpush1.msra.mxu0 0.0
    %1602 = vmatprep.subr.mxu0 0.0
    %1603 = vmatpush1.msra.mxu0 0.0
    %1604 = vmatprep.subr.mxu0 0.0
    %1605 = vmatpush1.msra.mxu0 0.0
    %1606 = vmatprep.subr.mxu0 0.0
    %1607 = vmatpush1.msra.mxu0 0.0
    %1608 = vmatprep.subr.mxu0 0.0
    %1609 = vmatpush1.msra.mxu0 0.0
    %1610 = vmatprep.subr.mxu0 0.0
    %1611 = vmatpush1.msra.mxu0 0.0
    %1612 = vmatprep.subr.mxu0 0.0
    %1613 = vmatpush1.msra.mxu0 0.0
    %1614 = vmatprep.subr.mxu0 0.0
    %1615 = vmatpush1.msra.mxu0 0.0
    %1616 = vmatprep.subr.mxu0 0.0
    %1617 = vmatpush1.msra.mxu0 0.0
    %1618 = vmatprep.subr.mxu0 0.0
    %1619 = vmatpush1.msra.mxu0 0.0
    %1620 = vmatprep.subr.mxu0 0.0
    %1621 = vmatpush1.msra.mxu0 %v246
    %1622 = vmatprep.subr.mxu0 0.0
    %1623 = vmatpush1.msra.mxu0 %v245
    %1624 = vmatprep.subr.mxu0 0.0
    %1625 = vmatpush1.msra.mxu0 %v244
    %1626 = vmatprep.subr.mxu0 0.0
    %1627 = vmatpush1.msra.mxu0 %v243
    %1628 = vmatprep.subr.mxu0 0.0
    %1629 = vmatpush2.msra.mxu0 0.0
    %1630 = vmatprep.subr.mxu0 0.0
    %1631 = vmatpush2.msra.mxu0 0.0
    %1632 = vmatprep.subr.mxu0 0.0
    %1633 = vmatpush2.msra.mxu0 0.0
    %1634 = vmatprep.subr.mxu0 0.0
    %1635 = vmatpush2.msra.mxu0 0.0
    %1636 = vmatprep.subr.mxu0 0.0
    %1637 = vmatpush2.msra.mxu0 0.0
    %1638 = vmatprep.subr.mxu0 0.0
    %1639 = vmatpush2.msra.mxu0 0.0
    %1640 = vmatprep.subr.mxu0 0.0
    %1641 = vmatpush2.msra.mxu0 0.0
    %1642 = vmatprep.subr.mxu0 0.0
    %1643 = vmatpush2.msra.mxu0 0.0
    %1644 = vmatprep.subr.mxu0 0.0
    %1645 = vmatpush2.msra.mxu0 0.0
    %1646 = vmatprep.subr.mxu0 0.0
    %1647 = vmatpush2.msra.mxu0 0.0
    %1648 = vmatprep.subr.mxu0 0.0
    %1649 = vmatpush2.msra.mxu0 0.0
    %1650 = vmatprep.subr.mxu0 0.0
    %1651 = vmatpush2.msra.mxu0 0.0
    %1652 = vmatprep.subr.mxu0 0.0
    %1653 = vmatpush2.msra.mxu0 0.0
    %1654 = vmatprep.subr.mxu0 0.0
    %1655 = vmatpush2.msra.mxu0 0.0
    %1656 = vmatprep.subr.mxu0 0.0
    %1657 = vmatpush2.msra.mxu0 0.0
    %1658 = vmatprep.subr.mxu0 0.0
    %1659 = vmatpush2.msra.mxu0 0.0
    %1660 = vmatprep.mubr.f32.mxu0 0.0
    %1661 = vmatmul.mubr.f32.gmra.mxu0 %v1591
    %v1662 = vpop.f32.mrf.mxu0
    %v1663 = vadd.f32 %v1588, %v1662
    %v1664 = vpop.f32.mrf.mxu0
    %1665 = vmatprep.mubr.f32.mxu0 0.0
    %1666 = vmatmul.mubr.f32.gmra.mxu0 %v1594
    %v1667 = vpop.f32.mrf.mxu0
    %v1668 = vadd.f32 %v1588, %v1667
    %v1669 = vpop.f32.mrf.mxu0
    %1670 = vdwg.mxu0
    %v1671 = vadd.f32 %v1663, %v125
    %v1672 = vadd.f32 %v1668, %v126
    %v1673 = vsel %vm147, %v1671, 0.0
    %1674 = vadd.xlane.f32.xlu0 %v1673
    %v1675 = vpop.xlane.xlu0 %1674
    %v1676 = vsel %vm147, %v1672, 0.0
    %1677 = vadd.xlane.f32.xlu0 %v1676
    %v1678 = vpop.xlane.xlu0 %1677
    %v1679 = vrcp.pop 32.0
    %v1680 = vmul.f32 %v1675, %v1679
    %v1681 = vmul.f32 %v1678, %v1679
    %v1682 = vsub.f32 %v1671, %v1680
    %v1683 = vsub.f32 %v1672, %v1681
    %v1684 = vmul.f32 %v1682, %v1682
    %v1685 = vmul.f32 %v1683, %v1683
    %v1686 = vsel %vm147, %v1684, 0.0
    %1687 = vadd.xlane.f32.xlu0 %v1686
    %v1688 = vpop.xlane.xlu0 %1687
    %v1689 = vsel %vm147, %v1685, 0.0
    %1690 = vadd.xlane.f32.xlu0 %v1689
    %v1691 = vpop.xlane.xlu0 %1690
    %v1692 = vmul.f32 %v1688, %v1679
    %v1693 = vmul.f32 %v1691, %v1679
    %v1694 = vadd.f32 %v1692, 1e-05
    %v1695 = vadd.f32 %v1693, 1e-05
    %v1696 = vrsqrt.pop %v1694
    %v1697 = vrsqrt.pop %v1695
    %v1698 = vmul.f32 %v1682, %v1696
    %v1699 = vmul.f32 %v1683, %v1697
    %v1701 = vlaneseq
    %v1702 = vshrl.u32 %v1701, 7
    %v1703 = vsub.s32 0, %v1702
    %v1704 = vrot.slane %v131, %v1703
    %v1706 = vmul.f32 %v1698, %v1704
    %v1707 = vmul.f32 %v1699, %v1704
    %v1709 = vlaneseq
    %v1710 = vshrl.u32 %v1709, 7
    %v1711 = vsub.s32 0, %v1710
    %v1712 = vrot.slane %v132, %v1711
    %v1714 = vadd.f32 %v1706, %v1712
    %v1715 = vadd.f32 %v1707, %v1712
    %v1716 = vld [vmem:[#allocation5] sm:$0xff]
    %v1717 = vld [vmem:[#allocation5 + $0x8] sm:$0xff]
    %v1718 = vld [vmem:[#allocation5 + $0x10] sm:$0xff]
    %v1719 = vld [vmem:[#allocation5 + $0x18] sm:$0xff]
    %v1721 = vsel %vm147, %v1714, 0
    %v1724 = vsel %vm147, %v1715, 0
    %1726 = vmatprep.subr.mxu0 0.0
    %1727 = vmatpush1.msra.mxu0 0.0
    %1728 = vmatprep.subr.mxu0 0.0
    %1729 = vmatpush1.msra.mxu0 0.0
    %1730 = vmatprep.subr.mxu0 0.0
    %1731 = vmatpush1.msra.mxu0 0.0
    %1732 = vmatprep.subr.mxu0 0.0
    %1733 = vmatpush1.msra.mxu0 0.0
    %1734 = vmatprep.subr.mxu0 0.0
    %1735 = vmatpush1.msra.mxu0 0.0
    %1736 = vmatprep.subr.mxu0 0.0
    %1737 = vmatpush1.msra.mxu0 0.0
    %1738 = vmatprep.subr.mxu0 0.0
    %1739 = vmatpush1.msra.mxu0 0.0
    %1740 = vmatprep.subr.mxu0 0.0
    %1741 = vmatpush1.msra.mxu0 0.0
    %1742 = vmatprep.subr.mxu0 0.0
    %1743 = vmatpush1.msra.mxu0 0.0
    %1744 = vmatprep.subr.mxu0 0.0
    %1745 = vmatpush1.msra.mxu0 0.0
    %1746 = vmatprep.subr.mxu0 0.0
    %1747 = vmatpush1.msra.mxu0 0.0
    %1748 = vmatprep.subr.mxu0 0.0
    %1749 = vmatpush1.msra.mxu0 0.0
    %1750 = vmatprep.subr.mxu0 0.0
    %1751 = vmatpush1.msra.mxu0 %v1719
    %1752 = vmatprep.subr.mxu0 0.0
    %1753 = vmatpush1.msra.mxu0 %v1718
    %1754 = vmatprep.subr.mxu0 0.0
    %1755 = vmatpush1.msra.mxu0 %v1717
    %1756 = vmatprep.subr.mxu0 0.0
    %1757 = vmatpush1.msra.mxu0 %v1716
    %1758 = vmatprep.subr.mxu0 0.0
    %1759 = vmatpush2.msra.mxu0 0.0
    %1760 = vmatprep.subr.mxu0 0.0
    %1761 = vmatpush2.msra.mxu0 0.0
    %1762 = vmatprep.subr.mxu0 0.0
    %1763 = vmatpush2.msra.mxu0 0.0
    %1764 = vmatprep.subr.mxu0 0.0
    %1765 = vmatpush2.msra.mxu0 0.0
    %1766 = vmatprep.subr.mxu0 0.0
    %1767 = vmatpush2.msra.mxu0 0.0
    %1768 = vmatprep.subr.mxu0 0.0
    %1769 = vmatpush2.msra.mxu0 0.0
    %1770 = vmatprep.subr.mxu0 0.0
    %1771 = vmatpush2.msra.mxu0 0.0
    %1772 = vmatprep.subr.mxu0 0.0
    %1773 = vmatpush2.msra.mxu0 0.0
    %1774 = vmatprep.subr.mxu0 0.0
    %1775 = vmatpush2.msra.mxu0 0.0
    %1776 = vmatprep.subr.mxu0 0.0
    %1777 = vmatpush2.msra.mxu0 0.0
    %1778 = vmatprep.subr.mxu0 0.0
    %1779 = vmatpush2.msra.mxu0 0.0
    %1780 = vmatprep.subr.mxu0 0.0
    %1781 = vmatpush2.msra.mxu0 0.0
    %1782 = vmatprep.subr.mxu0 0.0
    %1783 = vmatpush2.msra.mxu0 0.0
    %1784 = vmatprep.subr.mxu0 0.0
    %1785 = vmatpush2.msra.mxu0 0.0
    %1786 = vmatprep.subr.mxu0 0.0
    %1787 = vmatpush2.msra.mxu0 0.0
    %1788 = vmatprep.subr.mxu0 0.0
    %1789 = vmatpush2.msra.mxu0 0.0
    %1790 = vmatprep.mubr.f32.mxu0 0.0
    %1791 = vmatmul.mubr.f32.gmra.mxu0 %v1721
    %v1792 = vpop.f32.mrf.mxu0
    %v1793 = vadd.f32 0.0, %v1792
    %v1794 = vpop.f32.mrf.mxu0
    %1795 = vmatprep.mubr.f32.mxu0 0.0
    %1796 = vmatmul.mubr.f32.gmra.mxu0 %v1724
    %v1797 = vpop.f32.mrf.mxu0
    %v1798 = vadd.f32 0.0, %v1797
    %v1799 = vpop.f32.mrf.mxu0
    %1800 = vdwg.mxu0
    %1803 = vrot.lane.b32.xlu0 %v1793, 120
    %v1804 = vpop.permute.xlu0 %1803
    %1805 = vrot.lane.b32.xlu0 %v1798, 120
    %v1806 = vpop.permute.xlu0 %1805
    %1807 = vrot.lane.b32.xlu0 %v1793, 112
    %v1808 = vpop.permute.xlu0 %1807
    %1809 = vrot.lane.b32.xlu0 %v1798, 112
    %v1810 = vpop.permute.xlu0 %1809
    %1811 = vrot.lane.b32.xlu0 %v1793, 104
    %v1812 = vpop.permute.xlu0 %1811
    %1813 = vrot.lane.b32.xlu0 %v1798, 104
    %v1814 = vpop.permute.xlu0 %1813
    %v1815 = vld [vmem:[#allocation7] sm:$0xff]
    %v1816 = vld [vmem:[#allocation7 + $0x8] sm:$0xff]
    %v1817 = vld [vmem:[#allocation7 + $0x10] sm:$0xff]
    %v1818 = vld [vmem:[#allocation7 + $0x18] sm:$0xff]
    %v1820 = vsel %vm147, %v127, 0
    %v1823 = vsel %vm147, %v128, 0
    %v1826 = vsel %vm147, %v129, 0
    %v1829 = vsel %vm147, %v130, 0
    %1831 = vmatprep.subr.mxu0 0.0
    %1832 = vmatpush1.msra.mxu0 0.0
    %1833 = vmatprep.subr.mxu0 0.0
    %1834 = vmatpush1.msra.mxu0 0.0
    %1835 = vmatprep.subr.mxu0 0.0
    %1836 = vmatpush1.msra.mxu0 0.0
    %1837 = vmatprep.subr.mxu0 0.0
    %1838 = vmatpush1.msra.mxu0 0.0
    %1839 = vmatprep.subr.mxu0 0.0
    %1840 = vmatpush1.msra.mxu0 0.0
    %1841 = vmatprep.subr.mxu0 0.0
    %1842 = vmatpush1.msra.mxu0 0.0
    %1843 = vmatprep.subr.mxu0 0.0
    %1844 = vmatpush1.msra.mxu0 0.0
    %1845 = vmatprep.subr.mxu0 0.0
    %1846 = vmatpush1.msra.mxu0 0.0
    %1847 = vmatprep.subr.mxu0 0.0
    %1848 = vmatpush1.msra.mxu0 0.0
    %1849 = vmatprep.subr.mxu0 0.0
    %1850 = vmatpush1.msra.mxu0 0.0
    %1851 = vmatprep.subr.mxu0 0.0
    %1852 = vmatpush1.msra.mxu0 0.0
    %1853 = vmatprep.subr.mxu0 0.0
    %1854 = vmatpush1.msra.mxu0 0.0
    %1855 = vmatprep.subr.mxu0 0.0
    %1856 = vmatpush1.msra.mxu0 %v1818
    %1857 = vmatprep.subr.mxu0 0.0
    %1858 = vmatpush1.msra.mxu0 %v1817
    %1859 = vmatprep.subr.mxu0 0.0
    %1860 = vmatpush1.msra.mxu0 %v1816
    %1861 = vmatprep.subr.mxu0 0.0
    %1862 = vmatpush1.msra.mxu0 %v1815
    %1863 = vmatprep.subr.mxu0 0.0
    %1864 = vmatpush2.msra.mxu0 0.0
    %1865 = vmatprep.subr.mxu0 0.0
    %1866 = vmatpush2.msra.mxu0 0.0
    %1867 = vmatprep.subr.mxu0 0.0
    %1868 = vmatpush2.msra.mxu0 0.0
    %1869 = vmatprep.subr.mxu0 0.0
    %1870 = vmatpush2.msra.mxu0 0.0
    %1871 = vmatprep.subr.mxu0 0.0
    %1872 = vmatpush2.msra.mxu0 0.0
    %1873 = vmatprep.subr.mxu0 0.0
    %1874 = vmatpush2.msra.mxu0 0.0
    %1875 = vmatprep.subr.mxu0 0.0
    %1876 = vmatpush2.msra.mxu0 0.0
    %1877 = vmatprep.subr.mxu0 0.0
    %1878 = vmatpush2.msra.mxu0 0.0
    %1879 = vmatprep.subr.mxu0 0.0
    %1880 = vmatpush2.msra.mxu0 0.0
    %1881 = vmatprep.subr.mxu0 0.0
    %1882 = vmatpush2.msra.mxu0 0.0
    %1883 = vmatprep.subr.mxu0 0.0
    %1884 = vmatpush2.msra.mxu0 0.0
    %1885 = vmatprep.subr.mxu0 0.0
    %1886 = vmatpush2.msra.mxu0 0.0
    %1887 = vmatprep.subr.mxu0 0.0
    %1888 = vmatpush2.msra.mxu0 0.0
    %1889 = vmatprep.subr.mxu0 0.0
    %1890 = vmatpush2.msra.mxu0 0.0
    %1891 = vmatprep.subr.mxu0 0.0
    %1892 = vmatpush2.msra.mxu0 0.0
    %1893 = vmatprep.subr.mxu0 0.0
    %1894 = vmatpush2.msra.mxu0 0.0
    %1895 = vmatprep.mubr.f32.mxu0 0.0
    %1896 = vmatmul.mubr.f32.gmra.mxu0 %v1820
    %v1897 = vpop.f32.mrf.mxu0
    %v1898 = vadd.f32 0.0, %v1897
    %v1899 = vpop.f32.mrf.mxu0
    %1900 = vmatprep.mubr.f32.mxu0 0.0
    %1901 = vmatmul.mubr.f32.gmra.mxu0 %v1823
    %v1902 = vpop.f32.mrf.mxu0
    %v1903 = vadd.f32 0.0, %v1902
    %v1904 = vpop.f32.mrf.mxu0
    %1905 = vmatprep.mubr.f32.mxu0 0.0
    %1906 = vmatmul.mubr.f32.gmra.mxu0 %v1826
    %v1907 = vpop.f32.mrf.mxu0
    %v1908 = vadd.f32 0.0, %v1907
    %v1909 = vpop.f32.mrf.mxu0
    %1910 = vmatprep.mubr.f32.mxu0 0.0
    %1911 = vmatmul.mubr.f32.gmra.mxu0 %v1829
    %v1912 = vpop.f32.mrf.mxu0
    %v1913 = vadd.f32 0.0, %v1912
    %v1914 = vpop.f32.mrf.mxu0
    %1915 = vdwg.mxu0
    %1920 = vrot.lane.b32.xlu0 %v1898, 112
    %v1921 = vpop.permute.xlu0 %1920
    %1922 = vrot.lane.b32.xlu0 %v1903, 112
    %v1923 = vpop.permute.xlu0 %1922
    %1924 = vrot.lane.b32.xlu0 %v1908, 112
    %v1925 = vpop.permute.xlu0 %1924
    %1926 = vrot.lane.b32.xlu0 %v1913, 112
    %v1927 = vpop.permute.xlu0 %1926
    %1928 = vrot.lane.b32.xlu0 %v1898, 96
    %v1929 = vpop.permute.xlu0 %1928
    %1930 = vrot.lane.b32.xlu0 %v1903, 96
    %v1931 = vpop.permute.xlu0 %1930
    %1932 = vrot.lane.b32.xlu0 %v1908, 96
    %v1933 = vpop.permute.xlu0 %1932
    %1934 = vrot.lane.b32.xlu0 %v1913, 96
    %v1935 = vpop.permute.xlu0 %1934
    %1936 = vrot.lane.b32.xlu0 %v1898, 80
    %v1937 = vpop.permute.xlu0 %1936
    %1938 = vrot.lane.b32.xlu0 %v1903, 80
    %v1939 = vpop.permute.xlu0 %1938
    %1940 = vrot.lane.b32.xlu0 %v1908, 80
    %v1941 = vpop.permute.xlu0 %1940
    %1942 = vrot.lane.b32.xlu0 %v1913, 80
    %v1943 = vpop.permute.xlu0 %1942
    %v1944 = vld [vmem:[#allocation8] sm:$0xff]
    %v1945 = vld [vmem:[#allocation8 + $0x8] sm:$0xff]
    %v1946 = vld [vmem:[#allocation8 + $0x10] sm:$0xff]
    %v1947 = vld [vmem:[#allocation8 + $0x18] sm:$0xff]
    %v1948 = vsel %vm249, %v1793, 0
    %v1950 = vsel %vm249, %v1898, 0
    %v1952 = vsel %vm249, %v1903, 0
    %1954 = vmatprep.subr.mxu0 0.0
    %1955 = vmatpush1.xpose.msra.mxu0 0.0
    %1956 = vmatprep.subr.mxu0 0.0
    %1957 = vmatpush1.xpose.msra.mxu0 0.0
    %1958 = vmatprep.subr.mxu0 0.0
    %1959 = vmatpush1.xpose.msra.mxu0 0.0
    %1960 = vmatprep.subr.mxu0 0.0
    %1961 = vmatpush1.xpose.msra.mxu0 0.0
    %1962 = vmatprep.subr.mxu0 0.0
    %1963 = vmatpush1.xpose.msra.mxu0 0.0
    %1964 = vmatprep.subr.mxu0 0.0
    %1965 = vmatpush1.xpose.msra.mxu0 0.0
    %1966 = vmatprep.subr.mxu0 0.0
    %1967 = vmatpush1.xpose.msra.mxu0 0.0
    %1968 = vmatprep.subr.mxu0 0.0
    %1969 = vmatpush1.xpose.msra.mxu0 0.0
    %1970 = vmatprep.subr.mxu0 0.0
    %1971 = vmatpush1.xpose.msra.mxu0 0.0
    %1972 = vmatprep.subr.mxu0 0.0
    %1973 = vmatpush1.xpose.msra.mxu0 0.0
    %1974 = vmatprep.subr.mxu0 0.0
    %1975 = vmatpush1.xpose.msra.mxu0 0.0
    %1976 = vmatprep.subr.mxu0 0.0
    %1977 = vmatpush1.xpose.msra.mxu0 0.0
    %1978 = vmatprep.subr.mxu0 0.0
    %1979 = vmatpush1.xpose.msra.mxu0 0.0
    %1980 = vmatprep.subr.mxu0 0.0
    %1981 = vmatpush1.xpose.msra.mxu0 0.0
    %1982 = vmatprep.subr.mxu0 0.0
    %1983 = vmatpush1.xpose.msra.mxu0 %v1952
    %1984 = vmatprep.subr.mxu0 0.0
    %1985 = vmatpush1.xpose.msra.mxu0 %v1950
    %1986 = vmatprep.subr.mxu0 0.0
    %1987 = vmatpush2.xpose.msra.mxu0 0.0
    %1988 = vmatprep.subr.mxu0 0.0
    %1989 = vmatpush2.xpose.msra.mxu0 0.0
    %1990 = vmatprep.subr.mxu0 0.0
    %1991 = vmatpush2.xpose.msra.mxu0 0.0
    %1992 = vmatprep.subr.mxu0 0.0
    %1993 = vmatpush2.xpose.msra.mxu0 0.0
    %1994 = vmatprep.subr.mxu0 0.0
    %1995 = vmatpush2.xpose.msra.mxu0 0.0
    %1996 = vmatprep.subr.mxu0 0.0
    %1997 = vmatpush2.xpose.msra.mxu0 0.0
    %1998 = vmatprep.subr.mxu0 0.0
    %1999 = vmatpush2.xpose.msra.mxu0 0.0
    %2000 = vmatprep.subr.mxu0 0.0
    %2001 = vmatpush2.xpose.msra.mxu0 0.0
    %2002 = vmatprep.subr.mxu0 0.0
    %2003 = vmatpush2.xpose.msra.mxu0 0.0
    %2004 = vmatprep.subr.mxu0 0.0
    %2005 = vmatpush2.xpose.msra.mxu0 0.0
    %2006 = vmatprep.subr.mxu0 0.0
    %2007 = vmatpush2.xpose.msra.mxu0 0.0
    %2008 = vmatprep.subr.mxu0 0.0
    %2009 = vmatpush2.xpose.msra.mxu0 0.0
    %2010 = vmatprep.subr.mxu0 0.0
    %2011 = vmatpush2.xpose.msra.mxu0 0.0
    %2012 = vmatprep.subr.mxu0 0.0
    %2013 = vmatpush2.xpose.msra.mxu0 0.0
    %2014 = vmatprep.subr.mxu0 0.0
    %2015 = vmatpush2.xpose.msra.mxu0 0.0
    %2016 = vmatprep.subr.mxu0 0.0
    %2017 = vmatpush2.xpose.msra.mxu0 0.0
    %2018 = vmatprep.mubr.f32.mxu0 0.0
    %2019 = vmatmul.mubr.f32.gmra.mxu0 %v1948
    %v2020 = vpop.f32.mrf.mxu0
    %v2021 = vadd.f32 0.0, %v2020
    %v2022 = vpop.f32.mrf.mxu0
    %2023 = vdwg.mxu0
    %v2024 = vsel %vm249, %v1804, 0
    %v2026 = vsel %vm249, %v1921, 0
    %v2028 = vsel %vm249, %v1923, 0
    %2030 = vmatprep.subr.mxu0 0.0
    %2031 = vmatpush1.xpose.msra.mxu0 0.0
    %2032 = vmatprep.subr.mxu0 0.0
    %2033 = vmatpush1.xpose.msra.mxu0 0.0
    %2034 = vmatprep.subr.mxu0 0.0
    %2035 = vmatpush1.xpose.msra.mxu0 0.0
    %2036 = vmatprep.subr.mxu0 0.0
    %2037 = vmatpush1.xpose.msra.mxu0 0.0
    %2038 = vmatprep.subr.mxu0 0.0
    %2039 = vmatpush1.xpose.msra.mxu0 0.0
    %2040 = vmatprep.subr.mxu0 0.0
    %2041 = vmatpush1.xpose.msra.mxu0 0.0
    %2042 = vmatprep.subr.mxu0 0.0
    %2043 = vmatpush1.xpose.msra.mxu0 0.0
    %2044 = vmatprep.subr.mxu0 0.0
    %2045 = vmatpush1.xpose.msra.mxu0 0.0
    %2046 = vmatprep.subr.mxu0 0.0
    %2047 = vmatpush1.xpose.msra.mxu0 0.0
    %2048 = vmatprep.subr.mxu0 0.0
    %2049 = vmatpush1.xpose.msra.mxu0 0.0
    %2050 = vmatprep.subr.mxu0 0.0
    %2051 = vmatpush1.xpose.msra.mxu0 0.0
    %2052 = vmatprep.subr.mxu0 0.0
    %2053 = vmatpush1.xpose.msra.mxu0 0.0
    %2054 = vmatprep.subr.mxu0 0.0
    %2055 = vmatpush1.xpose.msra.mxu0 0.0
    %2056 = vmatprep.subr.mxu0 0.0
    %2057 = vmatpush1.xpose.msra.mxu0 0.0
    %2058 = vmatprep.subr.mxu0 0.0
    %2059 = vmatpush1.xpose.msra.mxu0 %v2028
    %2060 = vmatprep.subr.mxu0 0.0
    %2061 = vmatpush1.xpose.msra.mxu0 %v2026
    %2062 = vmatprep.subr.mxu0 0.0
    %2063 = vmatpush2.xpose.msra.mxu0 0.0
    %2064 = vmatprep.subr.mxu0 0.0
    %2065 = vmatpush2.xpose.msra.mxu0 0.0
    %2066 = vmatprep.subr.mxu0 0.0
    %2067 = vmatpush2.xpose.msra.mxu0 0.0
    %2068 = vmatprep.subr.mxu0 0.0
    %2069 = vmatpush2.xpose.msra.mxu0 0.0
    %2070 = vmatprep.subr.mxu0 0.0
    %2071 = vmatpush2.xpose.msra.mxu0 0.0
    %2072 = vmatprep.subr.mxu0 0.0
    %2073 = vmatpush2.xpose.msra.mxu0 0.0
    %2074 = vmatprep.subr.mxu0 0.0
    %2075 = vmatpush2.xpose.msra.mxu0 0.0
    %2076 = vmatprep.subr.mxu0 0.0
    %2077 = vmatpush2.xpose.msra.mxu0 0.0
    %2078 = vmatprep.subr.mxu0 0.0
    %2079 = vmatpush2.xpose.msra.mxu0 0.0
    %2080 = vmatprep.subr.mxu0 0.0
    %2081 = vmatpush2.xpose.msra.mxu0 0.0
    %2082 = vmatprep.subr.mxu0 0.0
    %2083 = vmatpush2.xpose.msra.mxu0 0.0
    %2084 = vmatprep.subr.mxu0 0.0
    %2085 = vmatpush2.xpose.msra.mxu0 0.0
    %2086 = vmatprep.subr.mxu0 0.0
    %2087 = vmatpush2.xpose.msra.mxu0 0.0
    %2088 = vmatprep.subr.mxu0 0.0
    %2089 = vmatpush2.xpose.msra.mxu0 0.0
    %2090 = vmatprep.subr.mxu0 0.0
    %2091 = vmatpush2.xpose.msra.mxu0 0.0
    %2092 = vmatprep.subr.mxu0 0.0
    %2093 = vmatpush2.xpose.msra.mxu0 0.0
    %2094 = vmatprep.mubr.f32.mxu0 0.0
    %2095 = vmatmul.mubr.f32.gmra.mxu0 %v2024
    %v2096 = vpop.f32.mrf.mxu0
    %v2097 = vadd.f32 0.0, %v2096
    %v2098 = vpop.f32.mrf.mxu0
    %2099 = vdwg.mxu0
    %v2100 = vsel %vm249, %v1808, 0
    %v2102 = vsel %vm249, %v1929, 0
    %v2104 = vsel %vm249, %v1931, 0
    %2106 = vmatprep.subr.mxu0 0.0
    %2107 = vmatpush1.xpose.msra.mxu0 0.0
    %2108 = vmatprep.subr.mxu0 0.0
    %2109 = vmatpush1.xpose.msra.mxu0 0.0
    %2110 = vmatprep.subr.mxu0 0.0
    %2111 = vmatpush1.xpose.msra.mxu0 0.0
    %2112 = vmatprep.subr.mxu0 0.0
    %2113 = vmatpush1.xpose.msra.mxu0 0.0
    %2114 = vmatprep.subr.mxu0 0.0
    %2115 = vmatpush1.xpose.msra.mxu0 0.0
    %2116 = vmatprep.subr.mxu0 0.0
    %2117 = vmatpush1.xpose.msra.mxu0 0.0
    %2118 = vmatprep.subr.mxu0 0.0
    %2119 = vmatpush1.xpose.msra.mxu0 0.0
    %2120 = vmatprep.subr.mxu0 0.0
    %2121 = vmatpush1.xpose.msra.mxu0 0.0
    %2122 = vmatprep.subr.mxu0 0.0
    %2123 = vmatpush1.xpose.msra.mxu0 0.0
    %2124 = vmatprep.subr.mxu0 0.0
    %2125 = vmatpush1.xpose.msra.mxu0 0.0
    %2126 = vmatprep.subr.mxu0 0.0
    %2127 = vmatpush1.xpose.msra.mxu0 0.0
    %2128 = vmatprep.subr.mxu0 0.0
    %2129 = vmatpush1.xpose.msra.mxu0 0.0
    %2130 = vmatprep.subr.mxu0 0.0
    %2131 = vmatpush1.xpose.msra.mxu0 0.0
    %2132 = vmatprep.subr.mxu0 0.0
    %2133 = vmatpush1.xpose.msra.mxu0 0.0
    %2134 = vmatprep.subr.mxu0 0.0
    %2135 = vmatpush1.xpose.msra.mxu0 %v2104
    %2136 = vmatprep.subr.mxu0 0.0
    %2137 = vmatpush1.xpose.msra.mxu0 %v2102
    %2138 = vmatprep.subr.mxu0 0.0
    %2139 = vmatpush2.xpose.msra.mxu0 0.0
    %2140 = vmatprep.subr.mxu0 0.0
    %2141 = vmatpush2.xpose.msra.mxu0 0.0
    %2142 = vmatprep.subr.mxu0 0.0
    %2143 = vmatpush2.xpose.msra.mxu0 0.0
    %2144 = vmatprep.subr.mxu0 0.0
    %2145 = vmatpush2.xpose.msra.mxu0 0.0
    %2146 = vmatprep.subr.mxu0 0.0
    %2147 = vmatpush2.xpose.msra.mxu0 0.0
    %2148 = vmatprep.subr.mxu0 0.0
    %2149 = vmatpush2.xpose.msra.mxu0 0.0
    %2150 = vmatprep.subr.mxu0 0.0
    %2151 = vmatpush2.xpose.msra.mxu0 0.0
    %2152 = vmatprep.subr.mxu0 0.0
    %2153 = vmatpush2.xpose.msra.mxu0 0.0
    %2154 = vmatprep.subr.mxu0 0.0
    %2155 = vmatpush2.xpose.msra.mxu0 0.0
    %2156 = vmatprep.subr.mxu0 0.0
    %2157 = vmatpush2.xpose.msra.mxu0 0.0
    %2158 = vmatprep.subr.mxu0 0.0
    %2159 = vmatpush2.xpose.msra.mxu0 0.0
    %2160 = vmatprep.subr.mxu0 0.0
    %2161 = vmatpush2.xpose.msra.mxu0 0.0
    %2162 = vmatprep.subr.mxu0 0.0
    %2163 = vmatpush2.xpose.msra.mxu0 0.0
    %2164 = vmatprep.subr.mxu0 0.0
    %2165 = vmatpush2.xpose.msra.mxu0 0.0
    %2166 = vmatprep.subr.mxu0 0.0
    %2167 = vmatpush2.xpose.msra.mxu0 0.0
    %2168 = vmatprep.subr.mxu0 0.0
    %2169 = vmatpush2.xpose.msra.mxu0 0.0
    %2170 = vmatprep.mubr.f32.mxu0 0.0
    %2171 = vmatmul.mubr.f32.gmra.mxu0 %v2100
    %v2172 = vpop.f32.mrf.mxu0
    %v2173 = vadd.f32 0.0, %v2172
    %v2174 = vpop.f32.mrf.mxu0
    %2175 = vdwg.mxu0
    %v2176 = vsel %vm249, %v1812, 0
    %v2178 = vsel %vm249, %v1937, 0
    %v2180 = vsel %vm249, %v1939, 0
    %2182 = vmatprep.subr.mxu0 0.0
    %2183 = vmatpush1.xpose.msra.mxu0 0.0
    %2184 = vmatprep.subr.mxu0 0.0
    %2185 = vmatpush1.xpose.msra.mxu0 0.0
    %2186 = vmatprep.subr.mxu0 0.0
    %2187 = vmatpush1.xpose.msra.mxu0 0.0
    %2188 = vmatprep.subr.mxu0 0.0
    %2189 = vmatpush1.xpose.msra.mxu0 0.0
    %2190 = vmatprep.subr.mxu0 0.0
    %2191 = vmatpush1.xpose.msra.mxu0 0.0
    %2192 = vmatprep.subr.mxu0 0.0
    %2193 = vmatpush1.xpose.msra.mxu0 0.0
    %2194 = vmatprep.subr.mxu0 0.0
    %2195 = vmatpush1.xpose.msra.mxu0 0.0
    %2196 = vmatprep.subr.mxu0 0.0
    %2197 = vmatpush1.xpose.msra.mxu0 0.0
    %2198 = vmatprep.subr.mxu0 0.0
    %2199 = vmatpush1.xpose.msra.mxu0 0.0
    %2200 = vmatprep.subr.mxu0 0.0
    %2201 = vmatpush1.xpose.msra.mxu0 0.0
    %2202 = vmatprep.subr.mxu0 0.0
    %2203 = vmatpush1.xpose.msra.mxu0 0.0
    %2204 = vmatprep.subr.mxu0 0.0
    %2205 = vmatpush1.xpose.msra.mxu0 0.0
    %2206 = vmatprep.subr.mxu0 0.0
    %2207 = vmatpush1.xpose.msra.mxu0 0.0
    %2208 = vmatprep.subr.mxu0 0.0
    %2209 = vmatpush1.xpose.msra.mxu0 0.0
    %2210 = vmatprep.subr.mxu0 0.0
    %2211 = vmatpush1.xpose.msra.mxu0 %v2180
    %2212 = vmatprep.subr.mxu0 0.0
    %2213 = vmatpush1.xpose.msra.mxu0 %v2178
    %2214 = vmatprep.subr.mxu0 0.0
    %2215 = vmatpush2.xpose.msra.mxu0 0.0
    %2216 = vmatprep.subr.mxu0 0.0
    %2217 = vmatpush2.xpose.msra.mxu0 0.0
    %2218 = vmatprep.subr.mxu0 0.0
    %2219 = vmatpush2.xpose.msra.mxu0 0.0
    %2220 = vmatprep.subr.mxu0 0.0
    %2221 = vmatpush2.xpose.msra.mxu0 0.0
    %2222 = vmatprep.subr.mxu0 0.0
    %2223 = vmatpush2.xpose.msra.mxu0 0.0
    %2224 = vmatprep.subr.mxu0 0.0
    %2225 = vmatpush2.xpose.msra.mxu0 0.0
    %2226 = vmatprep.subr.mxu0 0.0
    %2227 = vmatpush2.xpose.msra.mxu0 0.0
    %2228 = vmatprep.subr.mxu0 0.0
    %2229 = vmatpush2.xpose.msra.mxu0 0.0
    %2230 = vmatprep.subr.mxu0 0.0
    %2231 = vmatpush2.xpose.msra.mxu0 0.0
    %2232 = vmatprep.subr.mxu0 0.0
    %2233 = vmatpush2.xpose.msra.mxu0 0.0
    %2234 = vmatprep.subr.mxu0 0.0
    %2235 = vmatpush2.xpose.msra.mxu0 0.0
    %2236 = vmatprep.subr.mxu0 0.0
    %2237 = vmatpush2.xpose.msra.mxu0 0.0
    %2238 = vmatprep.subr.mxu0 0.0
    %2239 = vmatpush2.xpose.msra.mxu0 0.0
    %2240 = vmatprep.subr.mxu0 0.0
    %2241 = vmatpush2.xpose.msra.mxu0 0.0
    %2242 = vmatprep.subr.mxu0 0.0
    %2243 = vmatpush2.xpose.msra.mxu0 0.0
    %2244 = vmatprep.subr.mxu0 0.0
    %2245 = vmatpush2.xpose.msra.mxu0 0.0
    %2246 = vmatprep.mubr.f32.mxu0 0.0
    %2247 = vmatmul.mubr.f32.gmra.mxu0 %v2176
    %v2248 = vpop.f32.mrf.mxu0
    %v2249 = vadd.f32 0.0, %v2248
    %v2250 = vpop.f32.mrf.mxu0
    %2251 = vdwg.mxu0
    %v2252 = vsel %vm249, %v1798, 0
    %v2254 = vsel %vm249, %v1908, 0
    %v2256 = vsel %vm249, %v1913, 0
    %2258 = vmatprep.subr.mxu0 0.0
    %2259 = vmatpush1.xpose.msra.mxu0 0.0
    %2260 = vmatprep.subr.mxu0 0.0
    %2261 = vmatpush1.xpose.msra.mxu0 0.0
    %2262 = vmatprep.subr.mxu0 0.0
    %2263 = vmatpush1.xpose.msra.mxu0 0.0
    %2264 = vmatprep.subr.mxu0 0.0
    %2265 = vmatpush1.xpose.msra.mxu0 0.0
    %2266 = vmatprep.subr.mxu0 0.0
    %2267 = vmatpush1.xpose.msra.mxu0 0.0
    %2268 = vmatprep.subr.mxu0 0.0
    %2269 = vmatpush1.xpose.msra.mxu0 0.0
    %2270 = vmatprep.subr.mxu0 0.0
    %2271 = vmatpush1.xpose.msra.mxu0 0.0
    %2272 = vmatprep.subr.mxu0 0.0
    %2273 = vmatpush1.xpose.msra.mxu0 0.0
    %2274 = vmatprep.subr.mxu0 0.0
    %2275 = vmatpush1.xpose.msra.mxu0 0.0
    %2276 = vmatprep.subr.mxu0 0.0
    %2277 = vmatpush1.xpose.msra.mxu0 0.0
    %2278 = vmatprep.subr.mxu0 0.0
    %2279 = vmatpush1.xpose.msra.mxu0 0.0
    %2280 = vmatprep.subr.mxu0 0.0
    %2281 = vmatpush1.xpose.msra.mxu0 0.0
    %2282 = vmatprep.subr.mxu0 0.0
    %2283 = vmatpush1.xpose.msra.mxu0 0.0
    %2284 = vmatprep.subr.mxu0 0.0
    %2285 = vmatpush1.xpose.msra.mxu0 0.0
    %2286 = vmatprep.subr.mxu0 0.0
    %2287 = vmatpush1.xpose.msra.mxu0 %v2256
    %2288 = vmatprep.subr.mxu0 0.0
    %2289 = vmatpush1.xpose.msra.mxu0 %v2254
    %2290 = vmatprep.subr.mxu0 0.0
    %2291 = vmatpush2.xpose.msra.mxu0 0.0
    %2292 = vmatprep.subr.mxu0 0.0
    %2293 = vmatpush2.xpose.msra.mxu0 0.0
    %2294 = vmatprep.subr.mxu0 0.0
    %2295 = vmatpush2.xpose.msra.mxu0 0.0
    %2296 = vmatprep.subr.mxu0 0.0
    %2297 = vmatpush2.xpose.msra.mxu0 0.0
    %2298 = vmatprep.subr.mxu0 0.0
    %2299 = vmatpush2.xpose.msra.mxu0 0.0
    %2300 = vmatprep.subr.mxu0 0.0
    %2301 = vmatpush2.xpose.msra.mxu0 0.0
    %2302 = vmatprep.subr.mxu0 0.0
    %2303 = vmatpush2.xpose.msra.mxu0 0.0
    %2304 = vmatprep.subr.mxu0 0.0
    %2305 = vmatpush2.xpose.msra.mxu0 0.0
    %2306 = vmatprep.subr.mxu0 0.0
    %2307 = vmatpush2.xpose.msra.mxu0 0.0
    %2308 = vmatprep.subr.mxu0 0.0
    %2309 = vmatpush2.xpose.msra.mxu0 0.0
    %2310 = vmatprep.subr.mxu0 0.0
    %2311 = vmatpush2.xpose.msra.mxu0 0.0
    %2312 = vmatprep.subr.mxu0 0.0
    %2313 = vmatpush2.xpose.msra.mxu0 0.0
    %2314 = vmatprep.subr.mxu0 0.0
    %2315 = vmatpush2.xpose.msra.mxu0 0.0
    %2316 = vmatprep.subr.mxu0 0.0
    %2317 = vmatpush2.xpose.msra.mxu0 0.0
    %2318 = vmatprep.subr.mxu0 0.0
    %2319 = vmatpush2.xpose.msra.mxu0 0.0
    %2320 = vmatprep.subr.mxu0 0.0
    %2321 = vmatpush2.xpose.msra.mxu0 0.0
    %2322 = vmatprep.mubr.f32.mxu0 0.0
    %2323 = vmatmul.mubr.f32.gmra.mxu0 %v2252
    %v2324 = vpop.f32.mrf.mxu0
    %v2325 = vadd.f32 0.0, %v2324
    %v2326 = vpop.f32.mrf.mxu0
    %2327 = vdwg.mxu0
    %v2328 = vsel %vm249, %v1806, 0
    %v2330 = vsel %vm249, %v1925, 0
    %v2332 = vsel %vm249, %v1927, 0
    %2334 = vmatprep.subr.mxu0 0.0
    %2335 = vmatpush1.xpose.msra.mxu0 0.0
    %2336 = vmatprep.subr.mxu0 0.0
    %2337 = vmatpush1.xpose.msra.mxu0 0.0
    %2338 = vmatprep.subr.mxu0 0.0
    %2339 = vmatpush1.xpose.msra.mxu0 0.0
    %2340 = vmatprep.subr.mxu0 0.0
    %2341 = vmatpush1.xpose.msra.mxu0 0.0
    %2342 = vmatprep.subr.mxu0 0.0
    %2343 = vmatpush1.xpose.msra.mxu0 0.0
    %2344 = vmatprep.subr.mxu0 0.0
    %2345 = vmatpush1.xpose.msra.mxu0 0.0
    %2346 = vmatprep.subr.mxu0 0.0
    %2347 = vmatpush1.xpose.msra.mxu0 0.0
    %2348 = vmatprep.subr.mxu0 0.0
    %2349 = vmatpush1.xpose.msra.mxu0 0.0
    %2350 = vmatprep.subr.mxu0 0.0
    %2351 = vmatpush1.xpose.msra.mxu0 0.0
    %2352 = vmatprep.subr.mxu0 0.0
    %2353 = vmatpush1.xpose.msra.mxu0 0.0
    %2354 = vmatprep.subr.mxu0 0.0
    %2355 = vmatpush1.xpose.msra.mxu0 0.0
    %2356 = vmatprep.subr.mxu0 0.0
    %2357 = vmatpush1.xpose.msra.mxu0 0.0
    %2358 = vmatprep.subr.mxu0 0.0
    %2359 = vmatpush1.xpose.msra.mxu0 0.0
    %2360 = vmatprep.subr.mxu0 0.0
    %2361 = vmatpush1.xpose.msra.mxu0 0.0
    %2362 = vmatprep.subr.mxu0 0.0
    %2363 = vmatpush1.xpose.msra.mxu0 %v2332
    %2364 = vmatprep.subr.mxu0 0.0
    %2365 = vmatpush1.xpose.msra.mxu0 %v2330
    %2366 = vmatprep.subr.mxu0 0.0
    %2367 = vmatpush2.xpose.msra.mxu0 0.0
    %2368 = vmatprep.subr.mxu0 0.0
    %2369 = vmatpush2.xpose.msra.mxu0 0.0
    %2370 = vmatprep.subr.mxu0 0.0
    %2371 = vmatpush2.xpose.msra.mxu0 0.0
    %2372 = vmatprep.subr.mxu0 0.0
    %2373 = vmatpush2.xpose.msra.mxu0 0.0
    %2374 = vmatprep.subr.mxu0 0.0
    %2375 = vmatpush2.xpose.msra.mxu0 0.0
    %2376 = vmatprep.subr.mxu0 0.0
    %2377 = vmatpush2.xpose.msra.mxu0 0.0
    %2378 = vmatprep.subr.mxu0 0.0
    %2379 = vmatpush2.xpose.msra.mxu0 0.0
    %2380 = vmatprep.subr.mxu0 0.0
    %2381 = vmatpush2.xpose.msra.mxu0 0.0
    %2382 = vmatprep.subr.mxu0 0.0
    %2383 = vmatpush2.xpose.msra.mxu0 0.0
    %2384 = vmatprep.subr.mxu0 0.0
    %2385 = vmatpush2.xpose.msra.mxu0 0.0
    %2386 = vmatprep.subr.mxu0 0.0
    %2387 = vmatpush2.xpose.msra.mxu0 0.0
    %2388 = vmatprep.subr.mxu0 0.0
    %2389 = vmatpush2.xpose.msra.mxu0 0.0
    %2390 = vmatprep.subr.mxu0 0.0
    %2391 = vmatpush2.xpose.msra.mxu0 0.0
    %2392 = vmatprep.subr.mxu0 0.0
    %2393 = vmatpush2.xpose.msra.mxu0 0.0
    %2394 = vmatprep.subr.mxu0 0.0
    %2395 = vmatpush2.xpose.msra.mxu0 0.0
    %2396 = vmatprep.subr.mxu0 0.0
    %2397 = vmatpush2.xpose.msra.mxu0 0.0
    %2398 = vmatprep.mubr.f32.mxu0 0.0
    %2399 = vmatmul.mubr.f32.gmra.mxu0 %v2328
    %v2400 = vpop.f32.mrf.mxu0
    %v2401 = vadd.f32 0.0, %v2400
    %v2402 = vpop.f32.mrf.mxu0
    %2403 = vdwg.mxu0
    %v2404 = vsel %vm249, %v1810, 0
    %v2406 = vsel %vm249, %v1933, 0
    %v2408 = vsel %vm249, %v1935, 0
    %2410 = vmatprep.subr.mxu0 0.0
    %2411 = vmatpush1.xpose.msra.mxu0 0.0
    %2412 = vmatprep.subr.mxu0 0.0
    %2413 = vmatpush1.xpose.msra.mxu0 0.0
    %2414 = vmatprep.subr.mxu0 0.0
    %2415 = vmatpush1.xpose.msra.mxu0 0.0
    %2416 = vmatprep.subr.mxu0 0.0
    %2417 = vmatpush1.xpose.msra.mxu0 0.0
    %2418 = vmatprep.subr.mxu0 0.0
    %2419 = vmatpush1.xpose.msra.mxu0 0.0
    %2420 = vmatprep.subr.mxu0 0.0
    %2421 = vmatpush1.xpose.msra.mxu0 0.0
    %2422 = vmatprep.subr.mxu0 0.0
    %2423 = vmatpush1.xpose.msra.mxu0 0.0
    %2424 = vmatprep.subr.mxu0 0.0
    %2425 = vmatpush1.xpose.msra.mxu0 0.0
    %2426 = vmatprep.subr.mxu0 0.0
    %2427 = vmatpush1.xpose.msra.mxu0 0.0
    %2428 = vmatprep.subr.mxu0 0.0
    %2429 = vmatpush1.xpose.msra.mxu0 0.0
    %2430 = vmatprep.subr.mxu0 0.0
    %2431 = vmatpush1.xpose.msra.mxu0 0.0
    %2432 = vmatprep.subr.mxu0 0.0
    %2433 = vmatpush1.xpose.msra.mxu0 0.0
    %2434 = vmatprep.subr.mxu0 0.0
    %2435 = vmatpush1.xpose.msra.mxu0 0.0
    %2436 = vmatprep.subr.mxu0 0.0
    %2437 = vmatpush1.xpose.msra.mxu0 0.0
    %2438 = vmatprep.subr.mxu0 0.0
    %2439 = vmatpush1.xpose.msra.mxu0 %v2408
    %2440 = vmatprep.subr.mxu0 0.0
    %2441 = vmatpush1.xpose.msra.mxu0 %v2406
    %2442 = vmatprep.subr.mxu0 0.0
    %2443 = vmatpush2.xpose.msra.mxu0 0.0
    %2444 = vmatprep.subr.mxu0 0.0
    %2445 = vmatpush2.xpose.msra.mxu0 0.0
    %2446 = vmatprep.subr.mxu0 0.0
    %2447 = vmatpush2.xpose.msra.mxu0 0.0
    %2448 = vmatprep.subr.mxu0 0.0
    %2449 = vmatpush2.xpose.msra.mxu0 0.0
    %2450 = vmatprep.subr.mxu0 0.0
    %2451 = vmatpush2.xpose.msra.mxu0 0.0
    %2452 = vmatprep.subr.mxu0 0.0
    %2453 = vmatpush2.xpose.msra.mxu0 0.0
    %2454 = vmatprep.subr.mxu0 0.0
    %2455 = vmatpush2.xpose.msra.mxu0 0.0
    %2456 = vmatprep.subr.mxu0 0.0
    %2457 = vmatpush2.xpose.msra.mxu0 0.0
    %2458 = vmatprep.subr.mxu0 0.0
    %2459 = vmatpush2.xpose.msra.mxu0 0.0
    %2460 = vmatprep.subr.mxu0 0.0
    %2461 = vmatpush2.xpose.msra.mxu0 0.0
    %2462 = vmatprep.subr.mxu0 0.0
    %2463 = vmatpush2.xpose.msra.mxu0 0.0
    %2464 = vmatprep.subr.mxu0 0.0
    %2465 = vmatpush2.xpose.msra.mxu0 0.0
    %2466 = vmatprep.subr.mxu0 0.0
    %2467 = vmatpush2.xpose.msra.mxu0 0.0
    %2468 = vmatprep.subr.mxu0 0.0
    %2469 = vmatpush2.xpose.msra.mxu0 0.0
    %2470 = vmatprep.subr.mxu0 0.0
    %2471 = vmatpush2.xpose.msra.mxu0 0.0
    %2472 = vmatprep.subr.mxu0 0.0
    %2473 = vmatpush2.xpose.msra.mxu0 0.0
    %2474 = vmatprep.mubr.f32.mxu0 0.0
    %2475 = vmatmul.mubr.f32.gmra.mxu0 %v2404
    %v2476 = vpop.f32.mrf.mxu0
    %v2477 = vadd.f32 0.0, %v2476
    %v2478 = vpop.f32.mrf.mxu0
    %2479 = vdwg.mxu0
    %v2480 = vsel %vm249, %v1814, 0
    %v2482 = vsel %vm249, %v1941, 0
    %v2484 = vsel %vm249, %v1943, 0
    %2486 = vmatprep.subr.mxu0 0.0
    %2487 = vmatpush1.xpose.msra.mxu0 0.0
    %2488 = vmatprep.subr.mxu0 0.0
    %2489 = vmatpush1.xpose.msra.mxu0 0.0
    %2490 = vmatprep.subr.mxu0 0.0
    %2491 = vmatpush1.xpose.msra.mxu0 0.0
    %2492 = vmatprep.subr.mxu0 0.0
    %2493 = vmatpush1.xpose.msra.mxu0 0.0
    %2494 = vmatprep.subr.mxu0 0.0
    %2495 = vmatpush1.xpose.msra.mxu0 0.0
    %2496 = vmatprep.subr.mxu0 0.0
    %2497 = vmatpush1.xpose.msra.mxu0 0.0
    %2498 = vmatprep.subr.mxu0 0.0
    %2499 = vmatpush1.xpose.msra.mxu0 0.0
    %2500 = vmatprep.subr.mxu0 0.0
    %2501 = vmatpush1.xpose.msra.mxu0 0.0
    %2502 = vmatprep.subr.mxu0 0.0
    %2503 = vmatpush1.xpose.msra.mxu0 0.0
    %2504 = vmatprep.subr.mxu0 0.0
    %2505 = vmatpush1.xpose.msra.mxu0 0.0
    %2506 = vmatprep.subr.mxu0 0.0
    %2507 = vmatpush1.xpose.msra.mxu0 0.0
    %2508 = vmatprep.subr.mxu0 0.0
    %2509 = vmatpush1.xpose.msra.mxu0 0.0
    %2510 = vmatprep.subr.mxu0 0.0
    %2511 = vmatpush1.xpose.msra.mxu0 0.0
    %2512 = vmatprep.subr.mxu0 0.0
    %2513 = vmatpush1.xpose.msra.mxu0 0.0
    %2514 = vmatprep.subr.mxu0 0.0
    %2515 = vmatpush1.xpose.msra.mxu0 %v2484
    %2516 = vmatprep.subr.mxu0 0.0
    %2517 = vmatpush1.xpose.msra.mxu0 %v2482
    %2518 = vmatprep.subr.mxu0 0.0
    %2519 = vmatpush2.xpose.msra.mxu0 0.0
    %2520 = vmatprep.subr.mxu0 0.0
    %2521 = vmatpush2.xpose.msra.mxu0 0.0
    %2522 = vmatprep.subr.mxu0 0.0
    %2523 = vmatpush2.xpose.msra.mxu0 0.0
    %2524 = vmatprep.subr.mxu0 0.0
    %2525 = vmatpush2.xpose.msra.mxu0 0.0
    %2526 = vmatprep.subr.mxu0 0.0
    %2527 = vmatpush2.xpose.msra.mxu0 0.0
    %2528 = vmatprep.subr.mxu0 0.0
    %2529 = vmatpush2.xpose.msra.mxu0 0.0
    %2530 = vmatprep.subr.mxu0 0.0
    %2531 = vmatpush2.xpose.msra.mxu0 0.0
    %2532 = vmatprep.subr.mxu0 0.0
    %2533 = vmatpush2.xpose.msra.mxu0 0.0
    %2534 = vmatprep.subr.mxu0 0.0
    %2535 = vmatpush2.xpose.msra.mxu0 0.0
    %2536 = vmatprep.subr.mxu0 0.0
    %2537 = vmatpush2.xpose.msra.mxu0 0.0
    %2538 = vmatprep.subr.mxu0 0.0
    %2539 = vmatpush2.xpose.msra.mxu0 0.0
    %2540 = vmatprep.subr.mxu0 0.0
    %2541 = vmatpush2.xpose.msra.mxu0 0.0
    %2542 = vmatprep.subr.mxu0 0.0
    %2543 = vmatpush2.xpose.msra.mxu0 0.0
    %2544 = vmatprep.subr.mxu0 0.0
    %2545 = vmatpush2.xpose.msra.mxu0 0.0
    %2546 = vmatprep.subr.mxu0 0.0
    %2547 = vmatpush2.xpose.msra.mxu0 0.0
    %2548 = vmatprep.subr.mxu0 0.0
    %2549 = vmatpush2.xpose.msra.mxu0 0.0
    %2550 = vmatprep.mubr.f32.mxu0 0.0
    %2551 = vmatmul.mubr.f32.gmra.mxu0 %v2480
    %v2552 = vpop.f32.mrf.mxu0
    %v2553 = vadd.f32 0.0, %v2552
    %v2554 = vpop.f32.mrf.mxu0
    %2555 = vdwg.mxu0
    %v2556 = vsel %vm1578, %v2021, -inf
    %2557 = vmax.xlane.f32.xlu0 %v2556
    %v2558 = vpop.xlane.xlu0 %2557
    %v2559 = vsel %vm1578, %v2097, -inf
    %2560 = vmax.xlane.f32.xlu0 %v2559
    %v2561 = vpop.xlane.xlu0 %2560
    %v2562 = vsel %vm1578, %v2173, -inf
    %2563 = vmax.xlane.f32.xlu0 %v2562
    %v2564 = vpop.xlane.xlu0 %2563
    %v2565 = vsel %vm1578, %v2249, -inf
    %2566 = vmax.xlane.f32.xlu0 %v2565
    %v2567 = vpop.xlane.xlu0 %2566
    %v2568 = vsel %vm1578, %v2325, -inf
    %2569 = vmax.xlane.f32.xlu0 %v2568
    %v2570 = vpop.xlane.xlu0 %2569
    %v2571 = vsel %vm1578, %v2401, -inf
    %2572 = vmax.xlane.f32.xlu0 %v2571
    %v2573 = vpop.xlane.xlu0 %2572
    %v2574 = vsel %vm1578, %v2477, -inf
    %2575 = vmax.xlane.f32.xlu0 %v2574
    %v2576 = vpop.xlane.xlu0 %2575
    %v2577 = vsel %vm1578, %v2553, -inf
    %2578 = vmax.xlane.f32.xlu0 %v2577
    %v2579 = vpop.xlane.xlu0 %2578
    %v2580 = vsub.f32 %v2021, %v2558
    %v2581 = vsub.f32 %v2097, %v2561
    %v2582 = vsub.f32 %v2173, %v2564
    %v2583 = vsub.f32 %v2249, %v2567
    %v2584 = vsub.f32 %v2325, %v2570
    %v2585 = vsub.f32 %v2401, %v2573
    %v2586 = vsub.f32 %v2477, %v2576
    %v2587 = vsub.f32 %v2553, %v2579
    %v2588 = vmul.f32 %v2580, 1.442695
    %v2589 = vpow.pop %v2588
    %v2590 = vmul.f32 %v2581, 1.442695
    %v2591 = vpow.pop %v2590
    %v2592 = vmul.f32 %v2582, 1.442695
    %v2593 = vpow.pop %v2592
    %v2594 = vmul.f32 %v2583, 1.442695
    %v2595 = vpow.pop %v2594
    %v2596 = vmul.f32 %v2584, 1.442695
    %v2597 = vpow.pop %v2596
    %v2598 = vmul.f32 %v2585, 1.442695
    %v2599 = vpow.pop %v2598
    %v2600 = vmul.f32 %v2586, 1.442695
    %v2601 = vpow.pop %v2600
    %v2602 = vmul.f32 %v2587, 1.442695
    %v2603 = vpow.pop %v2602
    %v2604 = vsel %vm1578, %v2589, 0.0
    %2605 = vadd.xlane.f32.xlu0 %v2604
    %v2606 = vpop.xlane.xlu0 %2605
    %v2607 = vsel %vm1578, %v2591, 0.0
    %2608 = vadd.xlane.f32.xlu0 %v2607
    %v2609 = vpop.xlane.xlu0 %2608
    %v2610 = vsel %vm1578, %v2593, 0.0
    %2611 = vadd.xlane.f32.xlu0 %v2610
    %v2612 = vpop.xlane.xlu0 %2611
    %v2613 = vsel %vm1578, %v2595, 0.0
    %2614 = vadd.xlane.f32.xlu0 %v2613
    %v2615 = vpop.xlane.xlu0 %2614
    %v2616 = vsel %vm1578, %v2597, 0.0
    %2617 = vadd.xlane.f32.xlu0 %v2616
    %v2618 = vpop.xlane.xlu0 %2617
    %v2619 = vsel %vm1578, %v2599, 0.0
    %2620 = vadd.xlane.f32.xlu0 %v2619
    %v2621 = vpop.xlane.xlu0 %2620
    %v2622 = vsel %vm1578, %v2601, 0.0
    %2623 = vadd.xlane.f32.xlu0 %v2622
    %v2624 = vpop.xlane.xlu0 %2623
    %v2625 = vsel %vm1578, %v2603, 0.0
    %2626 = vadd.xlane.f32.xlu0 %v2625
    %v2627 = vpop.xlane.xlu0 %2626
    %v2628 = vrcp.pop %v2606
    %v2629 = vrcp.pop %v2609
    %v2630 = vrcp.pop %v2612
    %v2631 = vrcp.pop %v2615
    %v2632 = vrcp.pop %v2618
    %v2633 = vrcp.pop %v2621
    %v2634 = vrcp.pop %v2624
    %v2635 = vrcp.pop %v2627
    %v2636 = vmul.f32 %v2589, %v2628
    %v2637 = vmul.f32 %v2591, %v2629
    %v2638 = vmul.f32 %v2593, %v2630
    %v2639 = vmul.f32 %v2595, %v2631
    %v2640 = vmul.f32 %v2597, %v2632
    %v2641 = vmul.f32 %v2599, %v2633
    %v2642 = vmul.f32 %v2601, %v2634
    %v2643 = vmul.f32 %v2603, %v2635
    %2644 = vrot.lane.b32.xlu0 %v1898, 120
    %v2645 = vpop.permute.xlu0 %2644
    %2646 = vrot.lane.b32.xlu0 %v1903, 120
    %v2647 = vpop.permute.xlu0 %2646
    %v2651 = vsel %vm1578, %v2636, 0
    %2653 = vmatprep.subr.mxu0 0.0
    %2654 = vmatpush1.msra.mxu0 0.0
    %2655 = vmatprep.subr.mxu0 0.0
    %2656 = vmatpush1.msra.mxu0 0.0
    %2657 = vmatprep.subr.mxu0 0.0
    %2658 = vmatpush1.msra.mxu0 0.0
    %2659 = vmatprep.subr.mxu0 0.0
    %2660 = vmatpush1.msra.mxu0 0.0
    %2661 = vmatprep.subr.mxu0 0.0
    %2662 = vmatpush1.msra.mxu0 0.0
    %2663 = vmatprep.subr.mxu0 0.0
    %2664 = vmatpush1.msra.mxu0 0.0
    %2665 = vmatprep.subr.mxu0 0.0
    %2666 = vmatpush1.msra.mxu0 0.0
    %2667 = vmatprep.subr.mxu0 0.0
    %2668 = vmatpush1.msra.mxu0 0.0
    %2669 = vmatprep.subr.mxu0 0.0
    %2670 = vmatpush1.msra.mxu0 0.0
    %2671 = vmatprep.subr.mxu0 0.0
    %2672 = vmatpush1.msra.mxu0 0.0
    %2673 = vmatprep.subr.mxu0 0.0
    %2674 = vmatpush1.msra.mxu0 0.0
    %2675 = vmatprep.subr.mxu0 0.0
    %2676 = vmatpush1.msra.mxu0 0.0
    %2677 = vmatprep.subr.mxu0 0.0
    %2678 = vmatpush1.msra.mxu0 0.0
    %2679 = vmatprep.subr.mxu0 0.0
    %2680 = vmatpush1.msra.mxu0 0.0
    %2681 = vmatprep.subr.mxu0 0.0
    %2682 = vmatpush1.msra.mxu0 %v2647
    %2683 = vmatprep.subr.mxu0 0.0
    %2684 = vmatpush1.msra.mxu0 %v2645
    %2685 = vmatprep.subr.mxu0 0.0
    %2686 = vmatpush2.msra.mxu0 0.0
    %2687 = vmatprep.subr.mxu0 0.0
    %2688 = vmatpush2.msra.mxu0 0.0
    %2689 = vmatprep.subr.mxu0 0.0
    %2690 = vmatpush2.msra.mxu0 0.0
    %2691 = vmatprep.subr.mxu0 0.0
    %2692 = vmatpush2.msra.mxu0 0.0
    %2693 = vmatprep.subr.mxu0 0.0
    %2694 = vmatpush2.msra.mxu0 0.0
    %2695 = vmatprep.subr.mxu0 0.0
    %2696 = vmatpush2.msra.mxu0 0.0
    %2697 = vmatprep.subr.mxu0 0.0
    %2698 = vmatpush2.msra.mxu0 0.0
    %2699 = vmatprep.subr.mxu0 0.0
    %2700 = vmatpush2.msra.mxu0 0.0
    %2701 = vmatprep.subr.mxu0 0.0
    %2702 = vmatpush2.msra.mxu0 0.0
    %2703 = vmatprep.subr.mxu0 0.0
    %2704 = vmatpush2.msra.mxu0 0.0
    %2705 = vmatprep.subr.mxu0 0.0
    %2706 = vmatpush2.msra.mxu0 0.0
    %2707 = vmatprep.subr.mxu0 0.0
    %2708 = vmatpush2.msra.mxu0 0.0
    %2709 = vmatprep.subr.mxu0 0.0
    %2710 = vmatpush2.msra.mxu0 0.0
    %2711 = vmatprep.subr.mxu0 0.0
    %2712 = vmatpush2.msra.mxu0 0.0
    %2713 = vmatprep.subr.mxu0 0.0
    %2714 = vmatpush2.msra.mxu0 0.0
    %2715 = vmatprep.subr.mxu0 0.0
    %2716 = vmatpush2.msra.mxu0 0.0
    %2717 = vmatprep.mubr.f32.mxu0 0.0
    %2718 = vmatmul.mubr.f32.gmra.mxu0 %v2651
    %v2719 = vpop.f32.mrf.mxu0
    %v2720 = vadd.f32 0.0, %v2719
    %v2721 = vpop.f32.mrf.mxu0
    %2722 = vdwg.mxu0
    %2723 = vrot.lane.b32.xlu0 %v1921, 120
    %v2724 = vpop.permute.xlu0 %2723
    %2725 = vrot.lane.b32.xlu0 %v1923, 120
    %v2726 = vpop.permute.xlu0 %2725
    %v2730 = vsel %vm1578, %v2637, 0
    %2732 = vmatprep.subr.mxu0 0.0
    %2733 = vmatpush1.msra.mxu0 0.0
    %2734 = vmatprep.subr.mxu0 0.0
    %2735 = vmatpush1.msra.mxu0 0.0
    %2736 = vmatprep.subr.mxu0 0.0
    %2737 = vmatpush1.msra.mxu0 0.0
    %2738 = vmatprep.subr.mxu0 0.0
    %2739 = vmatpush1.msra.mxu0 0.0
    %2740 = vmatprep.subr.mxu0 0.0
    %2741 = vmatpush1.msra.mxu0 0.0
    %2742 = vmatprep.subr.mxu0 0.0
    %2743 = vmatpush1.msra.mxu0 0.0
    %2744 = vmatprep.subr.mxu0 0.0
    %2745 = vmatpush1.msra.mxu0 0.0
    %2746 = vmatprep.subr.mxu0 0.0
    %2747 = vmatpush1.msra.mxu0 0.0
    %2748 = vmatprep.subr.mxu0 0.0
    %2749 = vmatpush1.msra.mxu0 0.0
    %2750 = vmatprep.subr.mxu0 0.0
    %2751 = vmatpush1.msra.mxu0 0.0
    %2752 = vmatprep.subr.mxu0 0.0
    %2753 = vmatpush1.msra.mxu0 0.0
    %2754 = vmatprep.subr.mxu0 0.0
    %2755 = vmatpush1.msra.mxu0 0.0
    %2756 = vmatprep.subr.mxu0 0.0
    %2757 = vmatpush1.msra.mxu0 0.0
    %2758 = vmatprep.subr.mxu0 0.0
    %2759 = vmatpush1.msra.mxu0 0.0
    %2760 = vmatprep.subr.mxu0 0.0
    %2761 = vmatpush1.msra.mxu0 %v2726
    %2762 = vmatprep.subr.mxu0 0.0
    %2763 = vmatpush1.msra.mxu0 %v2724
    %2764 = vmatprep.subr.mxu0 0.0
    %2765 = vmatpush2.msra.mxu0 0.0
    %2766 = vmatprep.subr.mxu0 0.0
    %2767 = vmatpush2.msra.mxu0 0.0
    %2768 = vmatprep.subr.mxu0 0.0
    %2769 = vmatpush2.msra.mxu0 0.0
    %2770 = vmatprep.subr.mxu0 0.0
    %2771 = vmatpush2.msra.mxu0 0.0
    %2772 = vmatprep.subr.mxu0 0.0
    %2773 = vmatpush2.msra.mxu0 0.0
    %2774 = vmatprep.subr.mxu0 0.0
    %2775 = vmatpush2.msra.mxu0 0.0
    %2776 = vmatprep.subr.mxu0 0.0
    %2777 = vmatpush2.msra.mxu0 0.0
    %2778 = vmatprep.subr.mxu0 0.0
    %2779 = vmatpush2.msra.mxu0 0.0
    %2780 = vmatprep.subr.mxu0 0.0
    %2781 = vmatpush2.msra.mxu0 0.0
    %2782 = vmatprep.subr.mxu0 0.0
    %2783 = vmatpush2.msra.mxu0 0.0
    %2784 = vmatprep.subr.mxu0 0.0
    %2785 = vmatpush2.msra.mxu0 0.0
    %2786 = vmatprep.subr.mxu0 0.0
    %2787 = vmatpush2.msra.mxu0 0.0
    %2788 = vmatprep.subr.mxu0 0.0
    %2789 = vmatpush2.msra.mxu0 0.0
    %2790 = vmatprep.subr.mxu0 0.0
    %2791 = vmatpush2.msra.mxu0 0.0
    %2792 = vmatprep.subr.mxu0 0.0
    %2793 = vmatpush2.msra.mxu0 0.0
    %2794 = vmatprep.subr.mxu0 0.0
    %2795 = vmatpush2.msra.mxu0 0.0
    %2796 = vmatprep.mubr.f32.mxu0 0.0
    %2797 = vmatmul.mubr.f32.gmra.mxu0 %v2730
    %v2798 = vpop.f32.mrf.mxu0
    %v2799 = vadd.f32 0.0, %v2798
    %v2800 = vpop.f32.mrf.mxu0
    %2801 = vdwg.mxu0
    %2802 = vrot.lane.b32.xlu0 %v1929, 120
    %v2803 = vpop.permute.xlu0 %2802
    %2804 = vrot.lane.b32.xlu0 %v1931, 120
    %v2805 = vpop.permute.xlu0 %2804
    %v2809 = vsel %vm1578, %v2638, 0
    %2811 = vmatprep.subr.mxu0 0.0
    %2812 = vmatpush1.msra.mxu0 0.0
    %2813 = vmatprep.subr.mxu0 0.0
    %2814 = vmatpush1.msra.mxu0 0.0
    %2815 = vmatprep.subr.mxu0 0.0
    %2816 = vmatpush1.msra.mxu0 0.0
    %2817 = vmatprep.subr.mxu0 0.0
    %2818 = vmatpush1.msra.mxu0 0.0
    %2819 = vmatprep.subr.mxu0 0.0
    %2820 = vmatpush1.msra.mxu0 0.0
    %2821 = vmatprep.subr.mxu0 0.0
    %2822 = vmatpush1.msra.mxu0 0.0
    %2823 = vmatprep.subr.mxu0 0.0
    %2824 = vmatpush1.msra.mxu0 0.0
    %2825 = vmatprep.subr.mxu0 0.0
    %2826 = vmatpush1.msra.mxu0 0.0
    %2827 = vmatprep.subr.mxu0 0.0
    %2828 = vmatpush1.msra.mxu0 0.0
    %2829 = vmatprep.subr.mxu0 0.0
    %2830 = vmatpush1.msra.mxu0 0.0
    %2831 = vmatprep.subr.mxu0 0.0
    %2832 = vmatpush1.msra.mxu0 0.0
    %2833 = vmatprep.subr.mxu0 0.0
    %2834 = vmatpush1.msra.mxu0 0.0
    %2835 = vmatprep.subr.mxu0 0.0
    %2836 = vmatpush1.msra.mxu0 0.0
    %2837 = vmatprep.subr.mxu0 0.0
    %2838 = vmatpush1.msra.mxu0 0.0
    %2839 = vmatprep.subr.mxu0 0.0
    %2840 = vmatpush1.msra.mxu0 %v2805
    %2841 = vmatprep.subr.mxu0 0.0
    %2842 = vmatpush1.msra.mxu0 %v2803
    %2843 = vmatprep.subr.mxu0 0.0
    %2844 = vmatpush2.msra.mxu0 0.0
    %2845 = vmatprep.subr.mxu0 0.0
    %2846 = vmatpush2.msra.mxu0 0.0
    %2847 = vmatprep.subr.mxu0 0.0
    %2848 = vmatpush2.msra.mxu0 0.0
    %2849 = vmatprep.subr.mxu0 0.0
    %2850 = vmatpush2.msra.mxu0 0.0
    %2851 = vmatprep.subr.mxu0 0.0
    %2852 = vmatpush2.msra.mxu0 0.0
    %2853 = vmatprep.subr.mxu0 0.0
    %2854 = vmatpush2.msra.mxu0 0.0
    %2855 = vmatprep.subr.mxu0 0.0
    %2856 = vmatpush2.msra.mxu0 0.0
    %2857 = vmatprep.subr.mxu0 0.0
    %2858 = vmatpush2.msra.mxu0 0.0
    %2859 = vmatprep.subr.mxu0 0.0
    %2860 = vmatpush2.msra.mxu0 0.0
    %2861 = vmatprep.subr.mxu0 0.0
    %2862 = vmatpush2.msra.mxu0 0.0
    %2863 = vmatprep.subr.mxu0 0.0
    %2864 = vmatpush2.msra.mxu0 0.0
    %2865 = vmatprep.subr.mxu0 0.0
    %2866 = vmatpush2.msra.mxu0 0.0
    %2867 = vmatprep.subr.mxu0 0.0
    %2868 = vmatpush2.msra.mxu0 0.0
    %2869 = vmatprep.subr.mxu0 0.0
    %2870 = vmatpush2.msra.mxu0 0.0
    %2871 = vmatprep.subr.mxu0 0.0
    %2872 = vmatpush2.msra.mxu0 0.0
    %2873 = vmatprep.subr.mxu0 0.0
    %2874 = vmatpush2.msra.mxu0 0.0
    %2875 = vmatprep.mubr.f32.mxu0 0.0
    %2876 = vmatmul.mubr.f32.gmra.mxu0 %v2809
    %v2877 = vpop.f32.mrf.mxu0
    %v2878 = vadd.f32 0.0, %v2877
    %v2879 = vpop.f32.mrf.mxu0
    %2880 = vdwg.mxu0
    %2881 = vrot.lane.b32.xlu0 %v1937, 120
    %v2882 = vpop.permute.xlu0 %2881
    %2883 = vrot.lane.b32.xlu0 %v1939, 120
    %v2884 = vpop.permute.xlu0 %2883
    %v2888 = vsel %vm1578, %v2639, 0
    %2890 = vmatprep.subr.mxu0 0.0
    %2891 = vmatpush1.msra.mxu0 0.0
    %2892 = vmatprep.subr.mxu0 0.0
    %2893 = vmatpush1.msra.mxu0 0.0
    %2894 = vmatprep.subr.mxu0 0.0
    %2895 = vmatpush1.msra.mxu0 0.0
    %2896 = vmatprep.subr.mxu0 0.0
    %2897 = vmatpush1.msra.mxu0 0.0
    %2898 = vmatprep.subr.mxu0 0.0
    %2899 = vmatpush1.msra.mxu0 0.0
    %2900 = vmatprep.subr.mxu0 0.0
    %2901 = vmatpush1.msra.mxu0 0.0
    %2902 = vmatprep.subr.mxu0 0.0
    %2903 = vmatpush1.msra.mxu0 0.0
    %2904 = vmatprep.subr.mxu0 0.0
    %2905 = vmatpush1.msra.mxu0 0.0
    %2906 = vmatprep.subr.mxu0 0.0
    %2907 = vmatpush1.msra.mxu0 0.0
    %2908 = vmatprep.subr.mxu0 0.0
    %2909 = vmatpush1.msra.mxu0 0.0
    %2910 = vmatprep.subr.mxu0 0.0
    %2911 = vmatpush1.msra.mxu0 0.0
    %2912 = vmatprep.subr.mxu0 0.0
    %2913 = vmatpush1.msra.mxu0 0.0
    %2914 = vmatprep.subr.mxu0 0.0
    %2915 = vmatpush1.msra.mxu0 0.0
    %2916 = vmatprep.subr.mxu0 0.0
    %2917 = vmatpush1.msra.mxu0 0.0
    %2918 = vmatprep.subr.mxu0 0.0
    %2919 = vmatpush1.msra.mxu0 %v2884
    %2920 = vmatprep.subr.mxu0 0.0
    %2921 = vmatpush1.msra.mxu0 %v2882
    %2922 = vmatprep.subr.mxu0 0.0
    %2923 = vmatpush2.msra.mxu0 0.0
    %2924 = vmatprep.subr.mxu0 0.0
    %2925 = vmatpush2.msra.mxu0 0.0
    %2926 = vmatprep.subr.mxu0 0.0
    %2927 = vmatpush2.msra.mxu0 0.0
    %2928 = vmatprep.subr.mxu0 0.0
    %2929 = vmatpush2.msra.mxu0 0.0
    %2930 = vmatprep.subr.mxu0 0.0
    %2931 = vmatpush2.msra.mxu0 0.0
    %2932 = vmatprep.subr.mxu0 0.0
    %2933 = vmatpush2.msra.mxu0 0.0
    %2934 = vmatprep.subr.mxu0 0.0
    %2935 = vmatpush2.msra.mxu0 0.0
    %2936 = vmatprep.subr.mxu0 0.0
    %2937 = vmatpush2.msra.mxu0 0.0
    %2938 = vmatprep.subr.mxu0 0.0
    %2939 = vmatpush2.msra.mxu0 0.0
    %2940 = vmatprep.subr.mxu0 0.0
    %2941 = vmatpush2.msra.mxu0 0.0
    %2942 = vmatprep.subr.mxu0 0.0
    %2943 = vmatpush2.msra.mxu0 0.0
    %2944 = vmatprep.subr.mxu0 0.0
    %2945 = vmatpush2.msra.mxu0 0.0
    %2946 = vmatprep.subr.mxu0 0.0
    %2947 = vmatpush2.msra.mxu0 0.0
    %2948 = vmatprep.subr.mxu0 0.0
    %2949 = vmatpush2.msra.mxu0 0.0
    %2950 = vmatprep.subr.mxu0 0.0
    %2951 = vmatpush2.msra.mxu0 0.0
    %2952 = vmatprep.subr.mxu0 0.0
    %2953 = vmatpush2.msra.mxu0 0.0
    %2954 = vmatprep.mubr.f32.mxu0 0.0
    %2955 = vmatmul.mubr.f32.gmra.mxu0 %v2888
    %v2956 = vpop.f32.mrf.mxu0
    %v2957 = vadd.f32 0.0, %v2956
    %v2958 = vpop.f32.mrf.mxu0
    %2959 = vdwg.mxu0
    %2960 = vrot.lane.b32.xlu0 %v1908, 120
    %v2961 = vpop.permute.xlu0 %2960
    %2962 = vrot.lane.b32.xlu0 %v1913, 120
    %v2963 = vpop.permute.xlu0 %2962
    %v2967 = vsel %vm1578, %v2640, 0
    %2969 = vmatprep.subr.mxu0 0.0
    %2970 = vmatpush1.msra.mxu0 0.0
    %2971 = vmatprep.subr.mxu0 0.0
    %2972 = vmatpush1.msra.mxu0 0.0
    %2973 = vmatprep.subr.mxu0 0.0
    %2974 = vmatpush1.msra.mxu0 0.0
    %2975 = vmatprep.subr.mxu0 0.0
    %2976 = vmatpush1.msra.mxu0 0.0
    %2977 = vmatprep.subr.mxu0 0.0
    %2978 = vmatpush1.msra.mxu0 0.0
    %2979 = vmatprep.subr.mxu0 0.0
    %2980 = vmatpush1.msra.mxu0 0.0
    %2981 = vmatprep.subr.mxu0 0.0
    %2982 = vmatpush1.msra.mxu0 0.0
    %2983 = vmatprep.subr.mxu0 0.0
    %2984 = vmatpush1.msra.mxu0 0.0
    %2985 = vmatprep.subr.mxu0 0.0
    %2986 = vmatpush1.msra.mxu0 0.0
    %2987 = vmatprep.subr.mxu0 0.0
    %2988 = vmatpush1.msra.mxu0 0.0
    %2989 = vmatprep.subr.mxu0 0.0
    %2990 = vmatpush1.msra.mxu0 0.0
    %2991 = vmatprep.subr.mxu0 0.0
    %2992 = vmatpush1.msra.mxu0 0.0
    %2993 = vmatprep.subr.mxu0 0.0
    %2994 = vmatpush1.msra.mxu0 0.0
    %2995 = vmatprep.subr.mxu0 0.0
    %2996 = vmatpush1.msra.mxu0 0.0
    %2997 = vmatprep.subr.mxu0 0.0
    %2998 = vmatpush1.msra.mxu0 %v2963
    %2999 = vmatprep.subr.mxu0 0.0
    %3000 = vmatpush1.msra.mxu0 %v2961
    %3001 = vmatprep.subr.mxu0 0.0
    %3002 = vmatpush2.msra.mxu0 0.0
    %3003 = vmatprep.subr.mxu0 0.0
    %3004 = vmatpush2.msra.mxu0 0.0
    %3005 = vmatprep.subr.mxu0 0.0
    %3006 = vmatpush2.msra.mxu0 0.0
    %3007 = vmatprep.subr.mxu0 0.0
    %3008 = vmatpush2.msra.mxu0 0.0
    %3009 = vmatprep.subr.mxu0 0.0
    %3010 = vmatpush2.msra.mxu0 0.0
    %3011 = vmatprep.subr.mxu0 0.0
    %3012 = vmatpush2.msra.mxu0 0.0
    %3013 = vmatprep.subr.mxu0 0.0
    %3014 = vmatpush2.msra.mxu0 0.0
    %3015 = vmatprep.subr.mxu0 0.0
    %3016 = vmatpush2.msra.mxu0 0.0
    %3017 = vmatprep.subr.mxu0 0.0
    %3018 = vmatpush2.msra.mxu0 0.0
    %3019 = vmatprep.subr.mxu0 0.0
    %3020 = vmatpush2.msra.mxu0 0.0
    %3021 = vmatprep.subr.mxu0 0.0
    %3022 = vmatpush2.msra.mxu0 0.0
    %3023 = vmatprep.subr.mxu0 0.0
    %3024 = vmatpush2.msra.mxu0 0.0
    %3025 = vmatprep.subr.mxu0 0.0
    %3026 = vmatpush2.msra.mxu0 0.0
    %3027 = vmatprep.subr.mxu0 0.0
    %3028 = vmatpush2.msra.mxu0 0.0
    %3029 = vmatprep.subr.mxu0 0.0
    %3030 = vmatpush2.msra.mxu0 0.0
    %3031 = vmatprep.subr.mxu0 0.0
    %3032 = vmatpush2.msra.mxu0 0.0
    %3033 = vmatprep.mubr.f32.mxu0 0.0
    %3034 = vmatmul.mubr.f32.gmra.mxu0 %v2967
    %v3035 = vpop.f32.mrf.mxu0
    %v3036 = vadd.f32 0.0, %v3035
    %v3037 = vpop.f32.mrf.mxu0
    %3038 = vdwg.mxu0
    %3039 = vrot.lane.b32.xlu0 %v1925, 120
    %v3040 = vpop.permute.xlu0 %3039
    %3041 = vrot.lane.b32.xlu0 %v1927, 120
    %v3042 = vpop.permute.xlu0 %3041
    %v3046 = vsel %vm1578, %v2641, 0
    %3048 = vmatprep.subr.mxu0 0.0
    %3049 = vmatpush1.msra.mxu0 0.0
    %3050 = vmatprep.subr.mxu0 0.0
    %3051 = vmatpush1.msra.mxu0 0.0
    %3052 = vmatprep.subr.mxu0 0.0
    %3053 = vmatpush1.msra.mxu0 0.0
    %3054 = vmatprep.subr.mxu0 0.0
    %3055 = vmatpush1.msra.mxu0 0.0
    %3056 = vmatprep.subr.mxu0 0.0
    %3057 = vmatpush1.msra.mxu0 0.0
    %3058 = vmatprep.subr.mxu0 0.0
    %3059 = vmatpush1.msra.mxu0 0.0
    %3060 = vmatprep.subr.mxu0 0.0
    %3061 = vmatpush1.msra.mxu0 0.0
    %3062 = vmatprep.subr.mxu0 0.0
    %3063 = vmatpush1.msra.mxu0 0.0
    %3064 = vmatprep.subr.mxu0 0.0
    %3065 = vmatpush1.msra.mxu0 0.0
    %3066 = vmatprep.subr.mxu0 0.0
    %3067 = vmatpush1.msra.mxu0 0.0
    %3068 = vmatprep.subr.mxu0 0.0
    %3069 = vmatpush1.msra.mxu0 0.0
    %3070 = vmatprep.subr.mxu0 0.0
    %3071 = vmatpush1.msra.mxu0 0.0
    %3072 = vmatprep.subr.mxu0 0.0
    %3073 = vmatpush1.msra.mxu0 0.0
    %3074 = vmatprep.subr.mxu0 0.0
    %3075 = vmatpush1.msra.mxu0 0.0
    %3076 = vmatprep.subr.mxu0 0.0
    %3077 = vmatpush1.msra.mxu0 %v3042
    %3078 = vmatprep.subr.mxu0 0.0
    %3079 = vmatpush1.msra.mxu0 %v3040
    %3080 = vmatprep.subr.mxu0 0.0
    %3081 = vmatpush2.msra.mxu0 0.0
    %3082 = vmatprep.subr.mxu0 0.0
    %3083 = vmatpush2.msra.mxu0 0.0
    %3084 = vmatprep.subr.mxu0 0.0
    %3085 = vmatpush2.msra.mxu0 0.0
    %3086 = vmatprep.subr.mxu0 0.0
    %3087 = vmatpush2.msra.mxu0 0.0
    %3088 = vmatprep.subr.mxu0 0.0
    %3089 = vmatpush2.msra.mxu0 0.0
    %3090 = vmatprep.subr.mxu0 0.0
    %3091 = vmatpush2.msra.mxu0 0.0
    %3092 = vmatprep.subr.mxu0 0.0
    %3093 = vmatpush2.msra.mxu0 0.0
    %3094 = vmatprep.subr.mxu0 0.0
    %3095 = vmatpush2.msra.mxu0 0.0
    %3096 = vmatprep.subr.mxu0 0.0
    %3097 = vmatpush2.msra.mxu0 0.0
    %3098 = vmatprep.subr.mxu0 0.0
    %3099 = vmatpush2.msra.mxu0 0.0
    %3100 = vmatprep.subr.mxu0 0.0
    %3101 = vmatpush2.msra.mxu0 0.0
    %3102 = vmatprep.subr.mxu0 0.0
    %3103 = vmatpush2.msra.mxu0 0.0
    %3104 = vmatprep.subr.mxu0 0.0
    %3105 = vmatpush2.msra.mxu0 0.0
    %3106 = vmatprep.subr.mxu0 0.0
    %3107 = vmatpush2.msra.mxu0 0.0
    %3108 = vmatprep.subr.mxu0 0.0
    %3109 = vmatpush2.msra.mxu0 0.0
    %3110 = vmatprep.subr.mxu0 0.0
    %3111 = vmatpush2.msra.mxu0 0.0
    %3112 = vmatprep.mubr.f32.mxu0 0.0
    %3113 = vmatmul.mubr.f32.gmra.mxu0 %v3046
    %v3114 = vpop.f32.mrf.mxu0
    %v3115 = vadd.f32 0.0, %v3114
    %v3116 = vpop.f32.mrf.mxu0
    %3117 = vdwg.mxu0
    %3118 = vrot.lane.b32.xlu0 %v1933, 120
    %v3119 = vpop.permute.xlu0 %3118
    %3120 = vrot.lane.b32.xlu0 %v1935, 120
    %v3121 = vpop.permute.xlu0 %3120
    %v3125 = vsel %vm1578, %v2642, 0
    %3127 = vmatprep.subr.mxu0 0.0
    %3128 = vmatpush1.msra.mxu0 0.0
    %3129 = vmatprep.subr.mxu0 0.0
    %3130 = vmatpush1.msra.mxu0 0.0
    %3131 = vmatprep.subr.mxu0 0.0
    %3132 = vmatpush1.msra.mxu0 0.0
    %3133 = vmatprep.subr.mxu0 0.0
    %3134 = vmatpush1.msra.mxu0 0.0
    %3135 = vmatprep.subr.mxu0 0.0
    %3136 = vmatpush1.msra.mxu0 0.0
    %3137 = vmatprep.subr.mxu0 0.0
    %3138 = vmatpush1.msra.mxu0 0.0
    %3139 = vmatprep.subr.mxu0 0.0
    %3140 = vmatpush1.msra.mxu0 0.0
    %3141 = vmatprep.subr.mxu0 0.0
    %3142 = vmatpush1.msra.mxu0 0.0
    %3143 = vmatprep.subr.mxu0 0.0
    %3144 = vmatpush1.msra.mxu0 0.0
    %3145 = vmatprep.subr.mxu0 0.0
    %3146 = vmatpush1.msra.mxu0 0.0
    %3147 = vmatprep.subr.mxu0 0.0
    %3148 = vmatpush1.msra.mxu0 0.0
    %3149 = vmatprep.subr.mxu0 0.0
    %3150 = vmatpush1.msra.mxu0 0.0
    %3151 = vmatprep.subr.mxu0 0.0
    %3152 = vmatpush1.msra.mxu0 0.0
    %3153 = vmatprep.subr.mxu0 0.0
    %3154 = vmatpush1.msra.mxu0 0.0
    %3155 = vmatprep.subr.mxu0 0.0
    %3156 = vmatpush1.msra.mxu0 %v3121
    %3157 = vmatprep.subr.mxu0 0.0
    %3158 = vmatpush1.msra.mxu0 %v3119
    %3159 = vmatprep.subr.mxu0 0.0
    %3160 = vmatpush2.msra.mxu0 0.0
    %3161 = vmatprep.subr.mxu0 0.0
    %3162 = vmatpush2.msra.mxu0 0.0
    %3163 = vmatprep.subr.mxu0 0.0
    %3164 = vmatpush2.msra.mxu0 0.0
    %3165 = vmatprep.subr.mxu0 0.0
    %3166 = vmatpush2.msra.mxu0 0.0
    %3167 = vmatprep.subr.mxu0 0.0
    %3168 = vmatpush2.msra.mxu0 0.0
    %3169 = vmatprep.subr.mxu0 0.0
    %3170 = vmatpush2.msra.mxu0 0.0
    %3171 = vmatprep.subr.mxu0 0.0
    %3172 = vmatpush2.msra.mxu0 0.0
    %3173 = vmatprep.subr.mxu0 0.0
    %3174 = vmatpush2.msra.mxu0 0.0
    %3175 = vmatprep.subr.mxu0 0.0
    %3176 = vmatpush2.msra.mxu0 0.0
    %3177 = vmatprep.subr.mxu0 0.0
    %3178 = vmatpush2.msra.mxu0 0.0
    %3179 = vmatprep.subr.mxu0 0.0
    %3180 = vmatpush2.msra.mxu0 0.0
    %3181 = vmatprep.subr.mxu0 0.0
    %3182 = vmatpush2.msra.mxu0 0.0
    %3183 = vmatprep.subr.mxu0 0.0
    %3184 = vmatpush2.msra.mxu0 0.0
    %3185 = vmatprep.subr.mxu0 0.0
    %3186 = vmatpush2.msra.mxu0 0.0
    %3187 = vmatprep.subr.mxu0 0.0
    %3188 = vmatpush2.msra.mxu0 0.0
    %3189 = vmatprep.subr.mxu0 0.0
    %3190 = vmatpush2.msra.mxu0 0.0
    %3191 = vmatprep.mubr.f32.mxu0 0.0
    %3192 = vmatmul.mubr.f32.gmra.mxu0 %v3125
    %v3193 = vpop.f32.mrf.mxu0
    %v3194 = vadd.f32 0.0, %v3193
    %v3195 = vpop.f32.mrf.mxu0
    %3196 = vdwg.mxu0
    %3197 = vrot.lane.b32.xlu0 %v1941, 120
    %v3198 = vpop.permute.xlu0 %3197
    %3199 = vrot.lane.b32.xlu0 %v1943, 120
    %v3200 = vpop.permute.xlu0 %3199
    %v3204 = vsel %vm1578, %v2643, 0
    %3206 = vmatprep.subr.mxu0 0.0
    %3207 = vmatpush1.msra.mxu0 0.0
    %3208 = vmatprep.subr.mxu0 0.0
    %3209 = vmatpush1.msra.mxu0 0.0
    %3210 = vmatprep.subr.mxu0 0.0
    %3211 = vmatpush1.msra.mxu0 0.0
    %3212 = vmatprep.subr.mxu0 0.0
    %3213 = vmatpush1.msra.mxu0 0.0
    %3214 = vmatprep.subr.mxu0 0.0
    %3215 = vmatpush1.msra.mxu0 0.0
    %3216 = vmatprep.subr.mxu0 0.0
    %3217 = vmatpush1.msra.mxu0 0.0
    %3218 = vmatprep.subr.mxu0 0.0
    %3219 = vmatpush1.msra.mxu0 0.0
    %3220 = vmatprep.subr.mxu0 0.0
    %3221 = vmatpush1.msra.mxu0 0.0
    %3222 = vmatprep.subr.mxu0 0.0
    %3223 = vmatpush1.msra.mxu0 0.0
    %3224 = vmatprep.subr.mxu0 0.0
    %3225 = vmatpush1.msra.mxu0 0.0
    %3226 = vmatprep.subr.mxu0 0.0
    %3227 = vmatpush1.msra.mxu0 0.0
    %3228 = vmatprep.subr.mxu0 0.0
    %3229 = vmatpush1.msra.mxu0 0.0
    %3230 = vmatprep.subr.mxu0 0.0
    %3231 = vmatpush1.msra.mxu0 0.0
    %3232 = vmatprep.subr.mxu0 0.0
    %3233 = vmatpush1.msra.mxu0 0.0
    %3234 = vmatprep.subr.mxu0 0.0
    %3235 = vmatpush1.msra.mxu0 %v3200
    %3236 = vmatprep.subr.mxu0 0.0
    %3237 = vmatpush1.msra.mxu0 %v3198
    %3238 = vmatprep.subr.mxu0 0.0
    %3239 = vmatpush2.msra.mxu0 0.0
    %3240 = vmatprep.subr.mxu0 0.0
    %3241 = vmatpush2.msra.mxu0 0.0
    %3242 = vmatprep.subr.mxu0 0.0
    %3243 = vmatpush2.msra.mxu0 0.0
    %3244 = vmatprep.subr.mxu0 0.0
    %3245 = vmatpush2.msra.mxu0 0.0
    %3246 = vmatprep.subr.mxu0 0.0
    %3247 = vmatpush2.msra.mxu0 0.0
    %3248 = vmatprep.subr.mxu0 0.0
    %3249 = vmatpush2.msra.mxu0 0.0
    %3250 = vmatprep.subr.mxu0 0.0
    %3251 = vmatpush2.msra.mxu0 0.0
    %3252 = vmatprep.subr.mxu0 0.0
    %3253 = vmatpush2.msra.mxu0 0.0
    %3254 = vmatprep.subr.mxu0 0.0
    %3255 = vmatpush2.msra.mxu0 0.0
    %3256 = vmatprep.subr.mxu0 0.0
    %3257 = vmatpush2.msra.mxu0 0.0
    %3258 = vmatprep.subr.mxu0 0.0
    %3259 = vmatpush2.msra.mxu0 0.0
    %3260 = vmatprep.subr.mxu0 0.0
    %3261 = vmatpush2.msra.mxu0 0.0
    %3262 = vmatprep.subr.mxu0 0.0
    %3263 = vmatpush2.msra.mxu0 0.0
    %3264 = vmatprep.subr.mxu0 0.0
    %3265 = vmatpush2.msra.mxu0 0.0
    %3266 = vmatprep.subr.mxu0 0.0
    %3267 = vmatpush2.msra.mxu0 0.0
    %3268 = vmatprep.subr.mxu0 0.0
    %3269 = vmatpush2.msra.mxu0 0.0
    %3270 = vmatprep.mubr.f32.mxu0 0.0
    %3271 = vmatmul.mubr.f32.gmra.mxu0 %v3204
    %v3272 = vpop.f32.mrf.mxu0
    %v3273 = vadd.f32 0.0, %v3272
    %v3274 = vpop.f32.mrf.mxu0
    %3275 = vdwg.mxu0
    %3278 = vrot.lane.b32.xlu0 %v2799, 8
    %v3279 = vpop.permute.xlu0 %3278
    %3280 = vrot.lane.b32.xlu0 %v3115, 8
    %v3281 = vpop.permute.xlu0 %3280
    %3286 = vrot.lane.b32.xlu0 %v2878, 16
    %v3287 = vpop.permute.xlu0 %3286
    %3288 = vrot.lane.b32.xlu0 %v3194, 16
    %v3289 = vpop.permute.xlu0 %3288
    %3294 = vrot.lane.b32.xlu0 %v2957, 24
    %v3295 = vpop.permute.xlu0 %3294
    %3296 = vrot.lane.b32.xlu0 %v3273, 24
    %v3297 = vpop.permute.xlu0 %3296
    %v3300 = vsel %vm249, %v2720, %v3279
    %v3301 = vsel %vm249, %v3036, %v3281
    %v3302 = vsel %vm1578, %v3300, %v3287
    %v3303 = vsel %vm1578, %v3301, %v3289
    %v3304 = vsel %vm1581, %v3302, %v3295
    %v3305 = vsel %vm1581, %v3303, %v3297
    %v3307 = vlaneseq
    %v3308 = vshrl.u32 %v3307, 7
    %v3309 = vsub.s32 0, %v3308
    %v3310 = vrot.slane %v136, %v3309
    %v3313 = vsel %vm147, %v3304, 0
    %v3316 = vsel %vm147, %v3305, 0
    %3318 = vmatprep.subr.mxu0 0.0
    %3319 = vmatpush1.msra.mxu0 0.0
    %3320 = vmatprep.subr.mxu0 0.0
    %3321 = vmatpush1.msra.mxu0 0.0
    %3322 = vmatprep.subr.mxu0 0.0
    %3323 = vmatpush1.msra.mxu0 0.0
    %3324 = vmatprep.subr.mxu0 0.0
    %3325 = vmatpush1.msra.mxu0 0.0
    %3326 = vmatprep.subr.mxu0 0.0
    %3327 = vmatpush1.msra.mxu0 0.0
    %3328 = vmatprep.subr.mxu0 0.0
    %3329 = vmatpush1.msra.mxu0 0.0
    %3330 = vmatprep.subr.mxu0 0.0
    %3331 = vmatpush1.msra.mxu0 0.0
    %3332 = vmatprep.subr.mxu0 0.0
    %3333 = vmatpush1.msra.mxu0 0.0
    %3334 = vmatprep.subr.mxu0 0.0
    %3335 = vmatpush1.msra.mxu0 0.0
    %3336 = vmatprep.subr.mxu0 0.0
    %3337 = vmatpush1.msra.mxu0 0.0
    %3338 = vmatprep.subr.mxu0 0.0
    %3339 = vmatpush1.msra.mxu0 0.0
    %3340 = vmatprep.subr.mxu0 0.0
    %3341 = vmatpush1.msra.mxu0 0.0
    %3342 = vmatprep.subr.mxu0 0.0
    %3343 = vmatpush1.msra.mxu0 %v1947
    %3344 = vmatprep.subr.mxu0 0.0
    %3345 = vmatpush1.msra.mxu0 %v1946
    %3346 = vmatprep.subr.mxu0 0.0
    %3347 = vmatpush1.msra.mxu0 %v1945
    %3348 = vmatprep.subr.mxu0 0.0
    %3349 = vmatpush1.msra.mxu0 %v1944
    %3350 = vmatprep.subr.mxu0 0.0
    %3351 = vmatpush2.msra.mxu0 0.0
    %3352 = vmatprep.subr.mxu0 0.0
    %3353 = vmatpush2.msra.mxu0 0.0
    %3354 = vmatprep.subr.mxu0 0.0
    %3355 = vmatpush2.msra.mxu0 0.0
    %3356 = vmatprep.subr.mxu0 0.0
    %3357 = vmatpush2.msra.mxu0 0.0
    %3358 = vmatprep.subr.mxu0 0.0
    %3359 = vmatpush2.msra.mxu0 0.0
    %3360 = vmatprep.subr.mxu0 0.0
    %3361 = vmatpush2.msra.mxu0 0.0
    %3362 = vmatprep.subr.mxu0 0.0
    %3363 = vmatpush2.msra.mxu0 0.0
    %3364 = vmatprep.subr.mxu0 0.0
    %3365 = vmatpush2.msra.mxu0 0.0
    %3366 = vmatprep.subr.mxu0 0.0
    %3367 = vmatpush2.msra.mxu0 0.0
    %3368 = vmatprep.subr.mxu0 0.0
    %3369 = vmatpush2.msra.mxu0 0.0
    %3370 = vmatprep.subr.mxu0 0.0
    %3371 = vmatpush2.msra.mxu0 0.0
    %3372 = vmatprep.subr.mxu0 0.0
    %3373 = vmatpush2.msra.mxu0 0.0
    %3374 = vmatprep.subr.mxu0 0.0
    %3375 = vmatpush2.msra.mxu0 0.0
    %3376 = vmatprep.subr.mxu0 0.0
    %3377 = vmatpush2.msra.mxu0 0.0
    %3378 = vmatprep.subr.mxu0 0.0
    %3379 = vmatpush2.msra.mxu0 0.0
    %3380 = vmatprep.subr.mxu0 0.0
    %3381 = vmatpush2.msra.mxu0 0.0
    %3382 = vmatprep.mubr.f32.mxu0 0.0
    %3383 = vmatmul.mubr.f32.gmra.mxu0 %v3313
    %v3384 = vpop.f32.mrf.mxu0
    %v3385 = vadd.f32 %v3310, %v3384
    %v3386 = vpop.f32.mrf.mxu0
    %3387 = vmatprep.mubr.f32.mxu0 0.0
    %3388 = vmatmul.mubr.f32.gmra.mxu0 %v3316
    %v3389 = vpop.f32.mrf.mxu0
    %v3390 = vadd.f32 %v3310, %v3389
    %v3391 = vpop.f32.mrf.mxu0
    %3392 = vdwg.mxu0
    %v3393 = vadd.f32 %v3385, %v1714
    %v3394 = vadd.f32 %v3390, %v1715
    %v3395 = vsel %vm147, %v3393, 0.0
    %3396 = vadd.xlane.f32.xlu0 %v3395
    %v3397 = vpop.xlane.xlu0 %3396
    %v3398 = vsel %vm147, %v3394, 0.0
    %3399 = vadd.xlane.f32.xlu0 %v3398
    %v3400 = vpop.xlane.xlu0 %3399
    %v3401 = vmul.f32 %v3397, %v1679
    %v3402 = vmul.f32 %v3400, %v1679
    %v3403 = vsub.f32 %v3393, %v3401
    %v3404 = vsub.f32 %v3394, %v3402
    %v3405 = vmul.f32 %v3403, %v3403
    %v3406 = vmul.f32 %v3404, %v3404
    %v3407 = vsel %vm147, %v3405, 0.0
    %3408 = vadd.xlane.f32.xlu0 %v3407
    %v3409 = vpop.xlane.xlu0 %3408
    %v3410 = vsel %vm147, %v3406, 0.0
    %3411 = vadd.xlane.f32.xlu0 %v3410
    %v3412 = vpop.xlane.xlu0 %3411
    %v3413 = vmul.f32 %v3409, %v1679
    %v3414 = vmul.f32 %v3412, %v1679
    %v3415 = vadd.f32 %v3413, 1e-05
    %v3416 = vadd.f32 %v3414, 1e-05
    %v3417 = vrsqrt.pop %v3415
    %v3418 = vrsqrt.pop %v3416
    %v3419 = vmul.f32 %v3403, %v3417
    %v3420 = vmul.f32 %v3404, %v3418
    %v3422 = vlaneseq
    %v3423 = vshrl.u32 %v3422, 7
    %v3424 = vsub.s32 0, %v3423
    %v3425 = vrot.slane %v133, %v3424
    %v3427 = vmul.f32 %v3419, %v3425
    %v3428 = vmul.f32 %v3420, %v3425
    %v3430 = vlaneseq
    %v3431 = vshrl.u32 %v3430, 7
    %v3432 = vsub.s32 0, %v3431
    %v3433 = vrot.slane %v134, %v3432
    %v3435 = vadd.f32 %v3427, %v3433
    %v3436 = vadd.f32 %v3428, %v3433
    %v3437 = vld [vmem:[#allocation10] sm:$0xff]
    %v3438 = vld [vmem:[#allocation10 + $0x8] sm:$0xff]
    %v3439 = vld [vmem:[#allocation10 + $0x10] sm:$0xff]
    %v3440 = vld [vmem:[#allocation10 + $0x18] sm:$0xff]
    %v3441 = vld [vmem:[%s14] sm:$0x1]
    %v3443 = vlaneseq
    %v3444 = vshrl.u32 %v3443, 7
    %v3445 = vsub.s32 0, %v3444
    %v3446 = vrot.slane %v3441, %v3445
    %v3449 = vsel %vm147, %v3435, 0
    %v3452 = vsel %vm147, %v3436, 0
    %3454 = vmatprep.subr.mxu0 0.0
    %3455 = vmatpush1.msra.mxu0 0.0
    %3456 = vmatprep.subr.mxu0 0.0
    %3457 = vmatpush1.msra.mxu0 0.0
    %3458 = vmatprep.subr.mxu0 0.0
    %3459 = vmatpush1.msra.mxu0 0.0
    %3460 = vmatprep.subr.mxu0 0.0
    %3461 = vmatpush1.msra.mxu0 0.0
    %3462 = vmatprep.subr.mxu0 0.0
    %3463 = vmatpush1.msra.mxu0 0.0
    %3464 = vmatprep.subr.mxu0 0.0
    %3465 = vmatpush1.msra.mxu0 0.0
    %3466 = vmatprep.subr.mxu0 0.0
    %3467 = vmatpush1.msra.mxu0 0.0
    %3468 = vmatprep.subr.mxu0 0.0
    %3469 = vmatpush1.msra.mxu0 0.0
    %3470 = vmatprep.subr.mxu0 0.0
    %3471 = vmatpush1.msra.mxu0 0.0
    %3472 = vmatprep.subr.mxu0 0.0
    %3473 = vmatpush1.msra.mxu0 0.0
    %3474 = vmatprep.subr.mxu0 0.0
    %3475 = vmatpush1.msra.mxu0 0.0
    %3476 = vmatprep.subr.mxu0 0.0
    %3477 = vmatpush1.msra.mxu0 0.0
    %3478 = vmatprep.subr.mxu0 0.0
    %3479 = vmatpush1.msra.mxu0 %v3440
    %3480 = vmatprep.subr.mxu0 0.0
    %3481 = vmatpush1.msra.mxu0 %v3439
    %3482 = vmatprep.subr.mxu0 0.0
    %3483 = vmatpush1.msra.mxu0 %v3438
    %3484 = vmatprep.subr.mxu0 0.0
    %3485 = vmatpush1.msra.mxu0 %v3437
    %3486 = vmatprep.subr.mxu0 0.0
    %3487 = vmatpush2.msra.mxu0 0.0
    %3488 = vmatprep.subr.mxu0 0.0
    %3489 = vmatpush2.msra.mxu0 0.0
    %3490 = vmatprep.subr.mxu0 0.0
    %3491 = vmatpush2.msra.mxu0 0.0
    %3492 = vmatprep.subr.mxu0 0.0
    %3493 = vmatpush2.msra.mxu0 0.0
    %3494 = vmatprep.subr.mxu0 0.0
    %3495 = vmatpush2.msra.mxu0 0.0
    %3496 = vmatprep.subr.mxu0 0.0
    %3497 = vmatpush2.msra.mxu0 0.0
    %3498 = vmatprep.subr.mxu0 0.0
    %3499 = vmatpush2.msra.mxu0 0.0
    %3500 = vmatprep.subr.mxu0 0.0
    %3501 = vmatpush2.msra.mxu0 0.0
    %3502 = vmatprep.subr.mxu0 0.0
    %3503 = vmatpush2.msra.mxu0 0.0
    %3504 = vmatprep.subr.mxu0 0.0
    %3505 = vmatpush2.msra.mxu0 0.0
    %3506 = vmatprep.subr.mxu0 0.0
    %3507 = vmatpush2.msra.mxu0 0.0
    %3508 = vmatprep.subr.mxu0 0.0
    %3509 = vmatpush2.msra.mxu0 0.0
    %3510 = vmatprep.subr.mxu0 0.0
    %3511 = vmatpush2.msra.mxu0 0.0
    %3512 = vmatprep.subr.mxu0 0.0
    %3513 = vmatpush2.msra.mxu0 0.0
    %3514 = vmatprep.subr.mxu0 0.0
    %3515 = vmatpush2.msra.mxu0 0.0
    %3516 = vmatprep.subr.mxu0 0.0
    %3517 = vmatpush2.msra.mxu0 0.0
    %3518 = vmatprep.mubr.f32.mxu0 0.0
    %3519 = vmatmul.mubr.f32.gmra.mxu0 %v3449
    %v3520 = vpop.f32.mrf.mxu0
    %v3521 = vadd.f32 %v3446, %v3520
    %v3522 = vpop.f32.mrf.mxu0
    %3523 = vmatprep.mubr.f32.mxu0 0.0
    %3524 = vmatmul.mubr.f32.gmra.mxu0 %v3452
    %v3525 = vpop.f32.mrf.mxu0
    %v3526 = vadd.f32 %v3446, %v3525
    %v3527 = vpop.f32.mrf.mxu0
    %3528 = vdwg.mxu0
    %v3529 = vmax.f32 %v3521, 0.0
    %v3530 = vmax.f32 %v3526, 0.0
    %v3531 = vld [vmem:[%s15] sm:$0xff]
    %v3532 = vld [vmem:[%s15 + $0x8] sm:$0xff]
    %v3533 = vld [vmem:[%s15 + $0x10] sm:$0xff]
    %v3534 = vld [vmem:[%s15 + $0x18] sm:$0xff]
    %v3535 = vld [vmem:[%s15 + $0x20] sm:$0xff]
    %v3536 = vld [vmem:[%s15 + $0x28] sm:$0xff]
    %v3537 = vld [vmem:[%s15 + $0x30] sm:$0xff]
    %v3538 = vld [vmem:[%s15 + $0x38] sm:$0xff]
    %v3539 = vld [vmem:[%s16] sm:$0x1]
    %v3541 = vlaneseq
    %v3542 = vshrl.u32 %v3541, 7
    %v3543 = vsub.s32 0, %v3542
    %v3544 = vrot.slane %v3539, %v3543
    %vm3546 = vcmask 523264
    %v3548 = vsel %vm3546, %v3529, 0
    %v3551 = vsel %vm3546, %v3530, 0
    %3553 = vmatprep.subr.mxu0 0.0
    %3554 = vmatpush1.msra.mxu0 0.0
    %3555 = vmatprep.subr.mxu0 0.0
    %3556 = vmatpush1.msra.mxu0 0.0
    %3557 = vmatprep.subr.mxu0 0.0
    %3558 = vmatpush1.msra.mxu0 0.0
    %3559 = vmatprep.subr.mxu0 0.0
    %3560 = vmatpush1.msra.mxu0 0.0
    %3561 = vmatprep.subr.mxu0 0.0
    %3562 = vmatpush1.msra.mxu0 0.0
    %3563 = vmatprep.subr.mxu0 0.0
    %3564 = vmatpush1.msra.mxu0 0.0
    %3565 = vmatprep.subr.mxu0 0.0
    %3566 = vmatpush1.msra.mxu0 0.0
    %3567 = vmatprep.subr.mxu0 0.0
    %3568 = vmatpush1.msra.mxu0 0.0
    %3569 = vmatprep.subr.mxu0 0.0
    %3570 = vmatpush1.msra.mxu0 %v3538
    %3571 = vmatprep.subr.mxu0 0.0
    %3572 = vmatpush1.msra.mxu0 %v3537
    %3573 = vmatprep.subr.mxu0 0.0
    %3574 = vmatpush1.msra.mxu0 %v3536
    %3575 = vmatprep.subr.mxu0 0.0
    %3576 = vmatpush1.msra.mxu0 %v3535
    %3577 = vmatprep.subr.mxu0 0.0
    %3578 = vmatpush1.msra.mxu0 %v3534
    %3579 = vmatprep.subr.mxu0 0.0
    %3580 = vmatpush1.msra.mxu0 %v3533
    %3581 = vmatprep.subr.mxu0 0.0
    %3582 = vmatpush1.msra.mxu0 %v3532
    %3583 = vmatprep.subr.mxu0 0.0
    %3584 = vmatpush1.msra.mxu0 %v3531
    %3585 = vmatprep.subr.mxu0 0.0
    %3586 = vmatpush2.msra.mxu0 0.0
    %3587 = vmatprep.subr.mxu0 0.0
    %3588 = vmatpush2.msra.mxu0 0.0
    %3589 = vmatprep.subr.mxu0 0.0
    %3590 = vmatpush2.msra.mxu0 0.0
    %3591 = vmatprep.subr.mxu0 0.0
    %3592 = vmatpush2.msra.mxu0 0.0
    %3593 = vmatprep.subr.mxu0 0.0
    %3594 = vmatpush2.msra.mxu0 0.0
    %3595 = vmatprep.subr.mxu0 0.0
    %3596 = vmatpush2.msra.mxu0 0.0
    %3597 = vmatprep.subr.mxu0 0.0
    %3598 = vmatpush2.msra.mxu0 0.0
    %3599 = vmatprep.subr.mxu0 0.0
    %3600 = vmatpush2.msra.mxu0 0.0
    %3601 = vmatprep.subr.mxu0 0.0
    %3602 = vmatpush2.msra.mxu0 0.0
    %3603 = vmatprep.subr.mxu0 0.0
    %3604 = vmatpush2.msra.mxu0 0.0
    %3605 = vmatprep.subr.mxu0 0.0
    %3606 = vmatpush2.msra.mxu0 0.0
    %3607 = vmatprep.subr.mxu0 0.0
    %3608 = vmatpush2.msra.mxu0 0.0
    %3609 = vmatprep.subr.mxu0 0.0
    %3610 = vmatpush2.msra.mxu0 0.0
    %3611 = vmatprep.subr.mxu0 0.0
    %3612 = vmatpush2.msra.mxu0 0.0
    %3613 = vmatprep.subr.mxu0 0.0
    %3614 = vmatpush2.msra.mxu0 0.0
    %3615 = vmatprep.subr.mxu0 0.0
    %3616 = vmatpush2.msra.mxu0 0.0
    %3617 = vmatprep.mubr.f32.mxu0 0.0
    %3618 = vmatmul.mubr.f32.gmra.mxu0 %v3548
    %v3619 = vpop.f32.mrf.mxu0
    %v3620 = vadd.f32 %v3544, %v3619
    %v3621 = vpop.f32.mrf.mxu0
    %3622 = vmatprep.mubr.f32.mxu0 0.0
    %3623 = vmatmul.mubr.f32.gmra.mxu0 %v3551
    %v3624 = vpop.f32.mrf.mxu0
    %v3625 = vadd.f32 %v3544, %v3624
    %v3626 = vpop.f32.mrf.mxu0
    %3627 = vdwg.mxu0
    %v3628 = vadd.f32 %v3620, %v3435
    %v3629 = vadd.f32 %v3625, %v3436
    %v3630 = vsel %vm147, %v3628, 0.0
    %3631 = vadd.xlane.f32.xlu0 %v3630
    %v3632 = vpop.xlane.xlu0 %3631
    %v3633 = vsel %vm147, %v3629, 0.0
    %3634 = vadd.xlane.f32.xlu0 %v3633
    %v3635 = vpop.xlane.xlu0 %3634
    %v3636 = vmul.f32 %v3632, %v1679
    %v3637 = vmul.f32 %v3635, %v1679
    %v3638 = vsub.f32 %v3628, %v3636
    %v3639 = vsub.f32 %v3629, %v3637
    %v3640 = vmul.f32 %v3638, %v3638
    %v3641 = vmul.f32 %v3639, %v3639
    %v3642 = vsel %vm147, %v3640, 0.0
    %3643 = vadd.xlane.f32.xlu0 %v3642
    %v3644 = vpop.xlane.xlu0 %3643
    %v3645 = vsel %vm147, %v3641, 0.0
    %3646 = vadd.xlane.f32.xlu0 %v3645
    %v3647 = vpop.xlane.xlu0 %3646
    %v3648 = vmul.f32 %v3644, %v1679
    %v3649 = vmul.f32 %v3647, %v1679
    %v3650 = vadd.f32 %v3648, 1e-05
    %v3651 = vadd.f32 %v3649, 1e-05
    %v3652 = vrsqrt.pop %v3650
    %v3653 = vrsqrt.pop %v3651
    %v3654 = vmul.f32 %v3638, %v3652
    %v3655 = vmul.f32 %v3639, %v3653
    %v3656 = vmul.f32 %v3654, %v3425
    %v3657 = vmul.f32 %v3655, %v3425
    %v3658 = vadd.f32 %v3656, %v3433
    %v3659 = vadd.f32 %v3657, %v3433
    %3660 = vst.msk [vmem:[#allocation11] sm:$0xff] %vm147, %v3658
    %3661 = vst.msk [vmem:[#allocation11 + $0x8] sm:$0xff] %vm147, %v3659
    // Predicated region
    $region90: #{tpu_custom_call.1} parent=1 // pred_check
      _
    $region91: #{tpu_custom_call.1} parent=1 // pred_check_branch
      %3663 = sbr.rel (0) target = $region93
    $region92: #{tpu_custom_call.1} parent=1 // pred_region
      %s3665 = ssub.s32 256, 256
      %3666 = vsyncadd [#allocation4], %s3665
      %s3667 = sshll.u32 [#allocation11], 4
      %s3668 = int_to_ptr.vmem [resolvable:$true] %s3667
      %3673 = dma.vmem_to_hbm [thread:$0]  %s3668, 256, %s17, [#allocation4], 128, 128, 8
    $region93: #{tpu_custom_call.1} parent=1 // pred_fallthru
      _
    // Predicated region
    $region94: #{tpu_custom_call.1} parent=1 // pred_check
      _
    $region95: #{tpu_custom_call.1} parent=1 // pred_check_branch
      %3675 = sbr.rel (0) target = $region97
    $region96: #{tpu_custom_call.1} parent=1 // pred_region
      %3676 = dma.done [#allocation4], 256
    $region97: #{tpu_custom_call.1} parent=1 // pred_fallthru
      _
    %3677 = vsyncpa [#allocation3], 1
    %3678 = vsyncpa [#allocation6], 1
    %3679 = vsyncpa [#allocation9], 1
    %3680 = vsyncpa [#allocation4], 1

</llo_original>
